<compile_context>
chip_gen: v7x
topology: tpu7x:2x2x1
jax: 0.10.0
libtpu: 0.0.40
codegen_flags: <defaults>
</compile_context>

<pallas_src>
import functools

import jax
import jax.numpy as jnp
from jax.experimental import pallas as pl
from jax.experimental.pallas import tpu as pltpu


# ----------------------------- Pallas kernels ------------------------------

MAX_TM = 256    # max GEMM row tile
MAX_TMR = 256   # max tap-reduce row tile


def _round_up(x, m):
    return (x + m - 1) // m * m


def _gemm_bias_act_kernel(a_ref, b_ref, c_ref, o_ref, *, relu):
    """o = act(A @ B + bias); BN scale already folded into B."""
    y = jnp.dot(a_ref[...], b_ref[...], preferred_element_type=jnp.float32)
    y = y + c_ref[...]
    if relu:
        y = jnp.maximum(y, 0.0)
    o_ref[...] = y.astype(o_ref.dtype)


def gemm_bias_act(a, b, bias, relu, n_out):
    """a: (M,K) bf16, b: (K,Np) bf16 (scale folded, lane-padded),
    bias: (1,Np) f32 -> (M,n_out) f32."""
    M, K = a.shape
    Kb, Np = b.shape
    assert K == Kb
    tm = min(MAX_TM, _round_up(M, 8))
    Mp = _round_up(M, tm)
    tn = 256 if Np % 256 == 0 else 128
    if Mp != M:
        a = jnp.pad(a, ((0, Mp - M), (0, 0)))

    kernel = functools.partial(_gemm_bias_act_kernel, relu=relu)
    out = pl.pallas_call(
        kernel,
        out_shape=jax.ShapeDtypeStruct((Mp, Np), jnp.float32),
        grid_spec=pltpu.PrefetchScalarGridSpec(
            num_scalar_prefetch=0,
            grid=(Mp // tm, Np // tn),
            in_specs=[
                pl.BlockSpec((tm, K), lambda i, j: (i, 0)),
                pl.BlockSpec((K, tn), lambda i, j: (0, j)),
                pl.BlockSpec((1, tn), lambda i, j: (0, j)),
            ],
            out_specs=pl.BlockSpec((tm, tn), lambda i, j: (i, j)),
        ),
        compiler_params=pltpu.CompilerParams(
            dimension_semantics=("parallel", "parallel")),
    )(a, b, bias)
    return out[:M, :n_out]


def _tapsum_kernel(p_ref, w_ref, c_ref, o_ref, *, relu, taps):
    """o[m,c] = act(sum_t p[t,m,c] * w[t,c] + bias[c]); unrolled VPU adds."""
    acc = p_ref[0, :, :] * w_ref[pl.ds(0, 1), :]
    for t in range(1, taps):
        acc = acc + p_ref[t, :, :] * w_ref[pl.ds(t, 1), :]
    y = acc + c_ref[...]
    if relu:
        y = jnp.maximum(y, 0.0)
    o_ref[...] = y.astype(o_ref.dtype)


def tap_reduce(patches, w, bias, relu):
    """patches: (T,M,C) f32 (tap-major), w: (T,C) (scale folded),
    bias: (1,C) -> (M,C).  Used for depthwise 3x3 conv and avg-pooling."""
    T, M, C = patches.shape
    tmr = min(MAX_TMR, _round_up(M, 8))
    Mp = _round_up(M, tmr)
    if Mp != M:
        patches = jnp.pad(patches, ((0, 0), (0, Mp - M), (0, 0)))

    kernel = functools.partial(_tapsum_kernel, relu=relu, taps=T)
    out = pl.pallas_call(
        kernel,
        out_shape=jax.ShapeDtypeStruct((Mp, C), jnp.float32),
        grid_spec=pltpu.PrefetchScalarGridSpec(
            num_scalar_prefetch=0,
            grid=(Mp // tmr,),
            in_specs=[
                pl.BlockSpec((T, tmr, C), lambda i: (0, i, 0)),
                pl.BlockSpec((T, C), lambda i: (0, 0)),
                pl.BlockSpec((1, C), lambda i: (0, 0)),
            ],
            out_specs=pl.BlockSpec((tmr, C), lambda i: (i, 0)),
        ),
        compiler_params=pltpu.CompilerParams(
            dimension_semantics=("parallel",)),
    )(patches, w, bias)
    return out[:M]


# ------------------------------ JAX glue ops -------------------------------

def _extract_patches(x, kh, kw, stride, pad, tap_major, dtype):
    """x: (N,H,W,C) NHWC -> patch taps (zero padded).
    tap_major=True  -> (kh*kw, N, Ho, Wo, C)
    tap_major=False -> (N, Ho, Wo, kh*kw, C)."""
    N, H, W, C = x.shape
    xp = jnp.pad(x, ((0, 0), (pad, pad), (pad, pad), (0, 0))).astype(dtype)
    Ho = (H + 2 * pad - kh) // stride + 1
    Wo = (W + 2 * pad - kw) // stride + 1
    taps = []
    for i in range(kh):
        for j in range(kw):
            taps.append(xp[:, i::stride, j::stride, :][:, :Ho, :Wo, :])
    axis = 0 if tap_major else 3
    return jnp.stack(taps, axis=axis), Ho, Wo


def apply_cbr(x, p):
    """ConvBNReLU (eval-mode BN folded).  x: NHWC f32."""
    N, H, W, Cin = x.shape
    kh, kw, stride, pad = p["kh"], p["kw"], p["stride"], p["pad"]
    if p["depthwise"]:
        patches, Ho, Wo = _extract_patches(x, kh, kw, stride, pad,
                                           tap_major=True, dtype=jnp.float32)
        M = N * Ho * Wo
        flat = patches.reshape(kh * kw, M, Cin)
        out = tap_reduce(flat, p["w_taps"], p["bias"], p["relu"])
        return out.reshape(N, Ho, Wo, Cin)

    if kh == 1 and kw == 1:
        # 1x1 conv: no im2col / patch materialization needed at all.
        xs = x if stride == 1 else x[:, ::stride, ::stride, :]
        Ho, Wo = xs.shape[1], xs.shape[2]
        a = xs.reshape(N * Ho * Wo, Cin).astype(jnp.bfloat16)
    else:
        patches, Ho, Wo = _extract_patches(x, kh, kw, stride, pad,
                                           tap_major=False, dtype=jnp.bfloat16)
        a = patches.reshape(N * Ho * Wo, kh * kw * Cin)
    out = gemm_bias_act(a, p["w_mat"], p["bias"], p["relu"], p["cout"])
    return out.reshape(N, Ho, Wo, p["cout"])


def avg_pool_3x3_s2(x):
    """nn.AvgPool2d(kernel_size=3, stride=2, padding=1), count_include_pad=True."""
    N, H, W, C = x.shape
    patches, Ho, Wo = _extract_patches(x, 3, 3, 2, 1,
                                       tap_major=True, dtype=jnp.float32)
    M = N * Ho * Wo
    flat = patches.reshape(9, M, C)
    w = jnp.full((9, C), 1.0 / 9.0, jnp.float32)
    zero = jnp.zeros((1, C), jnp.float32)
    out = tap_reduce(flat, w, zero, relu=False)
    return out.reshape(N, Ho, Wo, C)


# --------------------------- parameter generation --------------------------

class _ParamGen:
    def __init__(self, seed=0):
        self.key = jax.random.PRNGKey(seed)
        self.counter = 0

    def next_key(self):
        self.counter += 1
        return jax.random.fold_in(self.key, self.counter)


def _bn_fold(cout):
    eps = 1e-5
    ch = jnp.arange(cout, dtype=jnp.float32)
    gamma = 1.0 + 0.01 * (ch % 7.0)
    beta = 0.01 * (ch % 5.0)
    rmean = 0.001 * ch
    rvar = 1.0 + 0.02 * (ch % 3.0)
    scale = gamma / jnp.sqrt(rvar + eps)
    bias = beta - rmean * scale
    return scale, bias


def make_cbr(pg, cin, cout, k, stride, pad, groups=1, relu=True):
    """Build a ConvBNReLU's folded parameters.  All constant-tensor padding,
    transposition, BN-scale folding and bf16 casts are done once here."""
    scale, bias = _bn_fold(cout)
    if groups == 1:
        w = jax.random.normal(pg.next_key(), (cout, cin, k, k), jnp.float32)
        w = w * (2.0 / (cin * k * k)) ** 0.5
        w_mat = jnp.transpose(w, (2, 3, 1, 0)).reshape(k * k * cin, cout)
        w_mat = w_mat * scale[None, :]                       # fold BN scale
        np_ = _round_up(cout, 128)                           # lane-dense N
        w_mat = jnp.pad(w_mat, ((0, 0), (0, np_ - cout))).astype(jnp.bfloat16)
        bias_p = jnp.pad(bias.reshape(1, cout), ((0, 0), (0, np_ - cout)))
        return dict(depthwise=False, w_mat=w_mat, bias=bias_p,
                    kh=k, kw=k, stride=stride, pad=pad, relu=relu, cout=cout)
    else:
        assert groups == cin == cout, "only full depthwise groups supported"
        w = jax.random.normal(pg.next_key(), (cout, 1, k, k), jnp.float32)
        w = w * (2.0 / (k * k)) ** 0.5
        w_taps = jnp.transpose(w[:, 0], (1, 2, 0)).reshape(k * k, cout)
        w_taps = w_taps * scale[None, :]                     # fold BN scale
        return dict(depthwise=True, w_taps=w_taps, bias=bias.reshape(1, cout),
                    kh=k, kw=k, stride=stride, pad=pad, relu=relu, cout=cout)


def make_stdc_block(pg, cin, cout, steps, downsample_mode, stride):
    if steps not in (2, 3, 4):
        raise ValueError(f"only 2, 3, 4 steps supported, found {steps}")
    blk = dict(type="stdc", stride=stride)
    blk["conv0"] = make_cbr(pg, cin, cout // 2, 1, 1, 0, relu=True)
    if stride == 1:
        blk["skip"] = None            # nn.Identity
    elif downsample_mode == "avg_pool":
        blk["skip"] = "avg_pool"      # AvgPool2d(3, 2, 1)
    elif downsample_mode == "dw_conv":
        blk["skip"] = make_cbr(pg, cout // 2, cout // 2, 3, 2, 1,
                               groups=cout // 2, relu=False)
    else:
        raise ValueError(downsample_mode)

    convs = []
    c_in = cout // 2
    mid = c_in
    for idx in range(1, steps):
        if idx < steps - 1:
            mid //= 2
        seq = []
        if idx == 1 and stride == 2:
            # conv_list[1] = Sequential(dw ConvBNReLU s2 (no act), 3x3 ConvBNReLU)
            seq.append(make_cbr(pg, cout // 2, cout // 2, 3, 2, 1,
                                groups=cout // 2, relu=False))
        seq.append(make_cbr(pg, c_in, mid, 3, 1, 1, relu=True))
        convs.append(seq)
        c_in = mid
    blk["convs"] = convs
    return blk


def make_stdcnet(pg, block_types, ch_widths, num_blocks, stdc_steps=4,
                 stdc_downsample_mode="avg_pool", in_channels=3,
                 out_indices=(2, 3, 4)):
    assert len(block_types) == len(ch_widths) == len(num_blocks)
    stages, out_flags = [], []
    cin = in_channels
    for i, (bt, width, nb) in enumerate(zip(block_types, ch_widths, num_blocks)):
        blocks = []
        for b in range(nb):
            stride = 2 if b == 0 else 1
            c_in = cin if b == 0 else width
            if bt == "conv":
                blocks.append(dict(type="conv",
                                   cbr=make_cbr(pg, c_in, width, 3, stride, 1,
                                                relu=True)))
            elif bt == "stdc":
                blocks.append(make_stdc_block(pg, c_in, width, stdc_steps,
                                              stdc_downsample_mode, stride))
            else:
                raise ValueError(bt)
        stages.append(blocks)
        out_flags.append(i in out_indices)
        cin = width
    return dict(stages=stages, out_flags=out_flags)


# ------------------------------ forward pass -------------------------------

def apply_stdc_block(x, blk):
    x0 = apply_cbr(x, blk["conv0"])
    if blk["stride"] == 1:
        skip = x0
    elif blk["skip"] == "avg_pool":
        skip = avg_pool_3x3_s2(x0)
    else:
        skip = apply_cbr(x0, blk["skip"])
    outs = [skip]
    cur = x0
    for seq in blk["convs"]:
        for cbr in seq:
            cur = apply_cbr(cur, cbr)
        outs.append(cur)
    return jnp.concatenate(outs, axis=-1)   # torch.cat(dim=1) in NHWC


def stdcnet_forward(params, x_nchw):
    # layout: external NCHW (PyTorch convention); internal compute is NHWC.
    x = jnp.transpose(x_nchw, (0, 2, 3, 1)).astype(jnp.float32)
    outputs = []
    for blocks, is_out in zip(params["stages"], params["out_flags"]):
        for blk in blocks:
            if blk["type"] == "conv":
                x = apply_cbr(x, blk["cbr"])
            else:
                x = apply_stdc_block(x, blk)
        if is_out:
            outputs.append(jnp.transpose(x, (0, 3, 1, 2)))  # back to NCHW
    return tuple(outputs)


# ---------------------------------- main -----------------------------------

if __name__ == "__main__":
    # Small STDC-style config: 2 conv stems + 3 STDC stages.
    block_types = ["conv", "conv", "stdc", "stdc", "stdc"]
    ch_widths = [8, 16, 32, 64, 128]
    num_blocks = [1, 1, 1, 1, 1]

    pg = _ParamGen(seed=0)
    params = make_stdcnet(pg, block_types, ch_widths, num_blocks,
                          stdc_steps=4, stdc_downsample_mode="avg_pool",
                          in_channels=3, out_indices=(2, 3, 4))

    key = jax.random.PRNGKey(0)
    x = jax.random.normal(key, (2, 3, 32, 32), jnp.float32)   # NCHW like torch

    fwd = jax.jit(lambda xx: stdcnet_forward(params, xx))
    outs = jax.block_until_ready(fwd(x))

    expected = [(2, 32, 4, 4), (2, 64, 2, 2), (2, 128, 1, 1)]
    got = [tuple(o.shape) for o in outs]
    assert got == expected, f"unexpected output shapes: {got}"
    assert all(bool(jnp.all(jnp.isfinite(o))) for o in outs)
    print("KERNEL_OK")
</pallas_src>

<mosaic_0001>
module attributes {stable_mosaic.version = 11 : i64} {
  func.func @_gemm_bias_act_kernel(%arg0: i32, %arg1: i32, %arg2: memref<256x27xbf16, #tpu.memory_space<vmem>>, %arg3: memref<27x128xbf16, #tpu.memory_space<vmem>>, %arg4: memref<1x128xf32, #tpu.memory_space<vmem>>, %arg5: memref<256x128xf32, #tpu.memory_space<vmem>>) attributes {dimension_semantics = [#tpu.dimension_semantics<parallel>, #tpu.dimension_semantics<parallel>], iteration_bounds = array<i64: 2, 1>, scalar_prefetch = 0 : i64, scratch_operands = 0 : i64, tpu.core_type = #tpu.core_type<tc>, window_params = [{transform_indices = @transform_0, window_bounds = array<i64: 256, 27>}, {transform_indices = @transform_1, window_bounds = array<i64: 27, 128>}, {transform_indices = @transform_2, window_bounds = array<i64: 1, 128>}, {transform_indices = @transform_3, window_bounds = array<i64: 256, 128>}]} {
    %c0 = arith.constant 0 : index
    %c0_0 = arith.constant 0 : index
    %0 = vector.load %arg2[%c0, %c0_0] : memref<256x27xbf16, #tpu.memory_space<vmem>>, vector<256x27xbf16>
    %c0_1 = arith.constant 0 : index
    %c0_2 = arith.constant 0 : index
    %1 = vector.load %arg3[%c0_1, %c0_2] : memref<27x128xbf16, #tpu.memory_space<vmem>>, vector<27x128xbf16>
    %cst = arith.constant dense<0.000000e+00> : vector<256x128xf32>
    %2 = tpu.matmul %0, %1, %cst {dimension_numbers = #tpu.dot_dimension_numbers<[1], [0], [0], [1], [0, 0, 1, 1], [], []>} : vector<256x27xbf16>, vector<27x128xbf16>, vector<256x128xf32> -> vector<256x128xf32>
    %c0_3 = arith.constant 0 : index
    %c0_4 = arith.constant 0 : index
    %3 = vector.load %arg4[%c0_3, %c0_4] : memref<1x128xf32, #tpu.memory_space<vmem>>, vector<1x128xf32>
    %4 = vector.broadcast %3 : vector<1x128xf32> to vector<256x128xf32>
    %5 = arith.addf %2, %4 : vector<256x128xf32>
    %cst_5 = arith.constant 0.000000e+00 : f32
    %6 = vector.broadcast %cst_5 : f32 to vector<256x128xf32>
    %7 = arith.maximumf %5, %6 : vector<256x128xf32>
    %c0_6 = arith.constant 0 : index
    %c0_7 = arith.constant 0 : index
    %8 = vector.load %arg5[%c0_6, %c0_7] : memref<256x128xf32, #tpu.memory_space<vmem>>, vector<256x128xf32>
    tpu.vector_store %arg5[%c0_6, %c0_7], %7 {strides = array<i32>} : memref<256x128xf32, #tpu.memory_space<vmem>>, vector<256x128xf32>,
    return
  }
  func.func @transform_0(%arg0: i32, %arg1: i32) -> (i32, i32) {
    %c0_i32 = arith.constant 0 : i32
    %c0_i32_0 = arith.constant 0 : i32
    return %arg0, %c0_i32 : i32, i32
  }
  func.func @transform_1(%arg0: i32, %arg1: i32) -> (i32, i32) {
    %c0_i32 = arith.constant 0 : i32
    %c0_i32_0 = arith.constant 0 : i32
    return %c0_i32, %arg1 : i32, i32
  }
  func.func @transform_2(%arg0: i32, %arg1: i32) -> (i32, i32) {
    %c0_i32 = arith.constant 0 : i32
    %c0_i32_0 = arith.constant 0 : i32
    return %c0_i32, %arg1 : i32, i32
  }
  func.func @transform_3(%arg0: i32, %arg1: i32) -> (i32, i32) {
    %c0_i32 = arith.constant 0 : i32
    return %arg0, %arg1 : i32, i32
  }
}

module attributes {stable_mosaic.version = 11 : i64} {
  func.func @_gemm_bias_act_kernel(%arg0: i32, %arg1: i32, %arg2: memref<128x72xbf16, #tpu.memory_space<vmem>>, %arg3: memref<72x128xbf16, #tpu.memory_space<vmem>>, %arg4: memref<1x128xf32, #tpu.memory_space<vmem>>, %arg5: memref<128x128xf32, #tpu.memory_space<vmem>>) attributes {dimension_semantics = [#tpu.dimension_semantics<parallel>, #tpu.dimension_semantics<parallel>], iteration_bounds = array<i64: 1, 1>, scalar_prefetch = 0 : i64, scratch_operands = 0 : i64, tpu.core_type = #tpu.core_type<tc>, window_params = [{transform_indices = @transform_0, window_bounds = array<i64: 128, 72>}, {transform_indices = @transform_1, window_bounds = array<i64: 72, 128>}, {transform_indices = @transform_2, window_bounds = array<i64: 1, 128>}, {transform_indices = @transform_3, window_bounds = array<i64: 128, 128>}]} {
    %c0 = arith.constant 0 : index
    %c0_0 = arith.constant 0 : index
    %0 = vector.load %arg2[%c0, %c0_0] : memref<128x72xbf16, #tpu.memory_space<vmem>>, vector<128x72xbf16>
    %c0_1 = arith.constant 0 : index
    %c0_2 = arith.constant 0 : index
    %1 = vector.load %arg3[%c0_1, %c0_2] : memref<72x128xbf16, #tpu.memory_space<vmem>>, vector<72x128xbf16>
    %cst = arith.constant dense<0.000000e+00> : vector<128x128xf32>
    %2 = tpu.matmul %0, %1, %cst {dimension_numbers = #tpu.dot_dimension_numbers<[1], [0], [0], [1], [0, 0, 1, 1], [], []>} : vector<128x72xbf16>, vector<72x128xbf16>, vector<128x128xf32> -> vector<128x128xf32>
    %c0_3 = arith.constant 0 : index
    %c0_4 = arith.constant 0 : index
    %3 = vector.load %arg4[%c0_3, %c0_4] : memref<1x128xf32, #tpu.memory_space<vmem>>, vector<1x128xf32>
    %4 = vector.broadcast %3 : vector<1x128xf32> to vector<128x128xf32>
    %5 = arith.addf %2, %4 : vector<128x128xf32>
    %cst_5 = arith.constant 0.000000e+00 : f32
    %6 = vector.broadcast %cst_5 : f32 to vector<128x128xf32>
    %7 = arith.maximumf %5, %6 : vector<128x128xf32>
    %c0_6 = arith.constant 0 : index
    %c0_7 = arith.constant 0 : index
    %8 = vector.load %arg5[%c0_6, %c0_7] : memref<128x128xf32, #tpu.memory_space<vmem>>, vector<128x128xf32>
    tpu.vector_store %arg5[%c0_6, %c0_7], %7 {strides = array<i32>} : memref<128x128xf32, #tpu.memory_space<vmem>>, vector<128x128xf32>,
    return
  }
  func.func @transform_0(%arg0: i32, %arg1: i32) -> (i32, i32) {
    %c0_i32 = arith.constant 0 : i32
    %c0_i32_0 = arith.constant 0 : i32
    return %arg0, %c0_i32 : i32, i32
  }
  func.func @transform_1(%arg0: i32, %arg1: i32) -> (i32, i32) {
    %c0_i32 = arith.constant 0 : i32
    %c0_i32_0 = arith.constant 0 : i32
    return %c0_i32, %arg1 : i32, i32
  }
  func.func @transform_2(%arg0: i32, %arg1: i32) -> (i32, i32) {
    %c0_i32 = arith.constant 0 : i32
    %c0_i32_0 = arith.constant 0 : i32
    return %c0_i32, %arg1 : i32, i32
  }
  func.func @transform_3(%arg0: i32, %arg1: i32) -> (i32, i32) {
    %c0_i32 = arith.constant 0 : i32
    return %arg0, %arg1 : i32, i32
  }
}

module attributes {stable_mosaic.version = 11 : i64} {
  func.func @_gemm_bias_act_kernel(%arg0: i32, %arg1: i32, %arg2: memref<128x16xbf16, #tpu.memory_space<vmem>>, %arg3: memref<16x128xbf16, #tpu.memory_space<vmem>>, %arg4: memref<1x128xf32, #tpu.memory_space<vmem>>, %arg5: memref<128x128xf32, #tpu.memory_space<vmem>>) attributes {dimension_semantics = [#tpu.dimension_semantics<parallel>, #tpu.dimension_semantics<parallel>], iteration_bounds = array<i64: 1, 1>, scalar_prefetch = 0 : i64, scratch_operands = 0 : i64, tpu.core_type = #tpu.core_type<tc>, window_params = [{transform_indices = @transform_0, window_bounds = array<i64: 128, 16>}, {transform_indices = @transform_1, window_bounds = array<i64: 16, 128>}, {transform_indices = @transform_2, window_bounds = array<i64: 1, 128>}, {transform_indices = @transform_3, window_bounds = array<i64: 128, 128>}]} {
    %c0 = arith.constant 0 : index
    %c0_0 = arith.constant 0 : index
    %0 = vector.load %arg2[%c0, %c0_0] : memref<128x16xbf16, #tpu.memory_space<vmem>>, vector<128x16xbf16>
    %c0_1 = arith.constant 0 : index
    %c0_2 = arith.constant 0 : index
    %1 = vector.load %arg3[%c0_1, %c0_2] : memref<16x128xbf16, #tpu.memory_space<vmem>>, vector<16x128xbf16>
    %cst = arith.constant dense<0.000000e+00> : vector<128x128xf32>
    %2 = tpu.matmul %0, %1, %cst {dimension_numbers = #tpu.dot_dimension_numbers<[1], [0], [0], [1], [0, 0, 1, 1], [], []>} : vector<128x16xbf16>, vector<16x128xbf16>, vector<128x128xf32> -> vector<128x128xf32>
    %c0_3 = arith.constant 0 : index
    %c0_4 = arith.constant 0 : index
    %3 = vector.load %arg4[%c0_3, %c0_4] : memref<1x128xf32, #tpu.memory_space<vmem>>, vector<1x128xf32>
    %4 = vector.broadcast %3 : vector<1x128xf32> to vector<128x128xf32>
    %5 = arith.addf %2, %4 : vector<128x128xf32>
    %cst_5 = arith.constant 0.000000e+00 : f32
    %6 = vector.broadcast %cst_5 : f32 to vector<128x128xf32>
    %7 = arith.maximumf %5, %6 : vector<128x128xf32>
    %c0_6 = arith.constant 0 : index
    %c0_7 = arith.constant 0 : index
    %8 = vector.load %arg5[%c0_6, %c0_7] : memref<128x128xf32, #tpu.memory_space<vmem>>, vector<128x128xf32>
    tpu.vector_store %arg5[%c0_6, %c0_7], %7 {strides = array<i32>} : memref<128x128xf32, #tpu.memory_space<vmem>>, vector<128x128xf32>,
    return
  }
  func.func @transform_0(%arg0: i32, %arg1: i32) -> (i32, i32) {
    %c0_i32 = arith.constant 0 : i32
    %c0_i32_0 = arith.constant 0 : i32
    return %arg0, %c0_i32 : i32, i32
  }
  func.func @transform_1(%arg0: i32, %arg1: i32) -> (i32, i32) {
    %c0_i32 = arith.constant 0 : i32
    %c0_i32_0 = arith.constant 0 : i32
    return %c0_i32, %arg1 : i32, i32
  }
  func.func @transform_2(%arg0: i32, %arg1: i32) -> (i32, i32) {
    %c0_i32 = arith.constant 0 : i32
    %c0_i32_0 = arith.constant 0 : i32
    return %c0_i32, %arg1 : i32, i32
  }
  func.func @transform_3(%arg0: i32, %arg1: i32) -> (i32, i32) {
    %c0_i32 = arith.constant 0 : i32
    return %arg0, %arg1 : i32, i32
  }
}

module attributes {stable_mosaic.version = 11 : i64} {
  func.func @_tapsum_kernel(%arg0: i32, %arg1: memref<9x32x16xf32, #tpu.memory_space<vmem>>, %arg2: memref<9x16xf32, #tpu.memory_space<vmem>>, %arg3: memref<1x16xf32, #tpu.memory_space<vmem>>, %arg4: memref<32x16xf32, #tpu.memory_space<vmem>>) attributes {dimension_semantics = [#tpu.dimension_semantics<parallel>], iteration_bounds = array<i64: 1>, scalar_prefetch = 0 : i64, scratch_operands = 0 : i64, tpu.core_type = #tpu.core_type<tc>, window_params = [{transform_indices = @transform_0, window_bounds = array<i64: 9, 32, 16>}, {pipeline_mode = #tpu.pipeline_mode<synchronous>, transform_indices = @transform_1, window_bounds = array<i64: 9, 16>}, {pipeline_mode = #tpu.pipeline_mode<synchronous>, transform_indices = @transform_2, window_bounds = array<i64: 1, 16>}, {transform_indices = @transform_3, window_bounds = array<i64: 32, 16>}]} {
    %c0 = arith.constant 0 : index
    %c0_0 = arith.constant 0 : index
    %c0_1 = arith.constant 0 : index
    %0 = vector.load %arg1[%c0, %c0_0, %c0_1] : memref<9x32x16xf32, #tpu.memory_space<vmem>>, vector<1x32x16xf32>
    %1 = vector.shape_cast %0 : vector<1x32x16xf32> to vector<32x16xf32>
    %c0_2 = arith.constant 0 : index
    %c0_3 = arith.constant 0 : index
    %2 = vector.load %arg2[%c0_2, %c0_3] : memref<9x16xf32, #tpu.memory_space<vmem>>, vector<1x16xf32>
    %3 = vector.broadcast %2 : vector<1x16xf32> to vector<32x16xf32>
    %4 = arith.mulf %1, %3 : vector<32x16xf32>
    %c1 = arith.constant 1 : index
    %c0_4 = arith.constant 0 : index
    %c0_5 = arith.constant 0 : index
    %5 = vector.load %arg1[%c1, %c0_4, %c0_5] : memref<9x32x16xf32, #tpu.memory_space<vmem>>, vector<1x32x16xf32>
    %6 = vector.shape_cast %5 : vector<1x32x16xf32> to vector<32x16xf32>
    %c1_6 = arith.constant 1 : index
    %c0_7 = arith.constant 0 : index
    %7 = vector.load %arg2[%c1_6, %c0_7] : memref<9x16xf32, #tpu.memory_space<vmem>>, vector<1x16xf32>
    %8 = vector.broadcast %7 : vector<1x16xf32> to vector<32x16xf32>
    %9 = arith.mulf %6, %8 : vector<32x16xf32>
    %10 = arith.addf %4, %9 : vector<32x16xf32>
    %c2 = arith.constant 2 : index
    %c0_8 = arith.constant 0 : index
    %c0_9 = arith.constant 0 : index
    %11 = vector.load %arg1[%c2, %c0_8, %c0_9] : memref<9x32x16xf32, #tpu.memory_space<vmem>>, vector<1x32x16xf32>
    %12 = vector.shape_cast %11 : vector<1x32x16xf32> to vector<32x16xf32>
    %c2_10 = arith.constant 2 : index
    %c0_11 = arith.constant 0 : index
    %13 = vector.load %arg2[%c2_10, %c0_11] : memref<9x16xf32, #tpu.memory_space<vmem>>, vector<1x16xf32>
    %14 = vector.broadcast %13 : vector<1x16xf32> to vector<32x16xf32>
    %15 = arith.mulf %12, %14 : vector<32x16xf32>
    %16 = arith.addf %10, %15 : vector<32x16xf32>
    %c3 = arith.constant 3 : index
    %c0_12 = arith.constant 0 : index
    %c0_13 = arith.constant 0 : index
    %17 = vector.load %arg1[%c3, %c0_12, %c0_13] : memref<9x32x16xf32, #tpu.memory_space<vmem>>, vector<1x32x16xf32>
    %18 = vector.shape_cast %17 : vector<1x32x16xf32> to vector<32x16xf32>
    %c3_14 = arith.constant 3 : index
    %c0_15 = arith.constant 0 : index
    %19 = vector.load %arg2[%c3_14, %c0_15] : memref<9x16xf32, #tpu.memory_space<vmem>>, vector<1x16xf32>
    %20 = vector.broadcast %19 : vector<1x16xf32> to vector<32x16xf32>
    %21 = arith.mulf %18, %20 : vector<32x16xf32>
    %22 = arith.addf %16, %21 : vector<32x16xf32>
    %c4 = arith.constant 4 : index
    %c0_16 = arith.constant 0 : index
    %c0_17 = arith.constant 0 : index
    %23 = vector.load %arg1[%c4, %c0_16, %c0_17] : memref<9x32x16xf32, #tpu.memory_space<vmem>>, vector<1x32x16xf32>
    %24 = vector.shape_cast %23 : vector<1x32x16xf32> to vector<32x16xf32>
    %c4_18 = arith.constant 4 : index
    %c0_19 = arith.constant 0 : index
    %25 = vector.load %arg2[%c4_18, %c0_19] : memref<9x16xf32, #tpu.memory_space<vmem>>, vector<1x16xf32>
    %26 = vector.broadcast %25 : vector<1x16xf32> to vector<32x16xf32>
    %27 = arith.mulf %24, %26 : vector<32x16xf32>
    %28 = arith.addf %22, %27 : vector<32x16xf32>
    %c5 = arith.constant 5 : index
    %c0_20 = arith.constant 0 : index
    %c0_21 = arith.constant 0 : index
    %29 = vector.load %arg1[%c5, %c0_20, %c0_21] : memref<9x32x16xf32, #tpu.memory_space<vmem>>, vector<1x32x16xf32>
    %30 = vector.shape_cast %29 : vector<1x32x16xf32> to vector<32x16xf32>
    %c5_22 = arith.constant 5 : index
    %c0_23 = arith.constant 0 : index
    %31 = vector.load %arg2[%c5_22, %c0_23] : memref<9x16xf32, #tpu.memory_space<vmem>>, vector<1x16xf32>
    %32 = vector.broadcast %31 : vector<1x16xf32> to vector<32x16xf32>
    %33 = arith.mulf %30, %32 : vector<32x16xf32>
    %34 = arith.addf %28, %33 : vector<32x16xf32>
    %c6 = arith.constant 6 : index
    %c0_24 = arith.constant 0 : index
    %c0_25 = arith.constant 0 : index
    %35 = vector.load %arg1[%c6, %c0_24, %c0_25] : memref<9x32x16xf32, #tpu.memory_space<vmem>>, vector<1x32x16xf32>
    %36 = vector.shape_cast %35 : vector<1x32x16xf32> to vector<32x16xf32>
    %c6_26 = arith.constant 6 : index
    %c0_27 = arith.constant 0 : index
    %37 = vector.load %arg2[%c6_26, %c0_27] : memref<9x16xf32, #tpu.memory_space<vmem>>, vector<1x16xf32>
    %38 = vector.broadcast %37 : vector<1x16xf32> to vector<32x16xf32>
    %39 = arith.mulf %36, %38 : vector<32x16xf32>
    %40 = arith.addf %34, %39 : vector<32x16xf32>
    %c7 = arith.constant 7 : index
    %c0_28 = arith.constant 0 : index
    %c0_29 = arith.constant 0 : index
    %41 = vector.load %arg1[%c7, %c0_28, %c0_29] : memref<9x32x16xf32, #tpu.memory_space<vmem>>, vector<1x32x16xf32>
    %42 = vector.shape_cast %41 : vector<1x32x16xf32> to vector<32x16xf32>
    %c7_30 = arith.constant 7 : index
    %c0_31 = arith.constant 0 : index
    %43 = vector.load %arg2[%c7_30, %c0_31] : memref<9x16xf32, #tpu.memory_space<vmem>>, vector<1x16xf32>
    %44 = vector.broadcast %43 : vector<1x16xf32> to vector<32x16xf32>
    %45 = arith.mulf %42, %44 : vector<32x16xf32>
    %46 = arith.addf %40, %45 : vector<32x16xf32>
    %c8 = arith.constant 8 : index
    %c0_32 = arith.constant 0 : index
    %c0_33 = arith.constant 0 : index
    %47 = vector.load %arg1[%c8, %c0_32, %c0_33] : memref<9x32x16xf32, #tpu.memory_space<vmem>>, vector<1x32x16xf32>
    %48 = vector.shape_cast %47 : vector<1x32x16xf32> to vector<32x16xf32>
    %c8_34 = arith.constant 8 : index
    %c0_35 = arith.constant 0 : index
    %49 = vector.load %arg2[%c8_34, %c0_35] : memref<9x16xf32, #tpu.memory_space<vmem>>, vector<1x16xf32>
    %50 = vector.broadcast %49 : vector<1x16xf32> to vector<32x16xf32>
    %51 = arith.mulf %48, %50 : vector<32x16xf32>
    %52 = arith.addf %46, %51 : vector<32x16xf32>
    %c0_36 = arith.constant 0 : index
    %c0_37 = arith.constant 0 : index
    %53 = vector.load %arg3[%c0_36, %c0_37] : memref<1x16xf32, #tpu.memory_space<vmem>>, vector<1x16xf32>
    %54 = vector.broadcast %53 : vector<1x16xf32> to vector<32x16xf32>
    %55 = arith.addf %52, %54 : vector<32x16xf32>
    %c0_38 = arith.constant 0 : index
    %c0_39 = arith.constant 0 : index
    %56 = vector.load %arg4[%c0_38, %c0_39] : memref<32x16xf32, #tpu.memory_space<vmem>>, vector<32x16xf32>
    tpu.vector_store %arg4[%c0_38, %c0_39], %55 {strides = array<i32>} : memref<32x16xf32, #tpu.memory_space<vmem>>, vector<32x16xf32>,
    return
  }
  func.func @transform_0(%arg0: i32) -> (i32, i32, i32) {
    %c0_i32 = arith.constant 0 : i32
    %c0_i32_0 = arith.constant 0 : i32
    %c0_i32_1 = arith.constant 0 : i32
    return %c0_i32, %arg0, %c0_i32_0 : i32, i32, i32
  }
  func.func @transform_1(%arg0: i32) -> (i32, i32) {
    %c0_i32 = arith.constant 0 : i32
    %c0_i32_0 = arith.constant 0 : i32
    %c0_i32_1 = arith.constant 0 : i32
    return %c0_i32, %c0_i32_0 : i32, i32
  }
  func.func @transform_2(%arg0: i32) -> (i32, i32) {
    %c0_i32 = arith.constant 0 : i32
    %c0_i32_0 = arith.constant 0 : i32
    %c0_i32_1 = arith.constant 0 : i32
    return %c0_i32, %c0_i32_0 : i32, i32
  }
  func.func @transform_3(%arg0: i32) -> (i32, i32) {
    %c0_i32 = arith.constant 0 : i32
    %c0_i32_0 = arith.constant 0 : i32
    return %arg0, %c0_i32 : i32, i32
  }
}

module attributes {stable_mosaic.version = 11 : i64} {
  func.func @_gemm_bias_act_kernel(%arg0: i32, %arg1: i32, %arg2: memref<32x144xbf16, #tpu.memory_space<vmem>>, %arg3: memref<144x128xbf16, #tpu.memory_space<vmem>>, %arg4: memref<1x128xf32, #tpu.memory_space<vmem>>, %arg5: memref<32x128xf32, #tpu.memory_space<vmem>>) attributes {dimension_semantics = [#tpu.dimension_semantics<parallel>, #tpu.dimension_semantics<parallel>], iteration_bounds = array<i64: 1, 1>, scalar_prefetch = 0 : i64, scratch_operands = 0 : i64, tpu.core_type = #tpu.core_type<tc>, window_params = [{transform_indices = @transform_0, window_bounds = array<i64: 32, 144>}, {transform_indices = @transform_1, window_bounds = array<i64: 144, 128>}, {transform_indices = @transform_2, window_bounds = array<i64: 1, 128>}, {transform_indices = @transform_3, window_bounds = array<i64: 32, 128>}]} {
    %c0 = arith.constant 0 : index
    %c0_0 = arith.constant 0 : index
    %0 = vector.load %arg2[%c0, %c0_0] : memref<32x144xbf16, #tpu.memory_space<vmem>>, vector<32x144xbf16>
    %c0_1 = arith.constant 0 : index
    %c0_2 = arith.constant 0 : index
    %1 = vector.load %arg3[%c0_1, %c0_2] : memref<144x128xbf16, #tpu.memory_space<vmem>>, vector<144x128xbf16>
    %cst = arith.constant dense<0.000000e+00> : vector<32x128xf32>
    %2 = tpu.matmul %0, %1, %cst {dimension_numbers = #tpu.dot_dimension_numbers<[1], [0], [0], [1], [0, 0, 1, 1], [], []>} : vector<32x144xbf16>, vector<144x128xbf16>, vector<32x128xf32> -> vector<32x128xf32>
    %c0_3 = arith.constant 0 : index
    %c0_4 = arith.constant 0 : index
    %3 = vector.load %arg4[%c0_3, %c0_4] : memref<1x128xf32, #tpu.memory_space<vmem>>, vector<1x128xf32>
    %4 = vector.broadcast %3 : vector<1x128xf32> to vector<32x128xf32>
    %5 = arith.addf %2, %4 : vector<32x128xf32>
    %cst_5 = arith.constant 0.000000e+00 : f32
    %6 = vector.broadcast %cst_5 : f32 to vector<32x128xf32>
    %7 = arith.maximumf %5, %6 : vector<32x128xf32>
    %c0_6 = arith.constant 0 : index
    %c0_7 = arith.constant 0 : index
    %8 = vector.load %arg5[%c0_6, %c0_7] : memref<32x128xf32, #tpu.memory_space<vmem>>, vector<32x128xf32>
    tpu.vector_store %arg5[%c0_6, %c0_7], %7 {strides = array<i32>} : memref<32x128xf32, #tpu.memory_space<vmem>>, vector<32x128xf32>,
    return
  }
  func.func @transform_0(%arg0: i32, %arg1: i32) -> (i32, i32) {
    %c0_i32 = arith.constant 0 : i32
    %c0_i32_0 = arith.constant 0 : i32
    return %arg0, %c0_i32 : i32, i32
  }
  func.func @transform_1(%arg0: i32, %arg1: i32) -> (i32, i32) {
    %c0_i32 = arith.constant 0 : i32
    %c0_i32_0 = arith.constant 0 : i32
    return %c0_i32, %arg1 : i32, i32
  }
  func.func @transform_2(%arg0: i32, %arg1: i32) -> (i32, i32) {
    %c0_i32 = arith.constant 0 : i32
    %c0_i32_0 = arith.constant 0 : i32
    return %c0_i32, %arg1 : i32, i32
  }
  func.func @transform_3(%arg0: i32, %arg1: i32) -> (i32, i32) {
    %c0_i32 = arith.constant 0 : i32
    return %arg0, %arg1 : i32, i32
  }
}

module attributes {stable_mosaic.version = 11 : i64} {
  func.func @_gemm_bias_act_kernel(%arg0: i32, %arg1: i32, %arg2: memref<32x72xbf16, #tpu.memory_space<vmem>>, %arg3: memref<72x128xbf16, #tpu.memory_space<vmem>>, %arg4: memref<1x128xf32, #tpu.memory_space<vmem>>, %arg5: memref<32x128xf32, #tpu.memory_space<vmem>>) attributes {dimension_semantics = [#tpu.dimension_semantics<parallel>, #tpu.dimension_semantics<parallel>], iteration_bounds = array<i64: 1, 1>, scalar_prefetch = 0 : i64, scratch_operands = 0 : i64, tpu.core_type = #tpu.core_type<tc>, window_params = [{transform_indices = @transform_0, window_bounds = array<i64: 32, 72>}, {transform_indices = @transform_1, window_bounds = array<i64: 72, 128>}, {transform_indices = @transform_2, window_bounds = array<i64: 1, 128>}, {transform_indices = @transform_3, window_bounds = array<i64: 32, 128>}]} {
    %c0 = arith.constant 0 : index
    %c0_0 = arith.constant 0 : index
    %0 = vector.load %arg2[%c0, %c0_0] : memref<32x72xbf16, #tpu.memory_space<vmem>>, vector<32x72xbf16>
    %c0_1 = arith.constant 0 : index
    %c0_2 = arith.constant 0 : index
    %1 = vector.load %arg3[%c0_1, %c0_2] : memref<72x128xbf16, #tpu.memory_space<vmem>>, vector<72x128xbf16>
    %cst = arith.constant dense<0.000000e+00> : vector<32x128xf32>
    %2 = tpu.matmul %0, %1, %cst {dimension_numbers = #tpu.dot_dimension_numbers<[1], [0], [0], [1], [0, 0, 1, 1], [], []>} : vector<32x72xbf16>, vector<72x128xbf16>, vector<32x128xf32> -> vector<32x128xf32>
    %c0_3 = arith.constant 0 : index
    %c0_4 = arith.constant 0 : index
    %3 = vector.load %arg4[%c0_3, %c0_4] : memref<1x128xf32, #tpu.memory_space<vmem>>, vector<1x128xf32>
    %4 = vector.broadcast %3 : vector<1x128xf32> to vector<32x128xf32>
    %5 = arith.addf %2, %4 : vector<32x128xf32>
    %cst_5 = arith.constant 0.000000e+00 : f32
    %6 = vector.broadcast %cst_5 : f32 to vector<32x128xf32>
    %7 = arith.maximumf %5, %6 : vector<32x128xf32>
    %c0_6 = arith.constant 0 : index
    %c0_7 = arith.constant 0 : index
    %8 = vector.load %arg5[%c0_6, %c0_7] : memref<32x128xf32, #tpu.memory_space<vmem>>, vector<32x128xf32>
    tpu.vector_store %arg5[%c0_6, %c0_7], %7 {strides = array<i32>} : memref<32x128xf32, #tpu.memory_space<vmem>>, vector<32x128xf32>,
    return
  }
  func.func @transform_0(%arg0: i32, %arg1: i32) -> (i32, i32) {
    %c0_i32 = arith.constant 0 : i32
    %c0_i32_0 = arith.constant 0 : i32
    return %arg0, %c0_i32 : i32, i32
  }
  func.func @transform_1(%arg0: i32, %arg1: i32) -> (i32, i32) {
    %c0_i32 = arith.constant 0 : i32
    %c0_i32_0 = arith.constant 0 : i32
    return %c0_i32, %arg1 : i32, i32
  }
  func.func @transform_2(%arg0: i32, %arg1: i32) -> (i32, i32) {
    %c0_i32 = arith.constant 0 : i32
    %c0_i32_0 = arith.constant 0 : i32
    return %c0_i32, %arg1 : i32, i32
  }
  func.func @transform_3(%arg0: i32, %arg1: i32) -> (i32, i32) {
    %c0_i32 = arith.constant 0 : i32
    return %arg0, %arg1 : i32, i32
  }
}

module attributes {stable_mosaic.version = 11 : i64} {
  func.func @_gemm_bias_act_kernel(%arg0: i32, %arg1: i32, %arg2: memref<32x36xbf16, #tpu.memory_space<vmem>>, %arg3: memref<36x128xbf16, #tpu.memory_space<vmem>>, %arg4: memref<1x128xf32, #tpu.memory_space<vmem>>, %arg5: memref<32x128xf32, #tpu.memory_space<vmem>>) attributes {dimension_semantics = [#tpu.dimension_semantics<parallel>, #tpu.dimension_semantics<parallel>], iteration_bounds = array<i64: 1, 1>, scalar_prefetch = 0 : i64, scratch_operands = 0 : i64, tpu.core_type = #tpu.core_type<tc>, window_params = [{transform_indices = @transform_0, window_bounds = array<i64: 32, 36>}, {transform_indices = @transform_1, window_bounds = array<i64: 36, 128>}, {transform_indices = @transform_2, window_bounds = array<i64: 1, 128>}, {transform_indices = @transform_3, window_bounds = array<i64: 32, 128>}]} {
    %c0 = arith.constant 0 : index
    %c0_0 = arith.constant 0 : index
    %0 = vector.load %arg2[%c0, %c0_0] : memref<32x36xbf16, #tpu.memory_space<vmem>>, vector<32x36xbf16>
    %c0_1 = arith.constant 0 : index
    %c0_2 = arith.constant 0 : index
    %1 = vector.load %arg3[%c0_1, %c0_2] : memref<36x128xbf16, #tpu.memory_space<vmem>>, vector<36x128xbf16>
    %cst = arith.constant dense<0.000000e+00> : vector<32x128xf32>
    %2 = tpu.matmul %0, %1, %cst {dimension_numbers = #tpu.dot_dimension_numbers<[1], [0], [0], [1], [0, 0, 1, 1], [], []>} : vector<32x36xbf16>, vector<36x128xbf16>, vector<32x128xf32> -> vector<32x128xf32>
    %c0_3 = arith.constant 0 : index
    %c0_4 = arith.constant 0 : index
    %3 = vector.load %arg4[%c0_3, %c0_4] : memref<1x128xf32, #tpu.memory_space<vmem>>, vector<1x128xf32>
    %4 = vector.broadcast %3 : vector<1x128xf32> to vector<32x128xf32>
    %5 = arith.addf %2, %4 : vector<32x128xf32>
    %cst_5 = arith.constant 0.000000e+00 : f32
    %6 = vector.broadcast %cst_5 : f32 to vector<32x128xf32>
    %7 = arith.maximumf %5, %6 : vector<32x128xf32>
    %c0_6 = arith.constant 0 : index
    %c0_7 = arith.constant 0 : index
    %8 = vector.load %arg5[%c0_6, %c0_7] : memref<32x128xf32, #tpu.memory_space<vmem>>, vector<32x128xf32>
    tpu.vector_store %arg5[%c0_6, %c0_7], %7 {strides = array<i32>} : memref<32x128xf32, #tpu.memory_space<vmem>>, vector<32x128xf32>,
    return
  }
  func.func @transform_0(%arg0: i32, %arg1: i32) -> (i32, i32) {
    %c0_i32 = arith.constant 0 : i32
    %c0_i32_0 = arith.constant 0 : i32
    return %arg0, %c0_i32 : i32, i32
  }
  func.func @transform_1(%arg0: i32, %arg1: i32) -> (i32, i32) {
    %c0_i32 = arith.constant 0 : i32
    %c0_i32_0 = arith.constant 0 : i32
    return %c0_i32, %arg1 : i32, i32
  }
  func.func @transform_2(%arg0: i32, %arg1: i32) -> (i32, i32) {
    %c0_i32 = arith.constant 0 : i32
    %c0_i32_0 = arith.constant 0 : i32
    return %c0_i32, %arg1 : i32, i32
  }
  func.func @transform_3(%arg0: i32, %arg1: i32) -> (i32, i32) {
    %c0_i32 = arith.constant 0 : i32
    return %arg0, %arg1 : i32, i32
  }
}

module attributes {stable_mosaic.version = 11 : i64} {
  func.func @_gemm_bias_act_kernel(%arg0: i32, %arg1: i32, %arg2: memref<32x32xbf16, #tpu.memory_space<vmem>>, %arg3: memref<32x128xbf16, #tpu.memory_space<vmem>>, %arg4: memref<1x128xf32, #tpu.memory_space<vmem>>, %arg5: memref<32x128xf32, #tpu.memory_space<vmem>>) attributes {dimension_semantics = [#tpu.dimension_semantics<parallel>, #tpu.dimension_semantics<parallel>], iteration_bounds = array<i64: 1, 1>, scalar_prefetch = 0 : i64, scratch_operands = 0 : i64, tpu.core_type = #tpu.core_type<tc>, window_params = [{transform_indices = @transform_0, window_bounds = array<i64: 32, 32>}, {transform_indices = @transform_1, window_bounds = array<i64: 32, 128>}, {transform_indices = @transform_2, window_bounds = array<i64: 1, 128>}, {transform_indices = @transform_3, window_bounds = array<i64: 32, 128>}]} {
    %c0 = arith.constant 0 : index
    %c0_0 = arith.constant 0 : index
    %0 = vector.load %arg2[%c0, %c0_0] : memref<32x32xbf16, #tpu.memory_space<vmem>>, vector<32x32xbf16>
    %c0_1 = arith.constant 0 : index
    %c0_2 = arith.constant 0 : index
    %1 = vector.load %arg3[%c0_1, %c0_2] : memref<32x128xbf16, #tpu.memory_space<vmem>>, vector<32x128xbf16>
    %cst = arith.constant dense<0.000000e+00> : vector<32x128xf32>
    %2 = tpu.matmul %0, %1, %cst {dimension_numbers = #tpu.dot_dimension_numbers<[1], [0], [0], [1], [0, 0, 1, 1], [], []>} : vector<32x32xbf16>, vector<32x128xbf16>, vector<32x128xf32> -> vector<32x128xf32>
    %c0_3 = arith.constant 0 : index
    %c0_4 = arith.constant 0 : index
    %3 = vector.load %arg4[%c0_3, %c0_4] : memref<1x128xf32, #tpu.memory_space<vmem>>, vector<1x128xf32>
    %4 = vector.broadcast %3 : vector<1x128xf32> to vector<32x128xf32>
    %5 = arith.addf %2, %4 : vector<32x128xf32>
    %cst_5 = arith.constant 0.000000e+00 : f32
    %6 = vector.broadcast %cst_5 : f32 to vector<32x128xf32>
    %7 = arith.maximumf %5, %6 : vector<32x128xf32>
    %c0_6 = arith.constant 0 : index
    %c0_7 = arith.constant 0 : index
    %8 = vector.load %arg5[%c0_6, %c0_7] : memref<32x128xf32, #tpu.memory_space<vmem>>, vector<32x128xf32>
    tpu.vector_store %arg5[%c0_6, %c0_7], %7 {strides = array<i32>} : memref<32x128xf32, #tpu.memory_space<vmem>>, vector<32x128xf32>,
    return
  }
  func.func @transform_0(%arg0: i32, %arg1: i32) -> (i32, i32) {
    %c0_i32 = arith.constant 0 : i32
    %c0_i32_0 = arith.constant 0 : i32
    return %arg0, %c0_i32 : i32, i32
  }
  func.func @transform_1(%arg0: i32, %arg1: i32) -> (i32, i32) {
    %c0_i32 = arith.constant 0 : i32
    %c0_i32_0 = arith.constant 0 : i32
    return %c0_i32, %arg1 : i32, i32
  }
  func.func @transform_2(%arg0: i32, %arg1: i32) -> (i32, i32) {
    %c0_i32 = arith.constant 0 : i32
    %c0_i32_0 = arith.constant 0 : i32
    return %c0_i32, %arg1 : i32, i32
  }
  func.func @transform_3(%arg0: i32, %arg1: i32) -> (i32, i32) {
    %c0_i32 = arith.constant 0 : i32
    return %arg0, %arg1 : i32, i32
  }
}

module attributes {stable_mosaic.version = 11 : i64} {
  func.func @_tapsum_kernel(%arg0: i32, %arg1: memref<9x8x32xf32, #tpu.memory_space<vmem>>, %arg2: memref<9x32xf32, #tpu.memory_space<vmem>>, %arg3: memref<1x32xf32, #tpu.memory_space<vmem>>, %arg4: memref<8x32xf32, #tpu.memory_space<vmem>>) attributes {dimension_semantics = [#tpu.dimension_semantics<parallel>], iteration_bounds = array<i64: 1>, scalar_prefetch = 0 : i64, scratch_operands = 0 : i64, tpu.core_type = #tpu.core_type<tc>, window_params = [{transform_indices = @transform_0, window_bounds = array<i64: 9, 8, 32>}, {pipeline_mode = #tpu.pipeline_mode<synchronous>, transform_indices = @transform_1, window_bounds = array<i64: 9, 32>}, {pipeline_mode = #tpu.pipeline_mode<synchronous>, transform_indices = @transform_2, window_bounds = array<i64: 1, 32>}, {transform_indices = @transform_3, window_bounds = array<i64: 8, 32>}]} {
    %c0 = arith.constant 0 : index
    %c0_0 = arith.constant 0 : index
    %c0_1 = arith.constant 0 : index
    %0 = vector.load %arg1[%c0, %c0_0, %c0_1] : memref<9x8x32xf32, #tpu.memory_space<vmem>>, vector<1x8x32xf32>
    %1 = vector.shape_cast %0 : vector<1x8x32xf32> to vector<8x32xf32>
    %c0_2 = arith.constant 0 : index
    %c0_3 = arith.constant 0 : index
    %2 = vector.load %arg2[%c0_2, %c0_3] : memref<9x32xf32, #tpu.memory_space<vmem>>, vector<1x32xf32>
    %3 = vector.broadcast %2 : vector<1x32xf32> to vector<8x32xf32>
    %4 = arith.mulf %1, %3 : vector<8x32xf32>
    %c1 = arith.constant 1 : index
    %c0_4 = arith.constant 0 : index
    %c0_5 = arith.constant 0 : index
    %5 = vector.load %arg1[%c1, %c0_4, %c0_5] : memref<9x8x32xf32, #tpu.memory_space<vmem>>, vector<1x8x32xf32>
    %6 = vector.shape_cast %5 : vector<1x8x32xf32> to vector<8x32xf32>
    %c1_6 = arith.constant 1 : index
    %c0_7 = arith.constant 0 : index
    %7 = vector.load %arg2[%c1_6, %c0_7] : memref<9x32xf32, #tpu.memory_space<vmem>>, vector<1x32xf32>
    %8 = vector.broadcast %7 : vector<1x32xf32> to vector<8x32xf32>
    %9 = arith.mulf %6, %8 : vector<8x32xf32>
    %10 = arith.addf %4, %9 : vector<8x32xf32>
    %c2 = arith.constant 2 : index
    %c0_8 = arith.constant 0 : index
    %c0_9 = arith.constant 0 : index
    %11 = vector.load %arg1[%c2, %c0_8, %c0_9] : memref<9x8x32xf32, #tpu.memory_space<vmem>>, vector<1x8x32xf32>
    %12 = vector.shape_cast %11 : vector<1x8x32xf32> to vector<8x32xf32>
    %c2_10 = arith.constant 2 : index
    %c0_11 = arith.constant 0 : index
    %13 = vector.load %arg2[%c2_10, %c0_11] : memref<9x32xf32, #tpu.memory_space<vmem>>, vector<1x32xf32>
    %14 = vector.broadcast %13 : vector<1x32xf32> to vector<8x32xf32>
    %15 = arith.mulf %12, %14 : vector<8x32xf32>
    %16 = arith.addf %10, %15 : vector<8x32xf32>
    %c3 = arith.constant 3 : index
    %c0_12 = arith.constant 0 : index
    %c0_13 = arith.constant 0 : index
    %17 = vector.load %arg1[%c3, %c0_12, %c0_13] : memref<9x8x32xf32, #tpu.memory_space<vmem>>, vector<1x8x32xf32>
    %18 = vector.shape_cast %17 : vector<1x8x32xf32> to vector<8x32xf32>
    %c3_14 = arith.constant 3 : index
    %c0_15 = arith.constant 0 : index
    %19 = vector.load %arg2[%c3_14, %c0_15] : memref<9x32xf32, #tpu.memory_space<vmem>>, vector<1x32xf32>
    %20 = vector.broadcast %19 : vector<1x32xf32> to vector<8x32xf32>
    %21 = arith.mulf %18, %20 : vector<8x32xf32>
    %22 = arith.addf %16, %21 : vector<8x32xf32>
    %c4 = arith.constant 4 : index
    %c0_16 = arith.constant 0 : index
    %c0_17 = arith.constant 0 : index
    %23 = vector.load %arg1[%c4, %c0_16, %c0_17] : memref<9x8x32xf32, #tpu.memory_space<vmem>>, vector<1x8x32xf32>
    %24 = vector.shape_cast %23 : vector<1x8x32xf32> to vector<8x32xf32>
    %c4_18 = arith.constant 4 : index
    %c0_19 = arith.constant 0 : index
    %25 = vector.load %arg2[%c4_18, %c0_19] : memref<9x32xf32, #tpu.memory_space<vmem>>, vector<1x32xf32>
    %26 = vector.broadcast %25 : vector<1x32xf32> to vector<8x32xf32>
    %27 = arith.mulf %24, %26 : vector<8x32xf32>
    %28 = arith.addf %22, %27 : vector<8x32xf32>
    %c5 = arith.constant 5 : index
    %c0_20 = arith.constant 0 : index
    %c0_21 = arith.constant 0 : index
    %29 = vector.load %arg1[%c5, %c0_20, %c0_21] : memref<9x8x32xf32, #tpu.memory_space<vmem>>, vector<1x8x32xf32>
    %30 = vector.shape_cast %29 : vector<1x8x32xf32> to vector<8x32xf32>
    %c5_22 = arith.constant 5 : index
    %c0_23 = arith.constant 0 : index
    %31 = vector.load %arg2[%c5_22, %c0_23] : memref<9x32xf32, #tpu.memory_space<vmem>>, vector<1x32xf32>
    %32 = vector.broadcast %31 : vector<1x32xf32> to vector<8x32xf32>
    %33 = arith.mulf %30, %32 : vector<8x32xf32>
    %34 = arith.addf %28, %33 : vector<8x32xf32>
    %c6 = arith.constant 6 : index
    %c0_24 = arith.constant 0 : index
    %c0_25 = arith.constant 0 : index
    %35 = vector.load %arg1[%c6, %c0_24, %c0_25] : memref<9x8x32xf32, #tpu.memory_space<vmem>>, vector<1x8x32xf32>
    %36 = vector.shape_cast %35 : vector<1x8x32xf32> to vector<8x32xf32>
    %c6_26 = arith.constant 6 : index
    %c0_27 = arith.constant 0 : index
    %37 = vector.load %arg2[%c6_26, %c0_27] : memref<9x32xf32, #tpu.memory_space<vmem>>, vector<1x32xf32>
    %38 = vector.broadcast %37 : vector<1x32xf32> to vector<8x32xf32>
    %39 = arith.mulf %36, %38 : vector<8x32xf32>
    %40 = arith.addf %34, %39 : vector<8x32xf32>
    %c7 = arith.constant 7 : index
    %c0_28 = arith.constant 0 : index
    %c0_29 = arith.constant 0 : index
    %41 = vector.load %arg1[%c7, %c0_28, %c0_29] : memref<9x8x32xf32, #tpu.memory_space<vmem>>, vector<1x8x32xf32>
    %42 = vector.shape_cast %41 : vector<1x8x32xf32> to vector<8x32xf32>
    %c7_30 = arith.constant 7 : index
    %c0_31 = arith.constant 0 : index
    %43 = vector.load %arg2[%c7_30, %c0_31] : memref<9x32xf32, #tpu.memory_space<vmem>>, vector<1x32xf32>
    %44 = vector.broadcast %43 : vector<1x32xf32> to vector<8x32xf32>
    %45 = arith.mulf %42, %44 : vector<8x32xf32>
    %46 = arith.addf %40, %45 : vector<8x32xf32>
    %c8 = arith.constant 8 : index
    %c0_32 = arith.constant 0 : index
    %c0_33 = arith.constant 0 : index
    %47 = vector.load %arg1[%c8, %c0_32, %c0_33] : memref<9x8x32xf32, #tpu.memory_space<vmem>>, vector<1x8x32xf32>
    %48 = vector.shape_cast %47 : vector<1x8x32xf32> to vector<8x32xf32>
    %c8_34 = arith.constant 8 : index
    %c0_35 = arith.constant 0 : index
    %49 = vector.load %arg2[%c8_34, %c0_35] : memref<9x32xf32, #tpu.memory_space<vmem>>, vector<1x32xf32>
    %50 = vector.broadcast %49 : vector<1x32xf32> to vector<8x32xf32>
    %51 = arith.mulf %48, %50 : vector<8x32xf32>
    %52 = arith.addf %46, %51 : vector<8x32xf32>
    %c0_36 = arith.constant 0 : index
    %c0_37 = arith.constant 0 : index
    %53 = vector.load %arg3[%c0_36, %c0_37] : memref<1x32xf32, #tpu.memory_space<vmem>>, vector<1x32xf32>
    %54 = vector.broadcast %53 : vector<1x32xf32> to vector<8x32xf32>
    %55 = arith.addf %52, %54 : vector<8x32xf32>
    %c0_38 = arith.constant 0 : index
    %c0_39 = arith.constant 0 : index
    %56 = vector.load %arg4[%c0_38, %c0_39] : memref<8x32xf32, #tpu.memory_space<vmem>>, vector<8x32xf32>
    tpu.vector_store %arg4[%c0_38, %c0_39], %55 {strides = array<i32>} : memref<8x32xf32, #tpu.memory_space<vmem>>, vector<8x32xf32>,
    return
  }
  func.func @transform_0(%arg0: i32) -> (i32, i32, i32) {
    %c0_i32 = arith.constant 0 : i32
    %c0_i32_0 = arith.constant 0 : i32
    %c0_i32_1 = arith.constant 0 : i32
    return %c0_i32, %arg0, %c0_i32_0 : i32, i32, i32
  }
  func.func @transform_1(%arg0: i32) -> (i32, i32) {
    %c0_i32 = arith.constant 0 : i32
    %c0_i32_0 = arith.constant 0 : i32
    %c0_i32_1 = arith.constant 0 : i32
    return %c0_i32, %c0_i32_0 : i32, i32
  }
  func.func @transform_2(%arg0: i32) -> (i32, i32) {
    %c0_i32 = arith.constant 0 : i32
    %c0_i32_0 = arith.constant 0 : i32
    %c0_i32_1 = arith.constant 0 : i32
    return %c0_i32, %c0_i32_0 : i32, i32
  }
  func.func @transform_3(%arg0: i32) -> (i32, i32) {
    %c0_i32 = arith.constant 0 : i32
    %c0_i32_0 = arith.constant 0 : i32
    return %arg0, %c0_i32 : i32, i32
  }
}

module attributes {stable_mosaic.version = 11 : i64} {
  func.func @_gemm_bias_act_kernel(%arg0: i32, %arg1: i32, %arg2: memref<8x288xbf16, #tpu.memory_space<vmem>>, %arg3: memref<288x128xbf16, #tpu.memory_space<vmem>>, %arg4: memref<1x128xf32, #tpu.memory_space<vmem>>, %arg5: memref<8x128xf32, #tpu.memory_space<vmem>>) attributes {dimension_semantics = [#tpu.dimension_semantics<parallel>, #tpu.dimension_semantics<parallel>], iteration_bounds = array<i64: 1, 1>, scalar_prefetch = 0 : i64, scratch_operands = 0 : i64, tpu.core_type = #tpu.core_type<tc>, window_params = [{transform_indices = @transform_0, window_bounds = array<i64: 8, 288>}, {transform_indices = @transform_1, window_bounds = array<i64: 288, 128>}, {transform_indices = @transform_2, window_bounds = array<i64: 1, 128>}, {transform_indices = @transform_3, window_bounds = array<i64: 8, 128>}]} {
    %c0 = arith.constant 0 : index
    %c0_0 = arith.constant 0 : index
    %0 = vector.load %arg2[%c0, %c0_0] : memref<8x288xbf16, #tpu.memory_space<vmem>>, vector<8x288xbf16>
    %c0_1 = arith.constant 0 : index
    %c0_2 = arith.constant 0 : index
    %1 = vector.load %arg3[%c0_1, %c0_2] : memref<288x128xbf16, #tpu.memory_space<vmem>>, vector<288x128xbf16>
    %cst = arith.constant dense<0.000000e+00> : vector<8x128xf32>
    %2 = tpu.matmul %0, %1, %cst {dimension_numbers = #tpu.dot_dimension_numbers<[1], [0], [0], [1], [0, 0, 1, 1], [], []>} : vector<8x288xbf16>, vector<288x128xbf16>, vector<8x128xf32> -> vector<8x128xf32>
    %c0_3 = arith.constant 0 : index
    %c0_4 = arith.constant 0 : index
    %3 = vector.load %arg4[%c0_3, %c0_4] : memref<1x128xf32, #tpu.memory_space<vmem>>, vector<1x128xf32>
    %4 = vector.broadcast %3 : vector<1x128xf32> to vector<8x128xf32>
    %5 = arith.addf %2, %4 : vector<8x128xf32>
    %cst_5 = arith.constant 0.000000e+00 : f32
    %6 = vector.broadcast %cst_5 : f32 to vector<8x128xf32>
    %7 = arith.maximumf %5, %6 : vector<8x128xf32>
    %c0_6 = arith.constant 0 : index
    %c0_7 = arith.constant 0 : index
    %8 = vector.load %arg5[%c0_6, %c0_7] : memref<8x128xf32, #tpu.memory_space<vmem>>, vector<8x128xf32>
    tpu.vector_store %arg5[%c0_6, %c0_7], %7 {strides = array<i32>} : memref<8x128xf32, #tpu.memory_space<vmem>>, vector<8x128xf32>,
    return
  }
  func.func @transform_0(%arg0: i32, %arg1: i32) -> (i32, i32) {
    %c0_i32 = arith.constant 0 : i32
    %c0_i32_0 = arith.constant 0 : i32
    return %arg0, %c0_i32 : i32, i32
  }
  func.func @transform_1(%arg0: i32, %arg1: i32) -> (i32, i32) {
    %c0_i32 = arith.constant 0 : i32
    %c0_i32_0 = arith.constant 0 : i32
    return %c0_i32, %arg1 : i32, i32
  }
  func.func @transform_2(%arg0: i32, %arg1: i32) -> (i32, i32) {
    %c0_i32 = arith.constant 0 : i32
    %c0_i32_0 = arith.constant 0 : i32
    return %c0_i32, %arg1 : i32, i32
  }
  func.func @transform_3(%arg0: i32, %arg1: i32) -> (i32, i32) {
    %c0_i32 = arith.constant 0 : i32
    return %arg0, %arg1 : i32, i32
  }
}

module attributes {stable_mosaic.version = 11 : i64} {
  func.func @_gemm_bias_act_kernel(%arg0: i32, %arg1: i32, %arg2: memref<8x144xbf16, #tpu.memory_space<vmem>>, %arg3: memref<144x128xbf16, #tpu.memory_space<vmem>>, %arg4: memref<1x128xf32, #tpu.memory_space<vmem>>, %arg5: memref<8x128xf32, #tpu.memory_space<vmem>>) attributes {dimension_semantics = [#tpu.dimension_semantics<parallel>, #tpu.dimension_semantics<parallel>], iteration_bounds = array<i64: 1, 1>, scalar_prefetch = 0 : i64, scratch_operands = 0 : i64, tpu.core_type = #tpu.core_type<tc>, window_params = [{transform_indices = @transform_0, window_bounds = array<i64: 8, 144>}, {transform_indices = @transform_1, window_bounds = array<i64: 144, 128>}, {transform_indices = @transform_2, window_bounds = array<i64: 1, 128>}, {transform_indices = @transform_3, window_bounds = array<i64: 8, 128>}]} {
    %c0 = arith.constant 0 : index
    %c0_0 = arith.constant 0 : index
    %0 = vector.load %arg2[%c0, %c0_0] : memref<8x144xbf16, #tpu.memory_space<vmem>>, vector<8x144xbf16>
    %c0_1 = arith.constant 0 : index
    %c0_2 = arith.constant 0 : index
    %1 = vector.load %arg3[%c0_1, %c0_2] : memref<144x128xbf16, #tpu.memory_space<vmem>>, vector<144x128xbf16>
    %cst = arith.constant dense<0.000000e+00> : vector<8x128xf32>
    %2 = tpu.matmul %0, %1, %cst {dimension_numbers = #tpu.dot_dimension_numbers<[1], [0], [0], [1], [0, 0, 1, 1], [], []>} : vector<8x144xbf16>, vector<144x128xbf16>, vector<8x128xf32> -> vector<8x128xf32>
    %c0_3 = arith.constant 0 : index
    %c0_4 = arith.constant 0 : index
    %3 = vector.load %arg4[%c0_3, %c0_4] : memref<1x128xf32, #tpu.memory_space<vmem>>, vector<1x128xf32>
    %4 = vector.broadcast %3 : vector<1x128xf32> to vector<8x128xf32>
    %5 = arith.addf %2, %4 : vector<8x128xf32>
    %cst_5 = arith.constant 0.000000e+00 : f32
    %6 = vector.broadcast %cst_5 : f32 to vector<8x128xf32>
    %7 = arith.maximumf %5, %6 : vector<8x128xf32>
    %c0_6 = arith.constant 0 : index
    %c0_7 = arith.constant 0 : index
    %8 = vector.load %arg5[%c0_6, %c0_7] : memref<8x128xf32, #tpu.memory_space<vmem>>, vector<8x128xf32>
    tpu.vector_store %arg5[%c0_6, %c0_7], %7 {strides = array<i32>} : memref<8x128xf32, #tpu.memory_space<vmem>>, vector<8x128xf32>,
    return
  }
  func.func @transform_0(%arg0: i32, %arg1: i32) -> (i32, i32) {
    %c0_i32 = arith.constant 0 : i32
    %c0_i32_0 = arith.constant 0 : i32
    return %arg0, %c0_i32 : i32, i32
  }
  func.func @transform_1(%arg0: i32, %arg1: i32) -> (i32, i32) {
    %c0_i32 = arith.constant 0 : i32
    %c0_i32_0 = arith.constant 0 : i32
    return %c0_i32, %arg1 : i32, i32
  }
  func.func @transform_2(%arg0: i32, %arg1: i32) -> (i32, i32) {
    %c0_i32 = arith.constant 0 : i32
    %c0_i32_0 = arith.constant 0 : i32
    return %c0_i32, %arg1 : i32, i32
  }
  func.func @transform_3(%arg0: i32, %arg1: i32) -> (i32, i32) {
    %c0_i32 = arith.constant 0 : i32
    return %arg0, %arg1 : i32, i32
  }
}

module attributes {stable_mosaic.version = 11 : i64} {
  func.func @_gemm_bias_act_kernel(%arg0: i32, %arg1: i32, %arg2: memref<8x72xbf16, #tpu.memory_space<vmem>>, %arg3: memref<72x128xbf16, #tpu.memory_space<vmem>>, %arg4: memref<1x128xf32, #tpu.memory_space<vmem>>, %arg5: memref<8x128xf32, #tpu.memory_space<vmem>>) attributes {dimension_semantics = [#tpu.dimension_semantics<parallel>, #tpu.dimension_semantics<parallel>], iteration_bounds = array<i64: 1, 1>, scalar_prefetch = 0 : i64, scratch_operands = 0 : i64, tpu.core_type = #tpu.core_type<tc>, window_params = [{transform_indices = @transform_0, window_bounds = array<i64: 8, 72>}, {transform_indices = @transform_1, window_bounds = array<i64: 72, 128>}, {transform_indices = @transform_2, window_bounds = array<i64: 1, 128>}, {transform_indices = @transform_3, window_bounds = array<i64: 8, 128>}]} {
    %c0 = arith.constant 0 : index
    %c0_0 = arith.constant 0 : index
    %0 = vector.load %arg2[%c0, %c0_0] : memref<8x72xbf16, #tpu.memory_space<vmem>>, vector<8x72xbf16>
    %c0_1 = arith.constant 0 : index
    %c0_2 = arith.constant 0 : index
    %1 = vector.load %arg3[%c0_1, %c0_2] : memref<72x128xbf16, #tpu.memory_space<vmem>>, vector<72x128xbf16>
    %cst = arith.constant dense<0.000000e+00> : vector<8x128xf32>
    %2 = tpu.matmul %0, %1, %cst {dimension_numbers = #tpu.dot_dimension_numbers<[1], [0], [0], [1], [0, 0, 1, 1], [], []>} : vector<8x72xbf16>, vector<72x128xbf16>, vector<8x128xf32> -> vector<8x128xf32>
    %c0_3 = arith.constant 0 : index
    %c0_4 = arith.constant 0 : index
    %3 = vector.load %arg4[%c0_3, %c0_4] : memref<1x128xf32, #tpu.memory_space<vmem>>, vector<1x128xf32>
    %4 = vector.broadcast %3 : vector<1x128xf32> to vector<8x128xf32>
    %5 = arith.addf %2, %4 : vector<8x128xf32>
    %cst_5 = arith.constant 0.000000e+00 : f32
    %6 = vector.broadcast %cst_5 : f32 to vector<8x128xf32>
    %7 = arith.maximumf %5, %6 : vector<8x128xf32>
    %c0_6 = arith.constant 0 : index
    %c0_7 = arith.constant 0 : index
    %8 = vector.load %arg5[%c0_6, %c0_7] : memref<8x128xf32, #tpu.memory_space<vmem>>, vector<8x128xf32>
    tpu.vector_store %arg5[%c0_6, %c0_7], %7 {strides = array<i32>} : memref<8x128xf32, #tpu.memory_space<vmem>>, vector<8x128xf32>,
    return
  }
  func.func @transform_0(%arg0: i32, %arg1: i32) -> (i32, i32) {
    %c0_i32 = arith.constant 0 : i32
    %c0_i32_0 = arith.constant 0 : i32
    return %arg0, %c0_i32 : i32, i32
  }
  func.func @transform_1(%arg0: i32, %arg1: i32) -> (i32, i32) {
    %c0_i32 = arith.constant 0 : i32
    %c0_i32_0 = arith.constant 0 : i32
    return %c0_i32, %arg1 : i32, i32
  }
  func.func @transform_2(%arg0: i32, %arg1: i32) -> (i32, i32) {
    %c0_i32 = arith.constant 0 : i32
    %c0_i32_0 = arith.constant 0 : i32
    return %c0_i32, %arg1 : i32, i32
  }
  func.func @transform_3(%arg0: i32, %arg1: i32) -> (i32, i32) {
    %c0_i32 = arith.constant 0 : i32
    return %arg0, %arg1 : i32, i32
  }
}

module attributes {stable_mosaic.version = 11 : i64} {
  func.func @_gemm_bias_act_kernel(%arg0: i32, %arg1: i32, %arg2: memref<8x64xbf16, #tpu.memory_space<vmem>>, %arg3: memref<64x128xbf16, #tpu.memory_space<vmem>>, %arg4: memref<1x128xf32, #tpu.memory_space<vmem>>, %arg5: memref<8x128xf32, #tpu.memory_space<vmem>>) attributes {dimension_semantics = [#tpu.dimension_semantics<parallel>, #tpu.dimension_semantics<parallel>], iteration_bounds = array<i64: 1, 1>, scalar_prefetch = 0 : i64, scratch_operands = 0 : i64, tpu.core_type = #tpu.core_type<tc>, window_params = [{transform_indices = @transform_0, window_bounds = array<i64: 8, 64>}, {transform_indices = @transform_1, window_bounds = array<i64: 64, 128>}, {transform_indices = @transform_2, window_bounds = array<i64: 1, 128>}, {transform_indices = @transform_3, window_bounds = array<i64: 8, 128>}]} {
    %c0 = arith.constant 0 : index
    %c0_0 = arith.constant 0 : index
    %0 = vector.load %arg2[%c0, %c0_0] : memref<8x64xbf16, #tpu.memory_space<vmem>>, vector<8x64xbf16>
    %c0_1 = arith.constant 0 : index
    %c0_2 = arith.constant 0 : index
    %1 = vector.load %arg3[%c0_1, %c0_2] : memref<64x128xbf16, #tpu.memory_space<vmem>>, vector<64x128xbf16>
    %cst = arith.constant dense<0.000000e+00> : vector<8x128xf32>
    %2 = tpu.matmul %0, %1, %cst {dimension_numbers = #tpu.dot_dimension_numbers<[1], [0], [0], [1], [0, 0, 1, 1], [], []>} : vector<8x64xbf16>, vector<64x128xbf16>, vector<8x128xf32> -> vector<8x128xf32>
    %c0_3 = arith.constant 0 : index
    %c0_4 = arith.constant 0 : index
    %3 = vector.load %arg4[%c0_3, %c0_4] : memref<1x128xf32, #tpu.memory_space<vmem>>, vector<1x128xf32>
    %4 = vector.broadcast %3 : vector<1x128xf32> to vector<8x128xf32>
    %5 = arith.addf %2, %4 : vector<8x128xf32>
    %cst_5 = arith.constant 0.000000e+00 : f32
    %6 = vector.broadcast %cst_5 : f32 to vector<8x128xf32>
    %7 = arith.maximumf %5, %6 : vector<8x128xf32>
    %c0_6 = arith.constant 0 : index
    %c0_7 = arith.constant 0 : index
    %8 = vector.load %arg5[%c0_6, %c0_7] : memref<8x128xf32, #tpu.memory_space<vmem>>, vector<8x128xf32>
    tpu.vector_store %arg5[%c0_6, %c0_7], %7 {strides = array<i32>} : memref<8x128xf32, #tpu.memory_space<vmem>>, vector<8x128xf32>,
    return
  }
  func.func @transform_0(%arg0: i32, %arg1: i32) -> (i32, i32) {
    %c0_i32 = arith.constant 0 : i32
    %c0_i32_0 = arith.constant 0 : i32
    return %arg0, %c0_i32 : i32, i32
  }
  func.func @transform_1(%arg0: i32, %arg1: i32) -> (i32, i32) {
    %c0_i32 = arith.constant 0 : i32
    %c0_i32_0 = arith.constant 0 : i32
    return %c0_i32, %arg1 : i32, i32
  }
  func.func @transform_2(%arg0: i32, %arg1: i32) -> (i32, i32) {
    %c0_i32 = arith.constant 0 : i32
    %c0_i32_0 = arith.constant 0 : i32
    return %c0_i32, %arg1 : i32, i32
  }
  func.func @transform_3(%arg0: i32, %arg1: i32) -> (i32, i32) {
    %c0_i32 = arith.constant 0 : i32
    return %arg0, %arg1 : i32, i32
  }
}

module attributes {stable_mosaic.version = 11 : i64} {
  func.func @_tapsum_kernel(%arg0: i32, %arg1: memref<9x8x64xf32, #tpu.memory_space<vmem>>, %arg2: memref<9x64xf32, #tpu.memory_space<vmem>>, %arg3: memref<1x64xf32, #tpu.memory_space<vmem>>, %arg4: memref<8x64xf32, #tpu.memory_space<vmem>>) attributes {dimension_semantics = [#tpu.dimension_semantics<parallel>], iteration_bounds = array<i64: 1>, scalar_prefetch = 0 : i64, scratch_operands = 0 : i64, tpu.core_type = #tpu.core_type<tc>, window_params = [{transform_indices = @transform_0, window_bounds = array<i64: 9, 8, 64>}, {pipeline_mode = #tpu.pipeline_mode<synchronous>, transform_indices = @transform_1, window_bounds = array<i64: 9, 64>}, {pipeline_mode = #tpu.pipeline_mode<synchronous>, transform_indices = @transform_2, window_bounds = array<i64: 1, 64>}, {transform_indices = @transform_3, window_bounds = array<i64: 8, 64>}]} {
    %c0 = arith.constant 0 : index
    %c0_0 = arith.constant 0 : index
    %c0_1 = arith.constant 0 : index
    %0 = vector.load %arg1[%c0, %c0_0, %c0_1] : memref<9x8x64xf32, #tpu.memory_space<vmem>>, vector<1x8x64xf32>
    %1 = vector.shape_cast %0 : vector<1x8x64xf32> to vector<8x64xf32>
    %c0_2 = arith.constant 0 : index
    %c0_3 = arith.constant 0 : index
    %2 = vector.load %arg2[%c0_2, %c0_3] : memref<9x64xf32, #tpu.memory_space<vmem>>, vector<1x64xf32>
    %3 = vector.broadcast %2 : vector<1x64xf32> to vector<8x64xf32>
    %4 = arith.mulf %1, %3 : vector<8x64xf32>
    %c1 = arith.constant 1 : index
    %c0_4 = arith.constant 0 : index
    %c0_5 = arith.constant 0 : index
    %5 = vector.load %arg1[%c1, %c0_4, %c0_5] : memref<9x8x64xf32, #tpu.memory_space<vmem>>, vector<1x8x64xf32>
    %6 = vector.shape_cast %5 : vector<1x8x64xf32> to vector<8x64xf32>
    %c1_6 = arith.constant 1 : index
    %c0_7 = arith.constant 0 : index
    %7 = vector.load %arg2[%c1_6, %c0_7] : memref<9x64xf32, #tpu.memory_space<vmem>>, vector<1x64xf32>
    %8 = vector.broadcast %7 : vector<1x64xf32> to vector<8x64xf32>
    %9 = arith.mulf %6, %8 : vector<8x64xf32>
    %10 = arith.addf %4, %9 : vector<8x64xf32>
    %c2 = arith.constant 2 : index
    %c0_8 = arith.constant 0 : index
    %c0_9 = arith.constant 0 : index
    %11 = vector.load %arg1[%c2, %c0_8, %c0_9] : memref<9x8x64xf32, #tpu.memory_space<vmem>>, vector<1x8x64xf32>
    %12 = vector.shape_cast %11 : vector<1x8x64xf32> to vector<8x64xf32>
    %c2_10 = arith.constant 2 : index
    %c0_11 = arith.constant 0 : index
    %13 = vector.load %arg2[%c2_10, %c0_11] : memref<9x64xf32, #tpu.memory_space<vmem>>, vector<1x64xf32>
    %14 = vector.broadcast %13 : vector<1x64xf32> to vector<8x64xf32>
    %15 = arith.mulf %12, %14 : vector<8x64xf32>
    %16 = arith.addf %10, %15 : vector<8x64xf32>
    %c3 = arith.constant 3 : index
    %c0_12 = arith.constant 0 : index
    %c0_13 = arith.constant 0 : index
    %17 = vector.load %arg1[%c3, %c0_12, %c0_13] : memref<9x8x64xf32, #tpu.memory_space<vmem>>, vector<1x8x64xf32>
    %18 = vector.shape_cast %17 : vector<1x8x64xf32> to vector<8x64xf32>
    %c3_14 = arith.constant 3 : index
    %c0_15 = arith.constant 0 : index
    %19 = vector.load %arg2[%c3_14, %c0_15] : memref<9x64xf32, #tpu.memory_space<vmem>>, vector<1x64xf32>
    %20 = vector.broadcast %19 : vector<1x64xf32> to vector<8x64xf32>
    %21 = arith.mulf %18, %20 : vector<8x64xf32>
    %22 = arith.addf %16, %21 : vector<8x64xf32>
    %c4 = arith.constant 4 : index
    %c0_16 = arith.constant 0 : index
    %c0_17 = arith.constant 0 : index
    %23 = vector.load %arg1[%c4, %c0_16, %c0_17] : memref<9x8x64xf32, #tpu.memory_space<vmem>>, vector<1x8x64xf32>
    %24 = vector.shape_cast %23 : vector<1x8x64xf32> to vector<8x64xf32>
    %c4_18 = arith.constant 4 : index
    %c0_19 = arith.constant 0 : index
    %25 = vector.load %arg2[%c4_18, %c0_19] : memref<9x64xf32, #tpu.memory_space<vmem>>, vector<1x64xf32>
    %26 = vector.broadcast %25 : vector<1x64xf32> to vector<8x64xf32>
    %27 = arith.mulf %24, %26 : vector<8x64xf32>
    %28 = arith.addf %22, %27 : vector<8x64xf32>
    %c5 = arith.constant 5 : index
    %c0_20 = arith.constant 0 : index
    %c0_21 = arith.constant 0 : index
    %29 = vector.load %arg1[%c5, %c0_20, %c0_21] : memref<9x8x64xf32, #tpu.memory_space<vmem>>, vector<1x8x64xf32>
    %30 = vector.shape_cast %29 : vector<1x8x64xf32> to vector<8x64xf32>
    %c5_22 = arith.constant 5 : index
    %c0_23 = arith.constant 0 : index
    %31 = vector.load %arg2[%c5_22, %c0_23] : memref<9x64xf32, #tpu.memory_space<vmem>>, vector<1x64xf32>
    %32 = vector.broadcast %31 : vector<1x64xf32> to vector<8x64xf32>
    %33 = arith.mulf %30, %32 : vector<8x64xf32>
    %34 = arith.addf %28, %33 : vector<8x64xf32>
    %c6 = arith.constant 6 : index
    %c0_24 = arith.constant 0 : index
    %c0_25 = arith.constant 0 : index
    %35 = vector.load %arg1[%c6, %c0_24, %c0_25] : memref<9x8x64xf32, #tpu.memory_space<vmem>>, vector<1x8x64xf32>
    %36 = vector.shape_cast %35 : vector<1x8x64xf32> to vector<8x64xf32>
    %c6_26 = arith.constant 6 : index
    %c0_27 = arith.constant 0 : index
    %37 = vector.load %arg2[%c6_26, %c0_27] : memref<9x64xf32, #tpu.memory_space<vmem>>, vector<1x64xf32>
    %38 = vector.broadcast %37 : vector<1x64xf32> to vector<8x64xf32>
    %39 = arith.mulf %36, %38 : vector<8x64xf32>
    %40 = arith.addf %34, %39 : vector<8x64xf32>
    %c7 = arith.constant 7 : index
    %c0_28 = arith.constant 0 : index
    %c0_29 = arith.constant 0 : index
    %41 = vector.load %arg1[%c7, %c0_28, %c0_29] : memref<9x8x64xf32, #tpu.memory_space<vmem>>, vector<1x8x64xf32>
    %42 = vector.shape_cast %41 : vector<1x8x64xf32> to vector<8x64xf32>
    %c7_30 = arith.constant 7 : index
    %c0_31 = arith.constant 0 : index
    %43 = vector.load %arg2[%c7_30, %c0_31] : memref<9x64xf32, #tpu.memory_space<vmem>>, vector<1x64xf32>
    %44 = vector.broadcast %43 : vector<1x64xf32> to vector<8x64xf32>
    %45 = arith.mulf %42, %44 : vector<8x64xf32>
    %46 = arith.addf %40, %45 : vector<8x64xf32>
    %c8 = arith.constant 8 : index
    %c0_32 = arith.constant 0 : index
    %c0_33 = arith.constant 0 : index
    %47 = vector.load %arg1[%c8, %c0_32, %c0_33] : memref<9x8x64xf32, #tpu.memory_space<vmem>>, vector<1x8x64xf32>
    %48 = vector.shape_cast %47 : vector<1x8x64xf32> to vector<8x64xf32>
    %c8_34 = arith.constant 8 : index
    %c0_35 = arith.constant 0 : index
    %49 = vector.load %arg2[%c8_34, %c0_35] : memref<9x64xf32, #tpu.memory_space<vmem>>, vector<1x64xf32>
    %50 = vector.broadcast %49 : vector<1x64xf32> to vector<8x64xf32>
    %51 = arith.mulf %48, %50 : vector<8x64xf32>
    %52 = arith.addf %46, %51 : vector<8x64xf32>
    %c0_36 = arith.constant 0 : index
    %c0_37 = arith.constant 0 : index
    %53 = vector.load %arg3[%c0_36, %c0_37] : memref<1x64xf32, #tpu.memory_space<vmem>>, vector<1x64xf32>
    %54 = vector.broadcast %53 : vector<1x64xf32> to vector<8x64xf32>
    %55 = arith.addf %52, %54 : vector<8x64xf32>
    %c0_38 = arith.constant 0 : index
    %c0_39 = arith.constant 0 : index
    %56 = vector.load %arg4[%c0_38, %c0_39] : memref<8x64xf32, #tpu.memory_space<vmem>>, vector<8x64xf32>
    tpu.vector_store %arg4[%c0_38, %c0_39], %55 {strides = array<i32>} : memref<8x64xf32, #tpu.memory_space<vmem>>, vector<8x64xf32>,
    return
  }
  func.func @transform_0(%arg0: i32) -> (i32, i32, i32) {
    %c0_i32 = arith.constant 0 : i32
    %c0_i32_0 = arith.constant 0 : i32
    %c0_i32_1 = arith.constant 0 : i32
    return %c0_i32, %arg0, %c0_i32_0 : i32, i32, i32
  }
  func.func @transform_1(%arg0: i32) -> (i32, i32) {
    %c0_i32 = arith.constant 0 : i32
    %c0_i32_0 = arith.constant 0 : i32
    %c0_i32_1 = arith.constant 0 : i32
    return %c0_i32, %c0_i32_0 : i32, i32
  }
  func.func @transform_2(%arg0: i32) -> (i32, i32) {
    %c0_i32 = arith.constant 0 : i32
    %c0_i32_0 = arith.constant 0 : i32
    %c0_i32_1 = arith.constant 0 : i32
    return %c0_i32, %c0_i32_0 : i32, i32
  }
  func.func @transform_3(%arg0: i32) -> (i32, i32) {
    %c0_i32 = arith.constant 0 : i32
    %c0_i32_0 = arith.constant 0 : i32
    return %arg0, %c0_i32 : i32, i32
  }
}

module attributes {stable_mosaic.version = 11 : i64} {
  func.func @_gemm_bias_act_kernel(%arg0: i32, %arg1: i32, %arg2: memref<8x576xbf16, #tpu.memory_space<vmem>>, %arg3: memref<576x128xbf16, #tpu.memory_space<vmem>>, %arg4: memref<1x128xf32, #tpu.memory_space<vmem>>, %arg5: memref<8x128xf32, #tpu.memory_space<vmem>>) attributes {dimension_semantics = [#tpu.dimension_semantics<parallel>, #tpu.dimension_semantics<parallel>], iteration_bounds = array<i64: 1, 1>, scalar_prefetch = 0 : i64, scratch_operands = 0 : i64, tpu.core_type = #tpu.core_type<tc>, window_params = [{transform_indices = @transform_0, window_bounds = array<i64: 8, 576>}, {transform_indices = @transform_1, window_bounds = array<i64: 576, 128>}, {transform_indices = @transform_2, window_bounds = array<i64: 1, 128>}, {transform_indices = @transform_3, window_bounds = array<i64: 8, 128>}]} {
    %c0 = arith.constant 0 : index
    %c0_0 = arith.constant 0 : index
    %0 = vector.load %arg2[%c0, %c0_0] : memref<8x576xbf16, #tpu.memory_space<vmem>>, vector<8x576xbf16>
    %c0_1 = arith.constant 0 : index
    %c0_2 = arith.constant 0 : index
    %1 = vector.load %arg3[%c0_1, %c0_2] : memref<576x128xbf16, #tpu.memory_space<vmem>>, vector<576x128xbf16>
    %cst = arith.constant dense<0.000000e+00> : vector<8x128xf32>
    %2 = tpu.matmul %0, %1, %cst {dimension_numbers = #tpu.dot_dimension_numbers<[1], [0], [0], [1], [0, 0, 1, 1], [], []>} : vector<8x576xbf16>, vector<576x128xbf16>, vector<8x128xf32> -> vector<8x128xf32>
    %c0_3 = arith.constant 0 : index
    %c0_4 = arith.constant 0 : index
    %3 = vector.load %arg4[%c0_3, %c0_4] : memref<1x128xf32, #tpu.memory_space<vmem>>, vector<1x128xf32>
    %4 = vector.broadcast %3 : vector<1x128xf32> to vector<8x128xf32>
    %5 = arith.addf %2, %4 : vector<8x128xf32>
    %cst_5 = arith.constant 0.000000e+00 : f32
    %6 = vector.broadcast %cst_5 : f32 to vector<8x128xf32>
    %7 = arith.maximumf %5, %6 : vector<8x128xf32>
    %c0_6 = arith.constant 0 : index
    %c0_7 = arith.constant 0 : index
    %8 = vector.load %arg5[%c0_6, %c0_7] : memref<8x128xf32, #tpu.memory_space<vmem>>, vector<8x128xf32>
    tpu.vector_store %arg5[%c0_6, %c0_7], %7 {strides = array<i32>} : memref<8x128xf32, #tpu.memory_space<vmem>>, vector<8x128xf32>,
    return
  }
  func.func @transform_0(%arg0: i32, %arg1: i32) -> (i32, i32) {
    %c0_i32 = arith.constant 0 : i32
    %c0_i32_0 = arith.constant 0 : i32
    return %arg0, %c0_i32 : i32, i32
  }
  func.func @transform_1(%arg0: i32, %arg1: i32) -> (i32, i32) {
    %c0_i32 = arith.constant 0 : i32
    %c0_i32_0 = arith.constant 0 : i32
    return %c0_i32, %arg1 : i32, i32
  }
  func.func @transform_2(%arg0: i32, %arg1: i32) -> (i32, i32) {
    %c0_i32 = arith.constant 0 : i32
    %c0_i32_0 = arith.constant 0 : i32
    return %c0_i32, %arg1 : i32, i32
  }
  func.func @transform_3(%arg0: i32, %arg1: i32) -> (i32, i32) {
    %c0_i32 = arith.constant 0 : i32
    return %arg0, %arg1 : i32, i32
  }
}

</mosaic_0001>

<llo_original>
// kernel: _lambda_.20
$region0: #{_lambda_.20}
  #allocation0 [shape = 'u32[]', space=smem, size = 0x4, offset = 0x4, fixed_abs, tag = 'smem constant byte address 0x4 - core index']
  #allocation1 [shape = 'u32[144,128]{1,0:T(1,128)}', space=vmem, size = 0x12000, scoped, tag = 'internal scratch']
  %s0 = inlined_call_operand.vmem [shape: bf16[512,27], index: 0, kind: input, shape index: {}]
  %s1 = inlined_call_operand.vmem [shape: bf16[27,128], index: 1, kind: input, shape index: {}]
  %s2 = inlined_call_operand.vmem [shape: f32[1,128], index: 2, kind: input, shape index: {}]
  %s3 = inlined_call_operand.vmem [shape: f32[512,128], index: 3, kind: output, shape index: {}]
  %s4 = sld [smem:[#allocation0]]
  $region45: #{_lambda_.20} parent=0
    _
  %s6 = ssub.s32 1, %s4
  %s7 = scalar_select 0, %s6, %s4
  loop: start=0, step=1, limit=4
  $region2: #{_lambda_.20} parent=0 // loop_pre_header
    _
  $region3: #{_lambda_.20} parent=0 // loop_header
    %s9 = sphi 0, %s13
    %p10 = scmp.ge.s32.totalorder %s9, 4
    %s16 = sphi 0, %s28
    %s17 = sphi 0, %s24
    %s18 = sphi 0, %s16
    %s19 = sphi 0, %s17
    %s20 = sphi 0, %s18
    %s21 = sphi 0, %s19
    %s31 = sphi 0, %s33
    %s34 = sphi 0, %s31
    %s35 = sphi 0, %s34
    %s51 = sphi 0, %s35
    %s57 = sphi 0, %s59
    %s60 = sphi 0, %s57
    %s61 = sphi 0, %s60
    %s77 = sphi 0, %s61
    %s83 = sphi 0, %s85
    %s86 = sphi 0, %s83
    %s87 = sphi 0, %s86
    %s103 = sphi 0, %s87
    %s111 = sphi 0, %s113
    %s114 = sphi 0, %s111
    %s115 = sphi 0, %s114
    %s131 = sphi 0, %s115
  $region4: #{_lambda_.20} parent=0 // loop_header_branch
    %12 = sbr.rel (%p10) target = $region8
  $region5: #{_lambda_.20} parent=0 // loop_body
    %s14 = ssub.s32 %s9, 1
    %s15 = ssub.s32 %s9, 2
    %s22 = sadd.s32 1, %s17
    %p23 = scmp.ge.s32.totalorder %s22, 1
    %s24 = scalar_select %p23, 0, %s22
    %s25 = sadd.s32 1, %s16
    %s26 = scalar_select %p23, %s25, %s16
    %p27 = scmp.ge.s32.totalorder %s26, 2
    %s28 = scalar_select %p27, 0, %s26
    %s29 = ssub.s32 %s16, %s28
    %p30 = scmp.eq.s32.totalorder %s29, 0
    %s32 = sadd.s32 %s31, 1
    %s33 = scalar_select %p30, %s31, %s32
    %p36 = pneg %p30
    %p37 = scmp.eq.s32.totalorder %s9, 1
    %p38 = por %p36, %p37
    %p39 = scmp.ne.s32.totalorder %s31, %s34
    %p40 = scmp.eq.s32.totalorder %s9, 0
    %p41 = por %p39, %p40
    %p42 = scmp.ne.s32.totalorder %s31, %s34
    %p43 = scmp.eq.s32.totalorder %s14, 1
    %p44 = por %p42, %p43
    %p45 = scmp.ne.s32.totalorder %s34, %s35
    %p46 = scmp.eq.s32.totalorder %s14, 0
    %p47 = por %p45, %p46
    %p48 = scmp.ne.s32.totalorder %s34, %s35
    %p49 = scmp.eq.s32.totalorder %s15, 1
    %p50 = por %p48, %p49
    %p52 = scmp.ne.s32.totalorder %s35, %s51
    %p53 = scmp.eq.s32.totalorder %s15, 0
    %p54 = por %p52, %p53
    %s55 = ssub.s32 %s17, %s24
    %p56 = scmp.eq.s32.totalorder %s55, 0
    %s58 = sadd.s32 %s57, 1
    %s59 = scalar_select %p56, %s57, %s58
    %p62 = pneg %p56
    %p63 = scmp.eq.s32.totalorder %s9, 1
    %p64 = por %p62, %p63
    %p65 = scmp.ne.s32.totalorder %s57, %s60
    %p66 = scmp.eq.s32.totalorder %s9, 0
    %p67 = por %p65, %p66
    %p68 = scmp.ne.s32.totalorder %s57, %s60
    %p69 = scmp.eq.s32.totalorder %s14, 1
    %p70 = por %p68, %p69
    %p71 = scmp.ne.s32.totalorder %s60, %s61
    %p72 = scmp.eq.s32.totalorder %s14, 0
    %p73 = por %p71, %p72
    %p74 = scmp.ne.s32.totalorder %s60, %s61
    %p75 = scmp.eq.s32.totalorder %s15, 1
    %p76 = por %p74, %p75
    %p78 = scmp.ne.s32.totalorder %s61, %s77
    %p79 = scmp.eq.s32.totalorder %s15, 0
    %p80 = por %p78, %p79
    %s81 = ssub.s32 %s17, %s24
    %p82 = scmp.eq.s32.totalorder %s81, 0
    %s84 = sadd.s32 %s83, 1
    %s85 = scalar_select %p82, %s83, %s84
    %p88 = pneg %p82
    %p89 = scmp.eq.s32.totalorder %s9, 1
    %p90 = por %p88, %p89
    %p91 = scmp.ne.s32.totalorder %s83, %s86
    %p92 = scmp.eq.s32.totalorder %s9, 0
    %p93 = por %p91, %p92
    %p94 = scmp.ne.s32.totalorder %s83, %s86
    %p95 = scmp.eq.s32.totalorder %s14, 1
    %p96 = por %p94, %p95
    %p97 = scmp.ne.s32.totalorder %s86, %s87
    %p98 = scmp.eq.s32.totalorder %s14, 0
    %p99 = por %p97, %p98
    %p100 = scmp.ne.s32.totalorder %s86, %s87
    %p101 = scmp.eq.s32.totalorder %s15, 1
    %p102 = por %p100, %p101
    %p104 = scmp.ne.s32.totalorder %s87, %s103
    %p105 = scmp.eq.s32.totalorder %s15, 0
    %p106 = por %p104, %p105
    %s107 = ssub.s32 %s16, %s28
    %s108 = ssub.s32 %s17, %s24
    %s109 = sor.u32 %s107, %s108
    %p110 = scmp.eq.s32.totalorder %s109, 0
    %s112 = sadd.s32 %s111, 1
    %s113 = scalar_select %p110, %s111, %s112
    %p116 = pneg %p110
    %p117 = scmp.eq.s32.totalorder %s9, 1
    %p118 = por %p116, %p117
    %p119 = scmp.ne.s32.totalorder %s111, %s114
    %p120 = scmp.eq.s32.totalorder %s9, 0
    %p121 = por %p119, %p120
    %p122 = scmp.ne.s32.totalorder %s111, %s114
    %p123 = scmp.eq.s32.totalorder %s14, 1
    %p124 = por %p122, %p123
    %p125 = scmp.ne.s32.totalorder %s114, %s115
    %p126 = scmp.eq.s32.totalorder %s14, 0
    %p127 = por %p125, %p126
    %p128 = scmp.ne.s32.totalorder %s114, %s115
    %p129 = scmp.eq.s32.totalorder %s15, 1
    %p130 = por %p128, %p129
    %p132 = scmp.ne.s32.totalorder %s115, %s131
    %p133 = scmp.eq.s32.totalorder %s15, 0
    %p134 = por %p132, %p133
    %p135 = scmp.le.s32.totalorder 1, %s9
    %p136 = scmp.lt.s32.totalorder %s9, 3
    %p137 = pnand %p135, %p136
    %p138 = pneg %p137
    // Predicated region
    $region9: #{_lambda_.20} parent=5 // pred_check
      _
    $region10: #{_lambda_.20} parent=5 // pred_check_branch
      %140 = sbr.rel (%p137) target = $region12
    $region11: #{_lambda_.20} parent=5 // pred_region
      %s141 = ssub.s32 %s9, 1
      // Predicated region
      $region13: #{_lambda_.20} parent=11 // pred_check
        %p142 = pneg %p73
      $region14: #{_lambda_.20} parent=11 // pred_check_branch
        %144 = sbr.rel (%p142) target = $region16
      $region15: #{_lambda_.20} parent=11 // pred_region
        %p145 = scmp.lt.s32.totalorder %s19, 0
        %s146 = scalar_select %p145, %s19, 0
        %s147 = smul.addr %s146, 4
        %s148 = scalar_lea.vmem %s1, %s147
      $region16: #{_lambda_.20} parent=11 // pred_fallthru
        _
      // Predicated region
      $region17: #{_lambda_.20} parent=11 // pred_check
        %p149 = pneg %p99
      $region18: #{_lambda_.20} parent=11 // pred_check_branch
        %151 = sbr.rel (%p149) target = $region20
      $region19: #{_lambda_.20} parent=11 // pred_region
        %p152 = scmp.lt.s32.totalorder %s19, 0
        %s153 = scalar_select %p152, %s19, 0
        %s154 = scalar_lea.vmem %s2, %s153
      $region20: #{_lambda_.20} parent=11 // pred_fallthru
        _
    $region12: #{_lambda_.20} parent=5 // pred_fallthru
      _
    %p155 = scmp.lt.s32.totalorder %s9, 2
    // Predicated region
    $region21: #{_lambda_.20} parent=5 // pred_check
      %p156 = pneg %p155
    $region22: #{_lambda_.20} parent=5 // pred_check_branch
      %158 = sbr.rel (%p156) target = $region24
    $region23: #{_lambda_.20} parent=5 // pred_region
      // Predicated region
      $region25: #{_lambda_.20} parent=23 // pred_check
        %p159 = pneg %p41
      $region26: #{_lambda_.20} parent=23 // pred_check_branch
        %161 = sbr.rel (%p159) target = $region28
      $region27: #{_lambda_.20} parent=23 // pred_region
        %s162 = smul.u32 32, %s16
        %p163 = scmp.lt.s32.totalorder %s162, 63
        %s164 = scalar_select %p163, %s162, 63
        %s165 = smul.addr %s164, 4
        %s166 = scalar_lea.vmem %s0, %s165
        %s167 = smul.u32 32, %s16
      $region28: #{_lambda_.20} parent=23 // pred_fallthru
        _
    $region24: #{_lambda_.20} parent=5 // pred_fallthru
      _
    %p168 = scmp.le.s32.totalorder 1, %s9
    %p169 = scmp.lt.s32.totalorder %s9, 3
    %p170 = pnand %p168, %p169
    %p171 = pneg %p170
    // Predicated region
    $region29: #{_lambda_.20} parent=5 // pred_check
      _
    $region30: #{_lambda_.20} parent=5 // pred_check_branch
      %173 = sbr.rel (%p170) target = $region32
    $region31: #{_lambda_.20} parent=5 // pred_region
      %s174 = ssub.s32 %s9, 1
      %s175 = smul.u32 32, %s18
      %p176 = scmp.lt.s32.totalorder %s175, 63
      %s177 = scalar_select %p176, %s175, 63
      %s178 = smul.addr %s177, 4
      %s179 = scalar_lea.vmem %s0, %s178
      %p180 = pneg %p47
      %p181 = pneg %p44
      %p182 = scmp.lt.s32.totalorder %s19, 0
      %s183 = scalar_select %p182, %s19, 0
      %s184 = smul.addr %s183, 4
      %s185 = scalar_lea.vmem %s1, %s184
      %p186 = pneg %p73
      %p187 = pneg %p70
      %p188 = scmp.lt.s32.totalorder %s19, 0
      %s189 = scalar_select %p188, %s19, 0
      %s190 = scalar_lea.vmem %s2, %s189
      %p191 = pneg %p99
      %p192 = pneg %p96
      %p193 = pneg %p127
      %p194 = pneg %p124
      %s195 = smul.u32 32, %s18
      %p196 = scmp.lt.s32.totalorder %s195, 63
      %s197 = scalar_select %p196, %s195, 63
      %p198 = scmp.lt.s32.totalorder %s19, 0
      %s199 = scalar_select %p198, %s19, 0
      %s200 = sadd.s32 %s199, %s197
      %s201 = smul.addr %s200, 8
      %s202 = scalar_lea.vmem %s3, %s201
      %s203 = smul.u32 32, %s18
      %p204 = scmp.lt.s32.totalorder %s203, 63
      %s205 = scalar_select %p204, %s203, 63
      %s206 = smul.addr %s205, 4
      %s207 = scalar_lea.vmem %s0, %s206
      %s208 = smul.u32 32, %s18
      %p209 = scmp.lt.s32.totalorder %s19, 0
      %s210 = scalar_select %p209, %s19, 0
      %s211 = smul.addr %s210, 4
      %s212 = scalar_lea.vmem %s1, %s211
      %p213 = scmp.lt.s32.totalorder %s19, 0
      %s214 = scalar_select %p213, %s19, 0
      %s215 = scalar_lea.vmem %s2, %s214
      %s216 = smul.u32 32, %s18
      %p217 = scmp.lt.s32.totalorder %s216, 63
      %s218 = scalar_select %p217, %s216, 63
      %p219 = scmp.lt.s32.totalorder %s19, 0
      %s220 = scalar_select %p219, %s19, 0
      %s221 = sadd.s32 %s220, %s218
      %s222 = smul.addr %s221, 8
      %s223 = scalar_lea.vmem %s3, %s222
      %s224 = smul.u32 32, %s18
      %v226 = vld [vmem:[%s207] sm:$0xf]
      %v227 = vld [vmem:[%s207 + $0x4] sm:$0xf]
      %v228 = vld [vmem:[%s207 + $0x8] sm:$0xf]
      %v229 = vld [vmem:[%s207 + $0xc] sm:$0xf]
      %v230 = vld [vmem:[%s207 + $0x10] sm:$0xf]
      %v231 = vld [vmem:[%s207 + $0x14] sm:$0xf]
      %v232 = vld [vmem:[%s207 + $0x18] sm:$0xf]
      %v233 = vld [vmem:[%s207 + $0x1c] sm:$0xf]
      %v234 = vld [vmem:[%s207 + $0x20] sm:$0xf]
      %v235 = vld [vmem:[%s207 + $0x24] sm:$0xf]
      %v236 = vld [vmem:[%s207 + $0x28] sm:$0xf]
      %v237 = vld [vmem:[%s207 + $0x2c] sm:$0xf]
      %v238 = vld [vmem:[%s207 + $0x30] sm:$0xf]
      %v239 = vld [vmem:[%s207 + $0x34] sm:$0xf]
      %v240 = vld [vmem:[%s207 + $0x38] sm:$0xf]
      %v241 = vld [vmem:[%s207 + $0x3c] sm:$0xf]
      %v242 = vld [vmem:[%s207 + $0x40] sm:$0xf]
      %v243 = vld [vmem:[%s207 + $0x44] sm:$0xf]
      %v244 = vld [vmem:[%s207 + $0x48] sm:$0xf]
      %v245 = vld [vmem:[%s207 + $0x4c] sm:$0xf]
      %v246 = vld [vmem:[%s207 + $0x50] sm:$0xf]
      %v247 = vld [vmem:[%s207 + $0x54] sm:$0xf]
      %v248 = vld [vmem:[%s207 + $0x58] sm:$0xf]
      %v249 = vld [vmem:[%s207 + $0x5c] sm:$0xf]
      %v250 = vld [vmem:[%s207 + $0x60] sm:$0xf]
      %v251 = vld [vmem:[%s207 + $0x64] sm:$0xf]
      %v252 = vld [vmem:[%s207 + $0x68] sm:$0xf]
      %v253 = vld [vmem:[%s207 + $0x6c] sm:$0xf]
      %v254 = vld [vmem:[%s207 + $0x70] sm:$0xf]
      %v255 = vld [vmem:[%s207 + $0x74] sm:$0xf]
      %v256 = vld [vmem:[%s207 + $0x78] sm:$0xf]
      %v257 = vld [vmem:[%s207 + $0x7c] sm:$0xf]
      %v258 = vld [vmem:[%s212] sm:$0xf]
      %v259 = vld [vmem:[%s212 + $0x4] sm:$0xf]
      %v260 = vld [vmem:[%s212 + $0x8] sm:$0xf]
      %v261 = vld [vmem:[%s212 + $0xc] sm:$0x3]
      %v262 = vld [vmem:[%s215] sm:$0x1]
      %v264 = vlaneseq
      %v265 = vshrl.u32 %v264, 7
      %v266 = vsub.s32 0, %v265
      %v267 = vrot.slane %v262, %v266
      %v301 = vunpack.c.l.b16 %v226
      %v302 = vunpack.c.l.b16 %v227
      %v303 = vunpack.c.l.b16 %v228
      %v304 = vunpack.c.l.b16 %v229
      %v305 = vunpack.c.l.b16 %v230
      %v306 = vunpack.c.l.b16 %v231
      %v307 = vunpack.c.l.b16 %v232
      %v308 = vunpack.c.l.b16 %v233
      %v309 = vunpack.c.l.b16 %v234
      %v310 = vunpack.c.l.b16 %v235
      %v311 = vunpack.c.l.b16 %v236
      %v312 = vunpack.c.l.b16 %v237
      %v313 = vunpack.c.l.b16 %v238
      %v314 = vunpack.c.l.b16 %v239
      %v315 = vunpack.c.l.b16 %v240
      %v316 = vunpack.c.l.b16 %v241
      %v317 = vunpack.c.l.b16 %v242
      %v318 = vunpack.c.l.b16 %v243
      %v319 = vunpack.c.l.b16 %v244
      %v320 = vunpack.c.l.b16 %v245
      %v321 = vunpack.c.l.b16 %v246
      %v322 = vunpack.c.l.b16 %v247
      %v323 = vunpack.c.l.b16 %v248
      %v324 = vunpack.c.l.b16 %v249
      %v325 = vunpack.c.l.b16 %v250
      %v326 = vunpack.c.l.b16 %v251
      %v327 = vunpack.c.l.b16 %v252
      %v328 = vunpack.c.l.b16 %v253
      %v329 = vunpack.c.l.b16 %v254
      %v330 = vunpack.c.l.b16 %v255
      %v331 = vunpack.c.l.b16 %v256
      %v332 = vunpack.c.l.b16 %v257
      %v333 = vpack.c.b16 %v302, %v301
      %v334 = vpack.c.b16 %v304, %v303
      %v335 = vpack.c.b16 %v306, %v305
      %v336 = vpack.c.b16 %v308, %v307
      %v337 = vpack.c.b16 %v310, %v309
      %v338 = vpack.c.b16 %v312, %v311
      %v339 = vpack.c.b16 %v314, %v313
      %v340 = vpack.c.b16 %v316, %v315
      %v341 = vpack.c.b16 %v318, %v317
      %v342 = vpack.c.b16 %v320, %v319
      %v343 = vpack.c.b16 %v322, %v321
      %v344 = vpack.c.b16 %v324, %v323
      %v345 = vpack.c.b16 %v326, %v325
      %v346 = vpack.c.b16 %v328, %v327
      %v347 = vpack.c.b16 %v330, %v329
      %v348 = vpack.c.b16 %v332, %v331
      %v353 = vunpack.c.l.b16 %v258
      %v354 = vunpack.c.l.b16 %v259
      %v355 = vunpack.c.l.b16 %v260
      %v356 = vunpack.c.l.b16 %v261
      %v357 = vpack.c.b16 %v354, %v353
      %v358 = vpack.c.b16 %v356, %v355
      %vm360 = vcmask 220160
      %v362 = vsel %vm360, %v333, 0
      %v365 = vsel %vm360, %v334, 0
      %v368 = vsel %vm360, %v335, 0
      %v371 = vsel %vm360, %v336, 0
      %v374 = vsel %vm360, %v337, 0
      %v377 = vsel %vm360, %v338, 0
      %v380 = vsel %vm360, %v339, 0
      %v383 = vsel %vm360, %v340, 0
      %v386 = vsel %vm360, %v341, 0
      %v389 = vsel %vm360, %v342, 0
      %v392 = vsel %vm360, %v343, 0
      %v395 = vsel %vm360, %v344, 0
      %v398 = vsel %vm360, %v345, 0
      %v401 = vsel %vm360, %v346, 0
      %v404 = vsel %vm360, %v347, 0
      %v407 = vsel %vm360, %v348, 0
      %vm409 = vcmask 1044480
      %vm410 = vcmask 1045504
      %v411 = vsel %vm409, 4294967295, 65535
      %v412 = vsel %vm410, %v411, 0
      %v414 = vand.u32 %v358, %v412
      %416 = vmatprep.subr.bf16.mxu0 0
      %417 = vmatpush1.bf16.msra.mxu0 %v357
      %418 = vmatprep.subr.bf16.mxu0 0
      %419 = vmatpush1.bf16.msra.mxu0 %v414
      %420 = vmatprep.subr.bf16.mxu0 0
      %421 = vmatpush1.bf16.msra.mxu0 0
      %422 = vmatprep.subr.bf16.mxu0 0
      %423 = vmatpush1.bf16.msra.mxu0 0
      %424 = vmatprep.subr.bf16.mxu0 0
      %425 = vmatpush1.bf16.msra.mxu0 0
      %426 = vmatprep.subr.bf16.mxu0 0
      %427 = vmatpush1.bf16.msra.mxu0 0
      %428 = vmatprep.subr.bf16.mxu0 0
      %429 = vmatpush1.bf16.msra.mxu0 0
      %430 = vmatprep.subr.bf16.mxu0 0
      %431 = vmatpush1.bf16.msra.mxu0 0
      %432 = vmatprep.subr.bf16.mxu0 0
      %433 = vmatpush1.bf16.msra.mxu0 0
      %434 = vmatprep.subr.bf16.mxu0 0
      %435 = vmatpush1.bf16.msra.mxu0 0
      %436 = vmatprep.subr.bf16.mxu0 0
      %437 = vmatpush1.bf16.msra.mxu0 0
      %438 = vmatprep.subr.bf16.mxu0 0
      %439 = vmatpush1.bf16.msra.mxu0 0
      %440 = vmatprep.subr.bf16.mxu0 0
      %441 = vmatpush1.bf16.msra.mxu0 0
      %442 = vmatprep.subr.bf16.mxu0 0
      %443 = vmatpush1.bf16.msra.mxu0 0
      %444 = vmatprep.subr.bf16.mxu0 0
      %445 = vmatpush1.bf16.msra.mxu0 0
      %446 = vmatprep.subr.bf16.mxu0 0
      %447 = vmatpush1.bf16.msra.mxu0 0
      %448 = vmatprep.mubr.bf16.mxu0 0
      %449 = vmatmul.mubr.bf16.gmra.mrb[0].mxu0 %v362
      %v450 = vpop.f32.mrb[0].mxu0
      %v451 = vadd.f32 %v267, %v450
      %v452 = vpop.f32.mrb[0].mxu0
      %v453 = vpop.f32.mrb[0].mxu0
      %v454 = vadd.f32 %v267, %v453
      %v455 = vpop.f32.mrb[0].mxu0
      %456 = vmatprep.mubr.bf16.mxu0 0
      %457 = vmatmul.mubr.bf16.gmra.mrb[0].mxu0 %v365
      %v458 = vpop.f32.mrb[0].mxu0
      %v459 = vadd.f32 %v267, %v458
      %v460 = vpop.f32.mrb[0].mxu0
      %v461 = vpop.f32.mrb[0].mxu0
      %v462 = vadd.f32 %v267, %v461
      %v463 = vpop.f32.mrb[0].mxu0
      %464 = vmatprep.mubr.bf16.mxu0 0
      %465 = vmatmul.mubr.bf16.gmra.mrb[0].mxu0 %v368
      %v466 = vpop.f32.mrb[0].mxu0
      %v467 = vadd.f32 %v267, %v466
      %v468 = vpop.f32.mrb[0].mxu0
      %v469 = vpop.f32.mrb[0].mxu0
      %v470 = vadd.f32 %v267, %v469
      %v471 = vpop.f32.mrb[0].mxu0
      %472 = vmatprep.mubr.bf16.mxu0 0
      %473 = vmatmul.mubr.bf16.gmra.mrb[0].mxu0 %v371
      %v474 = vpop.f32.mrb[0].mxu0
      %v475 = vadd.f32 %v267, %v474
      %v476 = vpop.f32.mrb[0].mxu0
      %v477 = vpop.f32.mrb[0].mxu0
      %v478 = vadd.f32 %v267, %v477
      %v479 = vpop.f32.mrb[0].mxu0
      %480 = vmatprep.mubr.bf16.mxu0 0
      %481 = vmatmul.mubr.bf16.gmra.mrb[0].mxu0 %v374
      %v482 = vpop.f32.mrb[0].mxu0
      %v483 = vadd.f32 %v267, %v482
      %v484 = vpop.f32.mrb[0].mxu0
      %v485 = vpop.f32.mrb[0].mxu0
      %v486 = vadd.f32 %v267, %v485
      %v487 = vpop.f32.mrb[0].mxu0
      %488 = vmatprep.mubr.bf16.mxu0 0
      %489 = vmatmul.mubr.bf16.gmra.mrb[0].mxu0 %v377
      %v490 = vpop.f32.mrb[0].mxu0
      %v491 = vadd.f32 %v267, %v490
      %v492 = vpop.f32.mrb[0].mxu0
      %v493 = vpop.f32.mrb[0].mxu0
      %v494 = vadd.f32 %v267, %v493
      %v495 = vpop.f32.mrb[0].mxu0
      %496 = vmatprep.mubr.bf16.mxu0 0
      %497 = vmatmul.mubr.bf16.gmra.mrb[0].mxu0 %v380
      %v498 = vpop.f32.mrb[0].mxu0
      %v499 = vadd.f32 %v267, %v498
      %v500 = vpop.f32.mrb[0].mxu0
      %v501 = vpop.f32.mrb[0].mxu0
      %v502 = vadd.f32 %v267, %v501
      %v503 = vpop.f32.mrb[0].mxu0
      %504 = vmatprep.mubr.bf16.mxu0 0
      %505 = vmatmul.mubr.bf16.gmra.mrb[0].mxu0 %v383
      %v506 = vpop.f32.mrb[0].mxu0
      %v507 = vadd.f32 %v267, %v506
      %v508 = vpop.f32.mrb[0].mxu0
      %v509 = vpop.f32.mrb[0].mxu0
      %v510 = vadd.f32 %v267, %v509
      %v511 = vpop.f32.mrb[0].mxu0
      %512 = vmatprep.mubr.bf16.mxu0 0
      %513 = vmatmul.mubr.bf16.gmra.mrb[0].mxu0 %v386
      %v514 = vpop.f32.mrb[0].mxu0
      %v515 = vadd.f32 %v267, %v514
      %v516 = vpop.f32.mrb[0].mxu0
      %v517 = vpop.f32.mrb[0].mxu0
      %v518 = vadd.f32 %v267, %v517
      %v519 = vpop.f32.mrb[0].mxu0
      %520 = vmatprep.mubr.bf16.mxu0 0
      %521 = vmatmul.mubr.bf16.gmra.mrb[0].mxu0 %v389
      %v522 = vpop.f32.mrb[0].mxu0
      %v523 = vadd.f32 %v267, %v522
      %v524 = vpop.f32.mrb[0].mxu0
      %v525 = vpop.f32.mrb[0].mxu0
      %v526 = vadd.f32 %v267, %v525
      %v527 = vpop.f32.mrb[0].mxu0
      %528 = vmatprep.mubr.bf16.mxu0 0
      %529 = vmatmul.mubr.bf16.gmra.mrb[0].mxu0 %v392
      %v530 = vpop.f32.mrb[0].mxu0
      %v531 = vadd.f32 %v267, %v530
      %v532 = vpop.f32.mrb[0].mxu0
      %v533 = vpop.f32.mrb[0].mxu0
      %v534 = vadd.f32 %v267, %v533
      %v535 = vpop.f32.mrb[0].mxu0
      %536 = vmatprep.mubr.bf16.mxu0 0
      %537 = vmatmul.mubr.bf16.gmra.mrb[0].mxu0 %v395
      %v538 = vpop.f32.mrb[0].mxu0
      %v539 = vadd.f32 %v267, %v538
      %v540 = vpop.f32.mrb[0].mxu0
      %v541 = vpop.f32.mrb[0].mxu0
      %v542 = vadd.f32 %v267, %v541
      %v543 = vpop.f32.mrb[0].mxu0
      %544 = vmatprep.mubr.bf16.mxu0 0
      %545 = vmatmul.mubr.bf16.gmra.mrb[0].mxu0 %v398
      %v546 = vpop.f32.mrb[0].mxu0
      %v547 = vadd.f32 %v267, %v546
      %v548 = vpop.f32.mrb[0].mxu0
      %v549 = vpop.f32.mrb[0].mxu0
      %v550 = vadd.f32 %v267, %v549
      %v551 = vpop.f32.mrb[0].mxu0
      %552 = vmatprep.mubr.bf16.mxu0 0
      %553 = vmatmul.mubr.bf16.gmra.mrb[0].mxu0 %v401
      %v554 = vpop.f32.mrb[0].mxu0
      %v555 = vadd.f32 %v267, %v554
      %v556 = vpop.f32.mrb[0].mxu0
      %v557 = vpop.f32.mrb[0].mxu0
      %v558 = vadd.f32 %v267, %v557
      %v559 = vpop.f32.mrb[0].mxu0
      %560 = vmatprep.mubr.bf16.mxu0 0
      %561 = vmatmul.mubr.bf16.gmra.mrb[0].mxu0 %v404
      %v562 = vpop.f32.mrb[0].mxu0
      %v563 = vadd.f32 %v267, %v562
      %v564 = vpop.f32.mrb[0].mxu0
      %v565 = vpop.f32.mrb[0].mxu0
      %v566 = vadd.f32 %v267, %v565
      %v567 = vpop.f32.mrb[0].mxu0
      %568 = vmatprep.mubr.bf16.mxu0 0
      %569 = vmatmul.mubr.bf16.gmra.mrb[0].mxu0 %v407
      %v570 = vpop.f32.mrb[0].mxu0
      %v571 = vadd.f32 %v267, %v570
      %v572 = vpop.f32.mrb[0].mxu0
      %v573 = vpop.f32.mrb[0].mxu0
      %v574 = vadd.f32 %v267, %v573
      %v575 = vpop.f32.mrb[0].mxu0
      %576 = vdwg.mxu0
      %v577 = vmax.f32 %v451, 0.0
      %v578 = vmax.f32 %v454, 0.0
      %v579 = vmax.f32 %v459, 0.0
      %v580 = vmax.f32 %v462, 0.0
      %v581 = vmax.f32 %v467, 0.0
      %v582 = vmax.f32 %v470, 0.0
      %v583 = vmax.f32 %v475, 0.0
      %v584 = vmax.f32 %v478, 0.0
      %v585 = vmax.f32 %v483, 0.0
      %v586 = vmax.f32 %v486, 0.0
      %v587 = vmax.f32 %v491, 0.0
      %v588 = vmax.f32 %v494, 0.0
      %v589 = vmax.f32 %v499, 0.0
      %v590 = vmax.f32 %v502, 0.0
      %v591 = vmax.f32 %v507, 0.0
      %v592 = vmax.f32 %v510, 0.0
      %v593 = vmax.f32 %v515, 0.0
      %v594 = vmax.f32 %v518, 0.0
      %v595 = vmax.f32 %v523, 0.0
      %v596 = vmax.f32 %v526, 0.0
      %v597 = vmax.f32 %v531, 0.0
      %v598 = vmax.f32 %v534, 0.0
      %v599 = vmax.f32 %v539, 0.0
      %v600 = vmax.f32 %v542, 0.0
      %v601 = vmax.f32 %v547, 0.0
      %v602 = vmax.f32 %v550, 0.0
      %v603 = vmax.f32 %v555, 0.0
      %v604 = vmax.f32 %v558, 0.0
      %v605 = vmax.f32 %v563, 0.0
      %v606 = vmax.f32 %v566, 0.0
      %v607 = vmax.f32 %v571, 0.0
      %v608 = vmax.f32 %v574, 0.0
      %609 = vst [vmem:[%s223] sm:$0xff] %v577
      %610 = vst [vmem:[%s223 + $0x8] sm:$0xff] %v578
      %611 = vst [vmem:[%s223 + $0x10] sm:$0xff] %v579
      %612 = vst [vmem:[%s223 + $0x18] sm:$0xff] %v580
      %613 = vst [vmem:[%s223 + $0x20] sm:$0xff] %v581
      %614 = vst [vmem:[%s223 + $0x28] sm:$0xff] %v582
      %615 = vst [vmem:[%s223 + $0x30] sm:$0xff] %v583
      %616 = vst [vmem:[%s223 + $0x38] sm:$0xff] %v584
      %617 = vst [vmem:[%s223 + $0x40] sm:$0xff] %v585
      %618 = vst [vmem:[%s223 + $0x48] sm:$0xff] %v586
      %619 = vst [vmem:[%s223 + $0x50] sm:$0xff] %v587
      %620 = vst [vmem:[%s223 + $0x58] sm:$0xff] %v588
      %621 = vst [vmem:[%s223 + $0x60] sm:$0xff] %v589
      %622 = vst [vmem:[%s223 + $0x68] sm:$0xff] %v590
      %623 = vst [vmem:[%s223 + $0x70] sm:$0xff] %v591
      %624 = vst [vmem:[%s223 + $0x78] sm:$0xff] %v592
      %625 = vst [vmem:[%s223 + $0x80] sm:$0xff] %v593
      %626 = vst [vmem:[%s223 + $0x88] sm:$0xff] %v594
      %627 = vst [vmem:[%s223 + $0x90] sm:$0xff] %v595
      %628 = vst [vmem:[%s223 + $0x98] sm:$0xff] %v596
      %629 = vst [vmem:[%s223 + $0xa0] sm:$0xff] %v597
      %630 = vst [vmem:[%s223 + $0xa8] sm:$0xff] %v598
      %631 = vst [vmem:[%s223 + $0xb0] sm:$0xff] %v599
      %632 = vst [vmem:[%s223 + $0xb8] sm:$0xff] %v600
      %633 = vst [vmem:[%s223 + $0xc0] sm:$0xff] %v601
      %634 = vst [vmem:[%s223 + $0xc8] sm:$0xff] %v602
      %635 = vst [vmem:[%s223 + $0xd0] sm:$0xff] %v603
      %636 = vst [vmem:[%s223 + $0xd8] sm:$0xff] %v604
      %637 = vst [vmem:[%s223 + $0xe0] sm:$0xff] %v605
      %638 = vst [vmem:[%s223 + $0xe8] sm:$0xff] %v606
      %639 = vst [vmem:[%s223 + $0xf0] sm:$0xff] %v607
      %640 = vst [vmem:[%s223 + $0xf8] sm:$0xff] %v608
      %s641 = smul.u32 32, %s18
      %p642 = scmp.lt.s32.totalorder %s641, 63
      %s643 = scalar_select %p642, %s641, 63
      %p644 = scmp.lt.s32.totalorder %s19, 0
      %s645 = scalar_select %p644, %s19, 0
      %s646 = sadd.s32 %s645, %s643
      %s647 = smul.addr %s646, 8
      %s648 = scalar_lea.vmem %s3, %s647
      // Predicated region
      $region33: #{_lambda_.20} parent=31 // pred_check
        %p649 = pneg %p124
      $region34: #{_lambda_.20} parent=31 // pred_check_branch
        %651 = sbr.rel (%p649) target = $region36
      $region35: #{_lambda_.20} parent=31 // pred_region
        %s652 = smul.u32 32, %s18
      $region36: #{_lambda_.20} parent=31 // pred_fallthru
        _
    $region32: #{_lambda_.20} parent=5 // pred_fallthru
      _
    %p653 = scmp.le.s32.totalorder 2, %s9
    // Predicated region
    $region37: #{_lambda_.20} parent=5 // pred_check
      %p654 = pneg %p653
    $region38: #{_lambda_.20} parent=5 // pred_check_branch
      %656 = sbr.rel (%p654) target = $region40
    $region39: #{_lambda_.20} parent=5 // pred_region
      %s657 = ssub.s32 %s9, 2
      // Predicated region
      $region41: #{_lambda_.20} parent=39 // pred_check
        %p658 = pneg %p130
      $region42: #{_lambda_.20} parent=39 // pred_check_branch
        %660 = sbr.rel (%p658) target = $region44
      $region43: #{_lambda_.20} parent=39 // pred_region
        %s661 = smul.u32 32, %s20
        %p662 = scmp.lt.s32.totalorder %s661, 63
        %s663 = scalar_select %p662, %s661, 63
        %p664 = scmp.lt.s32.totalorder %s21, 0
        %s665 = scalar_select %p664, %s21, 0
        %s666 = sadd.s32 %s665, %s663
        %s667 = smul.addr %s666, 8
        %s668 = scalar_lea.vmem %s3, %s667
      $region44: #{_lambda_.20} parent=39 // pred_fallthru
        _
    $region40: #{_lambda_.20} parent=5 // pred_fallthru
      _
  $region6: #{_lambda_.20} parent=0 // loop_footer
    %s13 = sadd.s32 1, %s9
  $region7: #{_lambda_.20} parent=0 // loop_footer_branch
    %8 = sbr.rel target = $region3
  $region8: #{_lambda_.20} parent=0 // loop_exit
    _

// kernel: _lambda_.21
$region0: #{_lambda_.21}
  #allocation0 [shape = 'u32[]', space=smem, size = 0x4, offset = 0x4, fixed_abs, tag = 'smem constant byte address 0x4 - core index']
  #allocation1 [shape = 'u32[144,128]{1,0:T(1,128)}', space=vmem, size = 0x12000, scoped, tag = 'internal scratch']
  %s0 = inlined_call_operand.vmem [shape: bf16[128,72], index: 0, kind: input, shape index: {}]
  %s1 = inlined_call_operand.vmem [shape: bf16[72,128], index: 1, kind: input, shape index: {}]
  %s2 = inlined_call_operand.vmem [shape: f32[1,128], index: 2, kind: input, shape index: {}]
  %s3 = inlined_call_operand.vmem [shape: f32[128,128], index: 3, kind: output, shape index: {}]
  %s4 = sld [smem:[#allocation0]]
  $region22: #{_lambda_.21} parent=0
    _
  %s6 = ssub.s32 1, %s4
  %s7 = scalar_select 0, %s6, %s4
  // Predicated region
  $region2: #{_lambda_.21} parent=0 // pred_check
    _
  $region3: #{_lambda_.21} parent=0 // pred_check_branch
    %9 = sbr.rel (0) target = $region5
  $region4: #{_lambda_.21} parent=0 // pred_region
    _
  $region5: #{_lambda_.21} parent=0 // pred_fallthru
    _
  // Predicated region
  $region6: #{_lambda_.21} parent=0 // pred_check
    _
  $region7: #{_lambda_.21} parent=0 // pred_check_branch
    %11 = sbr.rel (0) target = $region9
  $region8: #{_lambda_.21} parent=0 // pred_region
    _
  $region9: #{_lambda_.21} parent=0 // pred_fallthru
    _
  // Predicated region
  $region10: #{_lambda_.21} parent=0 // pred_check
    _
  $region11: #{_lambda_.21} parent=0 // pred_check_branch
    %13 = sbr.rel (0) target = $region13
  $region12: #{_lambda_.21} parent=0 // pred_region
    _
  $region13: #{_lambda_.21} parent=0 // pred_fallthru
    _
  %v15 = vld [vmem:[%s0] sm:$0xf]
  %v16 = vld [vmem:[%s0 + $0x4] sm:$0xf]
  %v17 = vld [vmem:[%s0 + $0x8] sm:$0xf]
  %v18 = vld [vmem:[%s0 + $0xc] sm:$0xf]
  %v19 = vld [vmem:[%s0 + $0x10] sm:$0xf]
  %v20 = vld [vmem:[%s0 + $0x14] sm:$0xf]
  %v21 = vld [vmem:[%s0 + $0x18] sm:$0xf]
  %v22 = vld [vmem:[%s0 + $0x1c] sm:$0xf]
  %v23 = vld [vmem:[%s0 + $0x20] sm:$0xf]
  %v24 = vld [vmem:[%s0 + $0x24] sm:$0xf]
  %v25 = vld [vmem:[%s0 + $0x28] sm:$0xf]
  %v26 = vld [vmem:[%s0 + $0x2c] sm:$0xf]
  %v27 = vld [vmem:[%s0 + $0x30] sm:$0xf]
  %v28 = vld [vmem:[%s0 + $0x34] sm:$0xf]
  %v29 = vld [vmem:[%s0 + $0x38] sm:$0xf]
  %v30 = vld [vmem:[%s0 + $0x3c] sm:$0xf]
  %v31 = vld [vmem:[%s1] sm:$0xf]
  %v32 = vld [vmem:[%s1 + $0x4] sm:$0xf]
  %v33 = vld [vmem:[%s1 + $0x8] sm:$0xf]
  %v34 = vld [vmem:[%s1 + $0xc] sm:$0xf]
  %v35 = vld [vmem:[%s1 + $0x10] sm:$0xf]
  %v36 = vld [vmem:[%s1 + $0x14] sm:$0xf]
  %v37 = vld [vmem:[%s1 + $0x18] sm:$0xf]
  %v38 = vld [vmem:[%s1 + $0x1c] sm:$0xf]
  %v39 = vld [vmem:[%s1 + $0x20] sm:$0xf]
  %v40 = vld [vmem:[%s2] sm:$0x1]
  %v42 = vlaneseq
  %v43 = vshrl.u32 %v42, 7
  %v44 = vsub.s32 0, %v43
  %v45 = vrot.slane %v40, %v44
  %v63 = vunpack.c.l.b16 %v15
  %v64 = vunpack.c.l.b16 %v16
  %v65 = vunpack.c.l.b16 %v17
  %v66 = vunpack.c.l.b16 %v18
  %v67 = vunpack.c.l.b16 %v19
  %v68 = vunpack.c.l.b16 %v20
  %v69 = vunpack.c.l.b16 %v21
  %v70 = vunpack.c.l.b16 %v22
  %v71 = vunpack.c.l.b16 %v23
  %v72 = vunpack.c.l.b16 %v24
  %v73 = vunpack.c.l.b16 %v25
  %v74 = vunpack.c.l.b16 %v26
  %v75 = vunpack.c.l.b16 %v27
  %v76 = vunpack.c.l.b16 %v28
  %v77 = vunpack.c.l.b16 %v29
  %v78 = vunpack.c.l.b16 %v30
  %v79 = vpack.c.b16 %v64, %v63
  %v80 = vpack.c.b16 %v66, %v65
  %v81 = vpack.c.b16 %v68, %v67
  %v82 = vpack.c.b16 %v70, %v69
  %v83 = vpack.c.b16 %v72, %v71
  %v84 = vpack.c.b16 %v74, %v73
  %v85 = vpack.c.b16 %v76, %v75
  %v86 = vpack.c.b16 %v78, %v77
  %v96 = vunpack.c.l.b16 %v31
  %v97 = vunpack.c.l.b16 %v32
  %v98 = vunpack.c.l.b16 %v33
  %v99 = vunpack.c.l.b16 %v34
  %v100 = vunpack.c.l.b16 %v35
  %v101 = vunpack.c.l.b16 %v36
  %v102 = vunpack.c.l.b16 %v37
  %v103 = vunpack.c.l.b16 %v38
  %v104 = vunpack.c.l.b16 %v39
  %v105 = vpack.c.b16 %v97, %v96
  %v106 = vpack.c.b16 %v99, %v98
  %v107 = vpack.c.b16 %v101, %v100
  %v108 = vpack.c.b16 %v103, %v102
  %v109 = vpack.c.b16 %v104, %v104
  %vm114 = vcmask 588800
  %v116 = vsel %vm114, %v79, 0
  %v119 = vsel %vm114, %v80, 0
  %v122 = vsel %vm114, %v81, 0
  %v125 = vsel %vm114, %v82, 0
  %v128 = vsel %vm114, %v83, 0
  %v131 = vsel %vm114, %v84, 0
  %v134 = vsel %vm114, %v85, 0
  %v137 = vsel %vm114, %v86, 0
  %vm139 = vcmask 1043456
  %v141 = vsel %vm139, %v109, 0
  %143 = vmatprep.subr.bf16.mxu0 0
  %144 = vmatpush1.bf16.msra.mxu0 %v105
  %145 = vmatprep.subr.bf16.mxu0 0
  %146 = vmatpush1.bf16.msra.mxu0 %v106
  %147 = vmatprep.subr.bf16.mxu0 0
  %148 = vmatpush1.bf16.msra.mxu0 %v107
  %149 = vmatprep.subr.bf16.mxu0 0
  %150 = vmatpush1.bf16.msra.mxu0 %v108
  %151 = vmatprep.subr.bf16.mxu0 0
  %152 = vmatpush1.bf16.msra.mxu0 %v141
  %153 = vmatprep.subr.bf16.mxu0 0
  %154 = vmatpush1.bf16.msra.mxu0 0
  %155 = vmatprep.subr.bf16.mxu0 0
  %156 = vmatpush1.bf16.msra.mxu0 0
  %157 = vmatprep.subr.bf16.mxu0 0
  %158 = vmatpush1.bf16.msra.mxu0 0
  %159 = vmatprep.subr.bf16.mxu0 0
  %160 = vmatpush1.bf16.msra.mxu0 0
  %161 = vmatprep.subr.bf16.mxu0 0
  %162 = vmatpush1.bf16.msra.mxu0 0
  %163 = vmatprep.subr.bf16.mxu0 0
  %164 = vmatpush1.bf16.msra.mxu0 0
  %165 = vmatprep.subr.bf16.mxu0 0
  %166 = vmatpush1.bf16.msra.mxu0 0
  %167 = vmatprep.subr.bf16.mxu0 0
  %168 = vmatpush1.bf16.msra.mxu0 0
  %169 = vmatprep.subr.bf16.mxu0 0
  %170 = vmatpush1.bf16.msra.mxu0 0
  %171 = vmatprep.subr.bf16.mxu0 0
  %172 = vmatpush1.bf16.msra.mxu0 0
  %173 = vmatprep.subr.bf16.mxu0 0
  %174 = vmatpush1.bf16.msra.mxu0 0
  %175 = vmatprep.mubr.bf16.mxu0 0
  %176 = vmatmul.mubr.bf16.gmra.mrb[0].mxu0 %v116
  %v177 = vpop.f32.mrb[0].mxu0
  %v178 = vadd.f32 %v45, %v177
  %v179 = vpop.f32.mrb[0].mxu0
  %v180 = vpop.f32.mrb[0].mxu0
  %v181 = vadd.f32 %v45, %v180
  %v182 = vpop.f32.mrb[0].mxu0
  %183 = vmatprep.mubr.bf16.mxu0 0
  %184 = vmatmul.mubr.bf16.gmra.mrb[0].mxu0 %v119
  %v185 = vpop.f32.mrb[0].mxu0
  %v186 = vadd.f32 %v45, %v185
  %v187 = vpop.f32.mrb[0].mxu0
  %v188 = vpop.f32.mrb[0].mxu0
  %v189 = vadd.f32 %v45, %v188
  %v190 = vpop.f32.mrb[0].mxu0
  %191 = vmatprep.mubr.bf16.mxu0 0
  %192 = vmatmul.mubr.bf16.gmra.mrb[0].mxu0 %v122
  %v193 = vpop.f32.mrb[0].mxu0
  %v194 = vadd.f32 %v45, %v193
  %v195 = vpop.f32.mrb[0].mxu0
  %v196 = vpop.f32.mrb[0].mxu0
  %v197 = vadd.f32 %v45, %v196
  %v198 = vpop.f32.mrb[0].mxu0
  %199 = vmatprep.mubr.bf16.mxu0 0
  %200 = vmatmul.mubr.bf16.gmra.mrb[0].mxu0 %v125
  %v201 = vpop.f32.mrb[0].mxu0
  %v202 = vadd.f32 %v45, %v201
  %v203 = vpop.f32.mrb[0].mxu0
  %v204 = vpop.f32.mrb[0].mxu0
  %v205 = vadd.f32 %v45, %v204
  %v206 = vpop.f32.mrb[0].mxu0
  %207 = vmatprep.mubr.bf16.mxu0 0
  %208 = vmatmul.mubr.bf16.gmra.mrb[0].mxu0 %v128
  %v209 = vpop.f32.mrb[0].mxu0
  %v210 = vadd.f32 %v45, %v209
  %v211 = vpop.f32.mrb[0].mxu0
  %v212 = vpop.f32.mrb[0].mxu0
  %v213 = vadd.f32 %v45, %v212
  %v214 = vpop.f32.mrb[0].mxu0
  %215 = vmatprep.mubr.bf16.mxu0 0
  %216 = vmatmul.mubr.bf16.gmra.mrb[0].mxu0 %v131
  %v217 = vpop.f32.mrb[0].mxu0
  %v218 = vadd.f32 %v45, %v217
  %v219 = vpop.f32.mrb[0].mxu0
  %v220 = vpop.f32.mrb[0].mxu0
  %v221 = vadd.f32 %v45, %v220
  %v222 = vpop.f32.mrb[0].mxu0
  %223 = vmatprep.mubr.bf16.mxu0 0
  %224 = vmatmul.mubr.bf16.gmra.mrb[0].mxu0 %v134
  %v225 = vpop.f32.mrb[0].mxu0
  %v226 = vadd.f32 %v45, %v225
  %v227 = vpop.f32.mrb[0].mxu0
  %v228 = vpop.f32.mrb[0].mxu0
  %v229 = vadd.f32 %v45, %v228
  %v230 = vpop.f32.mrb[0].mxu0
  %231 = vmatprep.mubr.bf16.mxu0 0
  %232 = vmatmul.mubr.bf16.gmra.mrb[0].mxu0 %v137
  %v233 = vpop.f32.mrb[0].mxu0
  %v234 = vadd.f32 %v45, %v233
  %v235 = vpop.f32.mrb[0].mxu0
  %v236 = vpop.f32.mrb[0].mxu0
  %v237 = vadd.f32 %v45, %v236
  %v238 = vpop.f32.mrb[0].mxu0
  %239 = vdwg.mxu0
  %v240 = vmax.f32 %v178, 0.0
  %v241 = vmax.f32 %v181, 0.0
  %v242 = vmax.f32 %v186, 0.0
  %v243 = vmax.f32 %v189, 0.0
  %v244 = vmax.f32 %v194, 0.0
  %v245 = vmax.f32 %v197, 0.0
  %v246 = vmax.f32 %v202, 0.0
  %v247 = vmax.f32 %v205, 0.0
  %v248 = vmax.f32 %v210, 0.0
  %v249 = vmax.f32 %v213, 0.0
  %v250 = vmax.f32 %v218, 0.0
  %v251 = vmax.f32 %v221, 0.0
  %v252 = vmax.f32 %v226, 0.0
  %v253 = vmax.f32 %v229, 0.0
  %v254 = vmax.f32 %v234, 0.0
  %v255 = vmax.f32 %v237, 0.0
  %256 = vst [vmem:[%s3] sm:$0xff] %v240
  %257 = vst [vmem:[%s3 + $0x8] sm:$0xff] %v241
  %258 = vst [vmem:[%s3 + $0x10] sm:$0xff] %v242
  %259 = vst [vmem:[%s3 + $0x18] sm:$0xff] %v243
  %260 = vst [vmem:[%s3 + $0x20] sm:$0xff] %v244
  %261 = vst [vmem:[%s3 + $0x28] sm:$0xff] %v245
  %262 = vst [vmem:[%s3 + $0x30] sm:$0xff] %v246
  %263 = vst [vmem:[%s3 + $0x38] sm:$0xff] %v247
  %264 = vst [vmem:[%s3 + $0x40] sm:$0xff] %v248
  %265 = vst [vmem:[%s3 + $0x48] sm:$0xff] %v249
  %266 = vst [vmem:[%s3 + $0x50] sm:$0xff] %v250
  %267 = vst [vmem:[%s3 + $0x58] sm:$0xff] %v251
  %268 = vst [vmem:[%s3 + $0x60] sm:$0xff] %v252
  %269 = vst [vmem:[%s3 + $0x68] sm:$0xff] %v253
  %270 = vst [vmem:[%s3 + $0x70] sm:$0xff] %v254
  %271 = vst [vmem:[%s3 + $0x78] sm:$0xff] %v255
  // Predicated region
  $region14: #{_lambda_.21} parent=0 // pred_check
    _
  $region15: #{_lambda_.21} parent=0 // pred_check_branch
    %273 = sbr.rel (0) target = $region17
  $region16: #{_lambda_.21} parent=0 // pred_region
    _
  $region17: #{_lambda_.21} parent=0 // pred_fallthru
    _
  // Predicated region
  $region18: #{_lambda_.21} parent=0 // pred_check
    _
  $region19: #{_lambda_.21} parent=0 // pred_check_branch
    %275 = sbr.rel (0) target = $region21
  $region20: #{_lambda_.21} parent=0 // pred_region
    _
  $region21: #{_lambda_.21} parent=0 // pred_fallthru
    _

// kernel: _lambda_.22
$region0: #{_lambda_.22}
  #allocation0 [shape = 'u32[]', space=smem, size = 0x4, offset = 0x4, fixed_abs, tag = 'smem constant byte address 0x4 - core index']
  #allocation1 [shape = 'u32[144,128]{1,0:T(1,128)}', space=vmem, size = 0x12000, scoped, tag = 'internal scratch']
  %s0 = inlined_call_operand.vmem [shape: bf16[128,16], index: 0, kind: input, shape index: {}]
  %s1 = inlined_call_operand.vmem [shape: bf16[16,128], index: 1, kind: input, shape index: {}]
  %s2 = inlined_call_operand.vmem [shape: f32[1,128], index: 2, kind: input, shape index: {}]
  %s3 = inlined_call_operand.vmem [shape: f32[128,128], index: 3, kind: output, shape index: {}]
  %s4 = sld [smem:[#allocation0]]
  $region22: #{_lambda_.22} parent=0
    _
  %s6 = ssub.s32 1, %s4
  %s7 = scalar_select 0, %s6, %s4
  // Predicated region
  $region2: #{_lambda_.22} parent=0 // pred_check
    _
  $region3: #{_lambda_.22} parent=0 // pred_check_branch
    %9 = sbr.rel (0) target = $region5
  $region4: #{_lambda_.22} parent=0 // pred_region
    _
  $region5: #{_lambda_.22} parent=0 // pred_fallthru
    _
  // Predicated region
  $region6: #{_lambda_.22} parent=0 // pred_check
    _
  $region7: #{_lambda_.22} parent=0 // pred_check_branch
    %11 = sbr.rel (0) target = $region9
  $region8: #{_lambda_.22} parent=0 // pred_region
    _
  $region9: #{_lambda_.22} parent=0 // pred_fallthru
    _
  // Predicated region
  $region10: #{_lambda_.22} parent=0 // pred_check
    _
  $region11: #{_lambda_.22} parent=0 // pred_check_branch
    %13 = sbr.rel (0) target = $region13
  $region12: #{_lambda_.22} parent=0 // pred_region
    _
  $region13: #{_lambda_.22} parent=0 // pred_fallthru
    _
  %v15 = vld [vmem:[%s0] sm:$0xf]
  %v16 = vld [vmem:[%s0 + $0x4] sm:$0xf]
  %v17 = vld [vmem:[%s0 + $0x8] sm:$0xf]
  %v18 = vld [vmem:[%s0 + $0xc] sm:$0xf]
  %v19 = vld [vmem:[%s0 + $0x10] sm:$0xf]
  %v20 = vld [vmem:[%s0 + $0x14] sm:$0xf]
  %v21 = vld [vmem:[%s0 + $0x18] sm:$0xf]
  %v22 = vld [vmem:[%s0 + $0x1c] sm:$0xf]
  %v23 = vld [vmem:[%s0 + $0x20] sm:$0xf]
  %v24 = vld [vmem:[%s0 + $0x24] sm:$0xf]
  %v25 = vld [vmem:[%s0 + $0x28] sm:$0xf]
  %v26 = vld [vmem:[%s0 + $0x2c] sm:$0xf]
  %v27 = vld [vmem:[%s0 + $0x30] sm:$0xf]
  %v28 = vld [vmem:[%s0 + $0x34] sm:$0xf]
  %v29 = vld [vmem:[%s0 + $0x38] sm:$0xf]
  %v30 = vld [vmem:[%s0 + $0x3c] sm:$0xf]
  %v31 = vld [vmem:[%s1] sm:$0xf]
  %v32 = vld [vmem:[%s1 + $0x4] sm:$0xf]
  %v33 = vld [vmem:[%s2] sm:$0x1]
  %v35 = vlaneseq
  %v36 = vshrl.u32 %v35, 7
  %v37 = vsub.s32 0, %v36
  %v38 = vrot.slane %v33, %v37
  %v56 = vunpack.c.l.b16 %v15
  %v57 = vunpack.c.l.b16 %v16
  %v58 = vunpack.c.l.b16 %v17
  %v59 = vunpack.c.l.b16 %v18
  %v60 = vunpack.c.l.b16 %v19
  %v61 = vunpack.c.l.b16 %v20
  %v62 = vunpack.c.l.b16 %v21
  %v63 = vunpack.c.l.b16 %v22
  %v64 = vunpack.c.l.b16 %v23
  %v65 = vunpack.c.l.b16 %v24
  %v66 = vunpack.c.l.b16 %v25
  %v67 = vunpack.c.l.b16 %v26
  %v68 = vunpack.c.l.b16 %v27
  %v69 = vunpack.c.l.b16 %v28
  %v70 = vunpack.c.l.b16 %v29
  %v71 = vunpack.c.l.b16 %v30
  %v72 = vpack.c.b16 %v57, %v56
  %v73 = vpack.c.b16 %v59, %v58
  %v74 = vpack.c.b16 %v61, %v60
  %v75 = vpack.c.b16 %v63, %v62
  %v76 = vpack.c.b16 %v65, %v64
  %v77 = vpack.c.b16 %v67, %v66
  %v78 = vpack.c.b16 %v69, %v68
  %v79 = vpack.c.b16 %v71, %v70
  %v82 = vunpack.c.l.b16 %v31
  %v83 = vunpack.c.l.b16 %v32
  %v84 = vpack.c.b16 %v83, %v82
  %vm86 = vcmask 130048
  %v88 = vsel %vm86, %v72, 0
  %v91 = vsel %vm86, %v73, 0
  %v94 = vsel %vm86, %v74, 0
  %v97 = vsel %vm86, %v75, 0
  %v100 = vsel %vm86, %v76, 0
  %v103 = vsel %vm86, %v77, 0
  %v106 = vsel %vm86, %v78, 0
  %v109 = vsel %vm86, %v79, 0
  %111 = vmatprep.subr.bf16.mxu0 0
  %112 = vmatpush1.bf16.msra.mxu0 %v84
  %113 = vmatprep.subr.bf16.mxu0 0
  %114 = vmatpush1.bf16.msra.mxu0 0
  %115 = vmatprep.subr.bf16.mxu0 0
  %116 = vmatpush1.bf16.msra.mxu0 0
  %117 = vmatprep.subr.bf16.mxu0 0
  %118 = vmatpush1.bf16.msra.mxu0 0
  %119 = vmatprep.subr.bf16.mxu0 0
  %120 = vmatpush1.bf16.msra.mxu0 0
  %121 = vmatprep.subr.bf16.mxu0 0
  %122 = vmatpush1.bf16.msra.mxu0 0
  %123 = vmatprep.subr.bf16.mxu0 0
  %124 = vmatpush1.bf16.msra.mxu0 0
  %125 = vmatprep.subr.bf16.mxu0 0
  %126 = vmatpush1.bf16.msra.mxu0 0
  %127 = vmatprep.subr.bf16.mxu0 0
  %128 = vmatpush1.bf16.msra.mxu0 0
  %129 = vmatprep.subr.bf16.mxu0 0
  %130 = vmatpush1.bf16.msra.mxu0 0
  %131 = vmatprep.subr.bf16.mxu0 0
  %132 = vmatpush1.bf16.msra.mxu0 0
  %133 = vmatprep.subr.bf16.mxu0 0
  %134 = vmatpush1.bf16.msra.mxu0 0
  %135 = vmatprep.subr.bf16.mxu0 0
  %136 = vmatpush1.bf16.msra.mxu0 0
  %137 = vmatprep.subr.bf16.mxu0 0
  %138 = vmatpush1.bf16.msra.mxu0 0
  %139 = vmatprep.subr.bf16.mxu0 0
  %140 = vmatpush1.bf16.msra.mxu0 0
  %141 = vmatprep.subr.bf16.mxu0 0
  %142 = vmatpush1.bf16.msra.mxu0 0
  %143 = vmatprep.mubr.bf16.mxu0 0
  %144 = vmatmul.mubr.bf16.gmra.mrb[0].mxu0 %v88
  %v145 = vpop.f32.mrb[0].mxu0
  %v146 = vadd.f32 %v38, %v145
  %v147 = vpop.f32.mrb[0].mxu0
  %v148 = vpop.f32.mrb[0].mxu0
  %v149 = vadd.f32 %v38, %v148
  %v150 = vpop.f32.mrb[0].mxu0
  %151 = vmatprep.mubr.bf16.mxu0 0
  %152 = vmatmul.mubr.bf16.gmra.mrb[0].mxu0 %v91
  %v153 = vpop.f32.mrb[0].mxu0
  %v154 = vadd.f32 %v38, %v153
  %v155 = vpop.f32.mrb[0].mxu0
  %v156 = vpop.f32.mrb[0].mxu0
  %v157 = vadd.f32 %v38, %v156
  %v158 = vpop.f32.mrb[0].mxu0
  %159 = vmatprep.mubr.bf16.mxu0 0
  %160 = vmatmul.mubr.bf16.gmra.mrb[0].mxu0 %v94
  %v161 = vpop.f32.mrb[0].mxu0
  %v162 = vadd.f32 %v38, %v161
  %v163 = vpop.f32.mrb[0].mxu0
  %v164 = vpop.f32.mrb[0].mxu0
  %v165 = vadd.f32 %v38, %v164
  %v166 = vpop.f32.mrb[0].mxu0
  %167 = vmatprep.mubr.bf16.mxu0 0
  %168 = vmatmul.mubr.bf16.gmra.mrb[0].mxu0 %v97
  %v169 = vpop.f32.mrb[0].mxu0
  %v170 = vadd.f32 %v38, %v169
  %v171 = vpop.f32.mrb[0].mxu0
  %v172 = vpop.f32.mrb[0].mxu0
  %v173 = vadd.f32 %v38, %v172
  %v174 = vpop.f32.mrb[0].mxu0
  %175 = vmatprep.mubr.bf16.mxu0 0
  %176 = vmatmul.mubr.bf16.gmra.mrb[0].mxu0 %v100
  %v177 = vpop.f32.mrb[0].mxu0
  %v178 = vadd.f32 %v38, %v177
  %v179 = vpop.f32.mrb[0].mxu0
  %v180 = vpop.f32.mrb[0].mxu0
  %v181 = vadd.f32 %v38, %v180
  %v182 = vpop.f32.mrb[0].mxu0
  %183 = vmatprep.mubr.bf16.mxu0 0
  %184 = vmatmul.mubr.bf16.gmra.mrb[0].mxu0 %v103
  %v185 = vpop.f32.mrb[0].mxu0
  %v186 = vadd.f32 %v38, %v185
  %v187 = vpop.f32.mrb[0].mxu0
  %v188 = vpop.f32.mrb[0].mxu0
  %v189 = vadd.f32 %v38, %v188
  %v190 = vpop.f32.mrb[0].mxu0
  %191 = vmatprep.mubr.bf16.mxu0 0
  %192 = vmatmul.mubr.bf16.gmra.mrb[0].mxu0 %v106
  %v193 = vpop.f32.mrb[0].mxu0
  %v194 = vadd.f32 %v38, %v193
  %v195 = vpop.f32.mrb[0].mxu0
  %v196 = vpop.f32.mrb[0].mxu0
  %v197 = vadd.f32 %v38, %v196
  %v198 = vpop.f32.mrb[0].mxu0
  %199 = vmatprep.mubr.bf16.mxu0 0
  %200 = vmatmul.mubr.bf16.gmra.mrb[0].mxu0 %v109
  %v201 = vpop.f32.mrb[0].mxu0
  %v202 = vadd.f32 %v38, %v201
  %v203 = vpop.f32.mrb[0].mxu0
  %v204 = vpop.f32.mrb[0].mxu0
  %v205 = vadd.f32 %v38, %v204
  %v206 = vpop.f32.mrb[0].mxu0
  %207 = vdwg.mxu0
  %v208 = vmax.f32 %v146, 0.0
  %v209 = vmax.f32 %v149, 0.0
  %v210 = vmax.f32 %v154, 0.0
  %v211 = vmax.f32 %v157, 0.0
  %v212 = vmax.f32 %v162, 0.0
  %v213 = vmax.f32 %v165, 0.0
  %v214 = vmax.f32 %v170, 0.0
  %v215 = vmax.f32 %v173, 0.0
  %v216 = vmax.f32 %v178, 0.0
  %v217 = vmax.f32 %v181, 0.0
  %v218 = vmax.f32 %v186, 0.0
  %v219 = vmax.f32 %v189, 0.0
  %v220 = vmax.f32 %v194, 0.0
  %v221 = vmax.f32 %v197, 0.0
  %v222 = vmax.f32 %v202, 0.0
  %v223 = vmax.f32 %v205, 0.0
  %224 = vst [vmem:[%s3] sm:$0xff] %v208
  %225 = vst [vmem:[%s3 + $0x8] sm:$0xff] %v209
  %226 = vst [vmem:[%s3 + $0x10] sm:$0xff] %v210
  %227 = vst [vmem:[%s3 + $0x18] sm:$0xff] %v211
  %228 = vst [vmem:[%s3 + $0x20] sm:$0xff] %v212
  %229 = vst [vmem:[%s3 + $0x28] sm:$0xff] %v213
  %230 = vst [vmem:[%s3 + $0x30] sm:$0xff] %v214
  %231 = vst [vmem:[%s3 + $0x38] sm:$0xff] %v215
  %232 = vst [vmem:[%s3 + $0x40] sm:$0xff] %v216
  %233 = vst [vmem:[%s3 + $0x48] sm:$0xff] %v217
  %234 = vst [vmem:[%s3 + $0x50] sm:$0xff] %v218
  %235 = vst [vmem:[%s3 + $0x58] sm:$0xff] %v219
  %236 = vst [vmem:[%s3 + $0x60] sm:$0xff] %v220
  %237 = vst [vmem:[%s3 + $0x68] sm:$0xff] %v221
  %238 = vst [vmem:[%s3 + $0x70] sm:$0xff] %v222
  %239 = vst [vmem:[%s3 + $0x78] sm:$0xff] %v223
  // Predicated region
  $region14: #{_lambda_.22} parent=0 // pred_check
    _
  $region15: #{_lambda_.22} parent=0 // pred_check_branch
    %241 = sbr.rel (0) target = $region17
  $region16: #{_lambda_.22} parent=0 // pred_region
    _
  $region17: #{_lambda_.22} parent=0 // pred_fallthru
    _
  // Predicated region
  $region18: #{_lambda_.22} parent=0 // pred_check
    _
  $region19: #{_lambda_.22} parent=0 // pred_check_branch
    %243 = sbr.rel (0) target = $region21
  $region20: #{_lambda_.22} parent=0 // pred_region
    _
  $region21: #{_lambda_.22} parent=0 // pred_fallthru
    _

// kernel: _lambda_.24
$region0: #{_lambda_.24}
  #allocation0 [shape = 'u32[]', space=smem, size = 0x4, offset = 0x4, fixed_abs, tag = 'smem constant byte address 0x4 - core index']
  #allocation1 [shape = 'u32[144,128]{1,0:T(1,128)}', space=vmem, size = 0x12000, scoped, tag = 'internal scratch']
  %s0 = inlined_call_operand.vmem [shape: f32[9,32,16], index: 0, kind: input, shape index: {}]
  %s1 = inlined_call_operand.vmem [shape: f32[9,16], index: 1, kind: input, shape index: {}]
  %s2 = inlined_call_operand.vmem [shape: f32[1,16], index: 2, kind: input, shape index: {}]
  %s3 = inlined_call_operand.vmem [shape: f32[32,16], index: 3, kind: output, shape index: {}]
  %s4 = sld [smem:[#allocation0]]
  $region22: #{_lambda_.24} parent=0
    _
  %s6 = ssub.s32 1, %s4
  %s7 = scalar_select 0, %s6, %s4
  // Predicated region
  $region2: #{_lambda_.24} parent=0 // pred_check
    _
  $region3: #{_lambda_.24} parent=0 // pred_check_branch
    %9 = sbr.rel (0) target = $region5
  $region4: #{_lambda_.24} parent=0 // pred_region
    _
  $region5: #{_lambda_.24} parent=0 // pred_fallthru
    _
  // Predicated region
  $region6: #{_lambda_.24} parent=0 // pred_check
    _
  $region7: #{_lambda_.24} parent=0 // pred_check_branch
    %11 = sbr.rel (0) target = $region9
  $region8: #{_lambda_.24} parent=0 // pred_region
    _
  $region9: #{_lambda_.24} parent=0 // pred_fallthru
    _
  // Predicated region
  $region10: #{_lambda_.24} parent=0 // pred_check
    _
  $region11: #{_lambda_.24} parent=0 // pred_check_branch
    %13 = sbr.rel (0) target = $region13
  $region12: #{_lambda_.24} parent=0 // pred_region
    _
  $region13: #{_lambda_.24} parent=0 // pred_fallthru
    _
  %v14 = vld [vmem:[%s0] sm:$0xff]
  %v15 = vld [vmem:[%s0 + $0x8] sm:$0xff]
  %v16 = vld [vmem:[%s0 + $0x10] sm:$0xff]
  %v17 = vld [vmem:[%s0 + $0x18] sm:$0xff]
  %v18 = vld [vmem:[%s1] sm:$0x1]
  %v19 = vlaneseq
  %v20 = vshrl.u32 %v19, 7
  %v21 = vsub.s32 0, %v20
  %v22 = vrot.slane %v18, %v21
  %v23 = vmul.f32 %v14, %v22
  %v24 = vmul.f32 %v15, %v22
  %v25 = vmul.f32 %v16, %v22
  %v26 = vmul.f32 %v17, %v22
  %s27 = scalar_lea.vmem %s0, 32
  %v28 = vld [vmem:[%s27] sm:$0xff]
  %v29 = vld [vmem:[%s27 + $0x8] sm:$0xff]
  %v30 = vld [vmem:[%s27 + $0x10] sm:$0xff]
  %v31 = vld [vmem:[%s27 + $0x18] sm:$0xff]
  %v32 = vld [vmem:[%s1 + $0x1] sm:$0x1]
  %v33 = vlaneseq
  %v34 = vshrl.u32 %v33, 7
  %v35 = vsub.s32 0, %v34
  %v36 = vrot.slane %v32, %v35
  %v37 = vmul.f32 %v28, %v36
  %v38 = vmul.f32 %v29, %v36
  %v39 = vmul.f32 %v30, %v36
  %v40 = vmul.f32 %v31, %v36
  %v41 = vadd.f32 %v23, %v37
  %v42 = vadd.f32 %v24, %v38
  %v43 = vadd.f32 %v25, %v39
  %v44 = vadd.f32 %v26, %v40
  %s45 = scalar_lea.vmem %s0, 64
  %v46 = vld [vmem:[%s45] sm:$0xff]
  %v47 = vld [vmem:[%s45 + $0x8] sm:$0xff]
  %v48 = vld [vmem:[%s45 + $0x10] sm:$0xff]
  %v49 = vld [vmem:[%s45 + $0x18] sm:$0xff]
  %v50 = vld [vmem:[%s1 + $0x2] sm:$0x1]
  %v51 = vlaneseq
  %v52 = vshrl.u32 %v51, 7
  %v53 = vsub.s32 0, %v52
  %v54 = vrot.slane %v50, %v53
  %v55 = vmul.f32 %v46, %v54
  %v56 = vmul.f32 %v47, %v54
  %v57 = vmul.f32 %v48, %v54
  %v58 = vmul.f32 %v49, %v54
  %v59 = vadd.f32 %v41, %v55
  %v60 = vadd.f32 %v42, %v56
  %v61 = vadd.f32 %v43, %v57
  %v62 = vadd.f32 %v44, %v58
  %s63 = scalar_lea.vmem %s0, 96
  %v64 = vld [vmem:[%s63] sm:$0xff]
  %v65 = vld [vmem:[%s63 + $0x8] sm:$0xff]
  %v66 = vld [vmem:[%s63 + $0x10] sm:$0xff]
  %v67 = vld [vmem:[%s63 + $0x18] sm:$0xff]
  %v68 = vld [vmem:[%s1 + $0x3] sm:$0x1]
  %v69 = vlaneseq
  %v70 = vshrl.u32 %v69, 7
  %v71 = vsub.s32 0, %v70
  %v72 = vrot.slane %v68, %v71
  %v73 = vmul.f32 %v64, %v72
  %v74 = vmul.f32 %v65, %v72
  %v75 = vmul.f32 %v66, %v72
  %v76 = vmul.f32 %v67, %v72
  %v77 = vadd.f32 %v59, %v73
  %v78 = vadd.f32 %v60, %v74
  %v79 = vadd.f32 %v61, %v75
  %v80 = vadd.f32 %v62, %v76
  %s81 = scalar_lea.vmem %s0, 128
  %v82 = vld [vmem:[%s81] sm:$0xff]
  %v83 = vld [vmem:[%s81 + $0x8] sm:$0xff]
  %v84 = vld [vmem:[%s81 + $0x10] sm:$0xff]
  %v85 = vld [vmem:[%s81 + $0x18] sm:$0xff]
  %v86 = vld [vmem:[%s1 + $0x4] sm:$0x1]
  %v87 = vlaneseq
  %v88 = vshrl.u32 %v87, 7
  %v89 = vsub.s32 0, %v88
  %v90 = vrot.slane %v86, %v89
  %v91 = vmul.f32 %v82, %v90
  %v92 = vmul.f32 %v83, %v90
  %v93 = vmul.f32 %v84, %v90
  %v94 = vmul.f32 %v85, %v90
  %v95 = vadd.f32 %v77, %v91
  %v96 = vadd.f32 %v78, %v92
  %v97 = vadd.f32 %v79, %v93
  %v98 = vadd.f32 %v80, %v94
  %s99 = scalar_lea.vmem %s0, 160
  %v100 = vld [vmem:[%s99] sm:$0xff]
  %v101 = vld [vmem:[%s99 + $0x8] sm:$0xff]
  %v102 = vld [vmem:[%s99 + $0x10] sm:$0xff]
  %v103 = vld [vmem:[%s99 + $0x18] sm:$0xff]
  %v104 = vld [vmem:[%s1 + $0x5] sm:$0x1]
  %v105 = vlaneseq
  %v106 = vshrl.u32 %v105, 7
  %v107 = vsub.s32 0, %v106
  %v108 = vrot.slane %v104, %v107
  %v109 = vmul.f32 %v100, %v108
  %v110 = vmul.f32 %v101, %v108
  %v111 = vmul.f32 %v102, %v108
  %v112 = vmul.f32 %v103, %v108
  %v113 = vadd.f32 %v95, %v109
  %v114 = vadd.f32 %v96, %v110
  %v115 = vadd.f32 %v97, %v111
  %v116 = vadd.f32 %v98, %v112
  %s117 = scalar_lea.vmem %s0, 192
  %v118 = vld [vmem:[%s117] sm:$0xff]
  %v119 = vld [vmem:[%s117 + $0x8] sm:$0xff]
  %v120 = vld [vmem:[%s117 + $0x10] sm:$0xff]
  %v121 = vld [vmem:[%s117 + $0x18] sm:$0xff]
  %v122 = vld [vmem:[%s1 + $0x6] sm:$0x1]
  %v123 = vlaneseq
  %v124 = vshrl.u32 %v123, 7
  %v125 = vsub.s32 0, %v124
  %v126 = vrot.slane %v122, %v125
  %v127 = vmul.f32 %v118, %v126
  %v128 = vmul.f32 %v119, %v126
  %v129 = vmul.f32 %v120, %v126
  %v130 = vmul.f32 %v121, %v126
  %v131 = vadd.f32 %v113, %v127
  %v132 = vadd.f32 %v114, %v128
  %v133 = vadd.f32 %v115, %v129
  %v134 = vadd.f32 %v116, %v130
  %s135 = scalar_lea.vmem %s0, 224
  %v136 = vld [vmem:[%s135] sm:$0xff]
  %v137 = vld [vmem:[%s135 + $0x8] sm:$0xff]
  %v138 = vld [vmem:[%s135 + $0x10] sm:$0xff]
  %v139 = vld [vmem:[%s135 + $0x18] sm:$0xff]
  %v140 = vld [vmem:[%s1 + $0x7] sm:$0x1]
  %v141 = vlaneseq
  %v142 = vshrl.u32 %v141, 7
  %v143 = vsub.s32 0, %v142
  %v144 = vrot.slane %v140, %v143
  %v145 = vmul.f32 %v136, %v144
  %v146 = vmul.f32 %v137, %v144
  %v147 = vmul.f32 %v138, %v144
  %v148 = vmul.f32 %v139, %v144
  %v149 = vadd.f32 %v131, %v145
  %v150 = vadd.f32 %v132, %v146
  %v151 = vadd.f32 %v133, %v147
  %v152 = vadd.f32 %v134, %v148
  %s153 = scalar_lea.vmem %s0, 256
  %v154 = vld [vmem:[%s153] sm:$0xff]
  %v155 = vld [vmem:[%s153 + $0x8] sm:$0xff]
  %v156 = vld [vmem:[%s153 + $0x10] sm:$0xff]
  %v157 = vld [vmem:[%s153 + $0x18] sm:$0xff]
  %v158 = vld [vmem:[%s1 + $0x8] sm:$0x1]
  %v159 = vlaneseq
  %v160 = vshrl.u32 %v159, 7
  %v161 = vsub.s32 0, %v160
  %v162 = vrot.slane %v158, %v161
  %v163 = vmul.f32 %v154, %v162
  %v164 = vmul.f32 %v155, %v162
  %v165 = vmul.f32 %v156, %v162
  %v166 = vmul.f32 %v157, %v162
  %v167 = vadd.f32 %v149, %v163
  %v168 = vadd.f32 %v150, %v164
  %v169 = vadd.f32 %v151, %v165
  %v170 = vadd.f32 %v152, %v166
  %v171 = vld [vmem:[%s2] sm:$0x1]
  %v173 = vlaneseq
  %v174 = vshrl.u32 %v173, 7
  %v175 = vsub.s32 0, %v174
  %v176 = vrot.slane %v171, %v175
  %v178 = vadd.f32 %v167, %v176
  %v179 = vadd.f32 %v168, %v176
  %v180 = vadd.f32 %v169, %v176
  %v181 = vadd.f32 %v170, %v176
  %vm182 = vcmask 130048
  %183 = vst.msk [vmem:[%s3] sm:$0xff] %vm182, %v178
  %184 = vst.msk [vmem:[%s3 + $0x8] sm:$0xff] %vm182, %v179
  %185 = vst.msk [vmem:[%s3 + $0x10] sm:$0xff] %vm182, %v180
  %186 = vst.msk [vmem:[%s3 + $0x18] sm:$0xff] %vm182, %v181
  // Predicated region
  $region14: #{_lambda_.24} parent=0 // pred_check
    _
  $region15: #{_lambda_.24} parent=0 // pred_check_branch
    %188 = sbr.rel (0) target = $region17
  $region16: #{_lambda_.24} parent=0 // pred_region
    _
  $region17: #{_lambda_.24} parent=0 // pred_fallthru
    _
  // Predicated region
  $region18: #{_lambda_.24} parent=0 // pred_check
    _
  $region19: #{_lambda_.24} parent=0 // pred_check_branch
    %190 = sbr.rel (0) target = $region21
  $region20: #{_lambda_.24} parent=0 // pred_region
    _
  $region21: #{_lambda_.24} parent=0 // pred_fallthru
    _

// kernel: _lambda_.25
$region0: #{_lambda_.25}
  #allocation0 [shape = 'u32[]', space=smem, size = 0x4, offset = 0x4, fixed_abs, tag = 'smem constant byte address 0x4 - core index']
  #allocation1 [shape = 'u32[144,128]{1,0:T(1,128)}', space=vmem, size = 0x12000, scoped, tag = 'internal scratch']
  %s0 = inlined_call_operand.vmem [shape: bf16[32,144], index: 0, kind: input, shape index: {}]
  %s1 = inlined_call_operand.vmem [shape: bf16[144,128], index: 1, kind: input, shape index: {}]
  %s2 = inlined_call_operand.vmem [shape: f32[1,128], index: 2, kind: input, shape index: {}]
  %s3 = inlined_call_operand.vmem [shape: f32[32,128], index: 3, kind: output, shape index: {}]
  %s4 = sld [smem:[#allocation0]]
  $region22: #{_lambda_.25} parent=0
    _
  %s6 = ssub.s32 1, %s4
  %s7 = scalar_select 0, %s6, %s4
  // Predicated region
  $region2: #{_lambda_.25} parent=0 // pred_check
    _
  $region3: #{_lambda_.25} parent=0 // pred_check_branch
    %9 = sbr.rel (0) target = $region5
  $region4: #{_lambda_.25} parent=0 // pred_region
    _
  $region5: #{_lambda_.25} parent=0 // pred_fallthru
    _
  // Predicated region
  $region6: #{_lambda_.25} parent=0 // pred_check
    _
  $region7: #{_lambda_.25} parent=0 // pred_check_branch
    %11 = sbr.rel (0) target = $region9
  $region8: #{_lambda_.25} parent=0 // pred_region
    _
  $region9: #{_lambda_.25} parent=0 // pred_fallthru
    _
  // Predicated region
  $region10: #{_lambda_.25} parent=0 // pred_check
    _
  $region11: #{_lambda_.25} parent=0 // pred_check_branch
    %13 = sbr.rel (0) target = $region13
  $region12: #{_lambda_.25} parent=0 // pred_region
    _
  $region13: #{_lambda_.25} parent=0 // pred_fallthru
    _
  %v15 = vld [vmem:[%s0] sm:$0xff]
  %v16 = vld [vmem:[%s0 + $0x8] sm:$0xff]
  %v17 = vld [vmem:[%s0 + $0x10] sm:$0xff]
  %v18 = vld [vmem:[%s0 + $0x18] sm:$0xff]
  %v19 = vld [vmem:[%s1] sm:$0xf]
  %v20 = vld [vmem:[%s1 + $0x4] sm:$0xf]
  %v21 = vld [vmem:[%s1 + $0x8] sm:$0xf]
  %v22 = vld [vmem:[%s1 + $0xc] sm:$0xf]
  %v23 = vld [vmem:[%s1 + $0x10] sm:$0xf]
  %v24 = vld [vmem:[%s1 + $0x14] sm:$0xf]
  %v25 = vld [vmem:[%s1 + $0x18] sm:$0xf]
  %v26 = vld [vmem:[%s1 + $0x1c] sm:$0xf]
  %v27 = vld [vmem:[%s1 + $0x20] sm:$0xf]
  %v28 = vld [vmem:[%s1 + $0x24] sm:$0xf]
  %v29 = vld [vmem:[%s1 + $0x28] sm:$0xf]
  %v30 = vld [vmem:[%s1 + $0x2c] sm:$0xf]
  %v31 = vld [vmem:[%s1 + $0x30] sm:$0xf]
  %v32 = vld [vmem:[%s1 + $0x34] sm:$0xf]
  %v33 = vld [vmem:[%s1 + $0x38] sm:$0xf]
  %v34 = vld [vmem:[%s1 + $0x3c] sm:$0xf]
  %v35 = vld [vmem:[%s1 + $0x40] sm:$0xf]
  %v36 = vld [vmem:[%s1 + $0x44] sm:$0xf]
  %v37 = vld [vmem:[%s2] sm:$0x1]
  %v39 = vlaneseq
  %v40 = vshrl.u32 %v39, 7
  %v41 = vsub.s32 0, %v40
  %v42 = vrot.slane %v37, %v41
  %v48 = vunpack.c.l.b16 %v15
  %v49 = vunpack.c.h.b16 %v15
  %v50 = vunpack.c.l.b16 %v16
  %v51 = vunpack.c.h.b16 %v16
  %v52 = vunpack.c.l.b16 %v17
  %v53 = vunpack.c.h.b16 %v17
  %v54 = vunpack.c.l.b16 %v18
  %v55 = vunpack.c.h.b16 %v18
  %v56 = vpack.c.b16 %v50, %v48
  %v57 = vpack.c.b16 %v51, %v49
  %v58 = vpack.c.b16 %v54, %v52
  %v59 = vpack.c.b16 %v55, %v53
  %v80 = vunpack.c.l.b16 %v19
  %v81 = vunpack.c.l.b16 %v20
  %v82 = vunpack.c.l.b16 %v21
  %v83 = vunpack.c.l.b16 %v22
  %v84 = vunpack.c.l.b16 %v23
  %v85 = vunpack.c.l.b16 %v24
  %v86 = vunpack.c.l.b16 %v25
  %v87 = vunpack.c.l.b16 %v26
  %v88 = vunpack.c.l.b16 %v27
  %v89 = vunpack.c.l.b16 %v28
  %v90 = vunpack.c.l.b16 %v29
  %v91 = vunpack.c.l.b16 %v30
  %v92 = vunpack.c.l.b16 %v31
  %v93 = vunpack.c.l.b16 %v32
  %v94 = vunpack.c.l.b16 %v33
  %v95 = vunpack.c.l.b16 %v34
  %v96 = vunpack.c.l.b16 %v35
  %v97 = vunpack.c.l.b16 %v36
  %v98 = vpack.c.b16 %v81, %v80
  %v99 = vpack.c.b16 %v83, %v82
  %v100 = vpack.c.b16 %v85, %v84
  %v101 = vpack.c.b16 %v87, %v86
  %v102 = vpack.c.b16 %v89, %v88
  %v103 = vpack.c.b16 %v91, %v90
  %v104 = vpack.c.b16 %v93, %v92
  %v105 = vpack.c.b16 %v95, %v94
  %v106 = vpack.c.b16 %v97, %v96
  %vm116 = vcmask 130048
  %v118 = vsel %vm116, %v57, 0
  %v121 = vsel %vm116, %v59, 0
  %123 = vmatprep.subr.bf16.mxu0 0
  %124 = vmatpush1.bf16.msra.mxu0 %v98
  %125 = vmatprep.subr.bf16.mxu0 0
  %126 = vmatpush1.bf16.msra.mxu0 %v99
  %127 = vmatprep.subr.bf16.mxu0 0
  %128 = vmatpush1.bf16.msra.mxu0 %v100
  %129 = vmatprep.subr.bf16.mxu0 0
  %130 = vmatpush1.bf16.msra.mxu0 %v101
  %131 = vmatprep.subr.bf16.mxu0 0
  %132 = vmatpush1.bf16.msra.mxu0 %v102
  %133 = vmatprep.subr.bf16.mxu0 0
  %134 = vmatpush1.bf16.msra.mxu0 %v103
  %135 = vmatprep.subr.bf16.mxu0 0
  %136 = vmatpush1.bf16.msra.mxu0 %v104
  %137 = vmatprep.subr.bf16.mxu0 0
  %138 = vmatpush1.bf16.msra.mxu0 %v105
  %139 = vmatprep.subr.bf16.mxu0 0
  %140 = vmatpush1.bf16.msra.mxu0 %v106
  %141 = vmatprep.subr.bf16.mxu0 0
  %142 = vmatpush1.bf16.msra.mxu0 0
  %143 = vmatprep.subr.bf16.mxu0 0
  %144 = vmatpush1.bf16.msra.mxu0 0
  %145 = vmatprep.subr.bf16.mxu0 0
  %146 = vmatpush1.bf16.msra.mxu0 0
  %147 = vmatprep.subr.bf16.mxu0 0
  %148 = vmatpush1.bf16.msra.mxu0 0
  %149 = vmatprep.subr.bf16.mxu0 0
  %150 = vmatpush1.bf16.msra.mxu0 0
  %151 = vmatprep.subr.bf16.mxu0 0
  %152 = vmatpush1.bf16.msra.mxu0 0
  %153 = vmatprep.subr.bf16.mxu0 0
  %154 = vmatpush1.bf16.msra.mxu0 0
  %155 = vmatprep.mubr.bf16.mxu0 %v118
  %156 = vmatmul.mubr.bf16.gmra.mrb[0].mxu0 %v56
  %v157 = vpop.f32.mrb[0].mxu0
  %v158 = vadd.f32 %v42, %v157
  %v159 = vpop.f32.mrb[0].mxu0
  %v160 = vpop.f32.mrb[0].mxu0
  %v161 = vadd.f32 %v42, %v160
  %v162 = vpop.f32.mrb[0].mxu0
  %163 = vmatprep.mubr.bf16.mxu0 %v121
  %164 = vmatmul.mubr.bf16.gmra.mrb[0].mxu0 %v58
  %v165 = vpop.f32.mrb[0].mxu0
  %v166 = vadd.f32 %v42, %v165
  %v167 = vpop.f32.mrb[0].mxu0
  %v168 = vpop.f32.mrb[0].mxu0
  %v169 = vadd.f32 %v42, %v168
  %v170 = vpop.f32.mrb[0].mxu0
  %171 = vdwg.mxu0
  %v172 = vmax.f32 %v158, 0.0
  %v173 = vmax.f32 %v161, 0.0
  %v174 = vmax.f32 %v166, 0.0
  %v175 = vmax.f32 %v169, 0.0
  %176 = vst [vmem:[%s3] sm:$0xff] %v172
  %177 = vst [vmem:[%s3 + $0x8] sm:$0xff] %v173
  %178 = vst [vmem:[%s3 + $0x10] sm:$0xff] %v174
  %179 = vst [vmem:[%s3 + $0x18] sm:$0xff] %v175
  // Predicated region
  $region14: #{_lambda_.25} parent=0 // pred_check
    _
  $region15: #{_lambda_.25} parent=0 // pred_check_branch
    %181 = sbr.rel (0) target = $region17
  $region16: #{_lambda_.25} parent=0 // pred_region
    _
  $region17: #{_lambda_.25} parent=0 // pred_fallthru
    _
  // Predicated region
  $region18: #{_lambda_.25} parent=0 // pred_check
    _
  $region19: #{_lambda_.25} parent=0 // pred_check_branch
    %183 = sbr.rel (0) target = $region21
  $region20: #{_lambda_.25} parent=0 // pred_region
    _
  $region21: #{_lambda_.25} parent=0 // pred_fallthru
    _

// kernel: _lambda_.26
$region0: #{_lambda_.26}
  #allocation0 [shape = 'u32[]', space=smem, size = 0x4, offset = 0x4, fixed_abs, tag = 'smem constant byte address 0x4 - core index']
  #allocation1 [shape = 'u32[144,128]{1,0:T(1,128)}', space=vmem, size = 0x12000, scoped, tag = 'internal scratch']
  %s0 = inlined_call_operand.vmem [shape: bf16[32,72], index: 0, kind: input, shape index: {}]
  %s1 = inlined_call_operand.vmem [shape: bf16[72,128], index: 1, kind: input, shape index: {}]
  %s2 = inlined_call_operand.vmem [shape: f32[1,128], index: 2, kind: input, shape index: {}]
  %s3 = inlined_call_operand.vmem [shape: f32[32,128], index: 3, kind: output, shape index: {}]
  %s4 = sld [smem:[#allocation0]]
  $region22: #{_lambda_.26} parent=0
    _
  %s6 = ssub.s32 1, %s4
  %s7 = scalar_select 0, %s6, %s4
  // Predicated region
  $region2: #{_lambda_.26} parent=0 // pred_check
    _
  $region3: #{_lambda_.26} parent=0 // pred_check_branch
    %9 = sbr.rel (0) target = $region5
  $region4: #{_lambda_.26} parent=0 // pred_region
    _
  $region5: #{_lambda_.26} parent=0 // pred_fallthru
    _
  // Predicated region
  $region6: #{_lambda_.26} parent=0 // pred_check
    _
  $region7: #{_lambda_.26} parent=0 // pred_check_branch
    %11 = sbr.rel (0) target = $region9
  $region8: #{_lambda_.26} parent=0 // pred_region
    _
  $region9: #{_lambda_.26} parent=0 // pred_fallthru
    _
  // Predicated region
  $region10: #{_lambda_.26} parent=0 // pred_check
    _
  $region11: #{_lambda_.26} parent=0 // pred_check_branch
    %13 = sbr.rel (0) target = $region13
  $region12: #{_lambda_.26} parent=0 // pred_region
    _
  $region13: #{_lambda_.26} parent=0 // pred_fallthru
    _
  %v15 = vld [vmem:[%s0] sm:$0xf]
  %v16 = vld [vmem:[%s0 + $0x4] sm:$0xf]
  %v17 = vld [vmem:[%s0 + $0x8] sm:$0xf]
  %v18 = vld [vmem:[%s0 + $0xc] sm:$0xf]
  %v19 = vld [vmem:[%s1] sm:$0xf]
  %v20 = vld [vmem:[%s1 + $0x4] sm:$0xf]
  %v21 = vld [vmem:[%s1 + $0x8] sm:$0xf]
  %v22 = vld [vmem:[%s1 + $0xc] sm:$0xf]
  %v23 = vld [vmem:[%s1 + $0x10] sm:$0xf]
  %v24 = vld [vmem:[%s1 + $0x14] sm:$0xf]
  %v25 = vld [vmem:[%s1 + $0x18] sm:$0xf]
  %v26 = vld [vmem:[%s1 + $0x1c] sm:$0xf]
  %v27 = vld [vmem:[%s1 + $0x20] sm:$0xf]
  %v28 = vld [vmem:[%s2] sm:$0x1]
  %v30 = vlaneseq
  %v31 = vshrl.u32 %v30, 7
  %v32 = vsub.s32 0, %v31
  %v33 = vrot.slane %v28, %v32
  %v39 = vunpack.c.l.b16 %v15
  %v40 = vunpack.c.l.b16 %v16
  %v41 = vunpack.c.l.b16 %v17
  %v42 = vunpack.c.l.b16 %v18
  %v43 = vpack.c.b16 %v40, %v39
  %v44 = vpack.c.b16 %v42, %v41
  %v54 = vunpack.c.l.b16 %v19
  %v55 = vunpack.c.l.b16 %v20
  %v56 = vunpack.c.l.b16 %v21
  %v57 = vunpack.c.l.b16 %v22
  %v58 = vunpack.c.l.b16 %v23
  %v59 = vunpack.c.l.b16 %v24
  %v60 = vunpack.c.l.b16 %v25
  %v61 = vunpack.c.l.b16 %v26
  %v62 = vunpack.c.l.b16 %v27
  %v63 = vpack.c.b16 %v55, %v54
  %v64 = vpack.c.b16 %v57, %v56
  %v65 = vpack.c.b16 %v59, %v58
  %v66 = vpack.c.b16 %v61, %v60
  %v67 = vpack.c.b16 %v62, %v62
  %vm72 = vcmask 588800
  %v74 = vsel %vm72, %v43, 0
  %v77 = vsel %vm72, %v44, 0
  %vm79 = vcmask 1043456
  %v81 = vsel %vm79, %v67, 0
  %83 = vmatprep.subr.bf16.mxu0 0
  %84 = vmatpush1.bf16.msra.mxu0 %v63
  %85 = vmatprep.subr.bf16.mxu0 0
  %86 = vmatpush1.bf16.msra.mxu0 %v64
  %87 = vmatprep.subr.bf16.mxu0 0
  %88 = vmatpush1.bf16.msra.mxu0 %v65
  %89 = vmatprep.subr.bf16.mxu0 0
  %90 = vmatpush1.bf16.msra.mxu0 %v66
  %91 = vmatprep.subr.bf16.mxu0 0
  %92 = vmatpush1.bf16.msra.mxu0 %v81
  %93 = vmatprep.subr.bf16.mxu0 0
  %94 = vmatpush1.bf16.msra.mxu0 0
  %95 = vmatprep.subr.bf16.mxu0 0
  %96 = vmatpush1.bf16.msra.mxu0 0
  %97 = vmatprep.subr.bf16.mxu0 0
  %98 = vmatpush1.bf16.msra.mxu0 0
  %99 = vmatprep.subr.bf16.mxu0 0
  %100 = vmatpush1.bf16.msra.mxu0 0
  %101 = vmatprep.subr.bf16.mxu0 0
  %102 = vmatpush1.bf16.msra.mxu0 0
  %103 = vmatprep.subr.bf16.mxu0 0
  %104 = vmatpush1.bf16.msra.mxu0 0
  %105 = vmatprep.subr.bf16.mxu0 0
  %106 = vmatpush1.bf16.msra.mxu0 0
  %107 = vmatprep.subr.bf16.mxu0 0
  %108 = vmatpush1.bf16.msra.mxu0 0
  %109 = vmatprep.subr.bf16.mxu0 0
  %110 = vmatpush1.bf16.msra.mxu0 0
  %111 = vmatprep.subr.bf16.mxu0 0
  %112 = vmatpush1.bf16.msra.mxu0 0
  %113 = vmatprep.subr.bf16.mxu0 0
  %114 = vmatpush1.bf16.msra.mxu0 0
  %115 = vmatprep.mubr.bf16.mxu0 0
  %116 = vmatmul.mubr.bf16.gmra.mrb[0].mxu0 %v74
  %v117 = vpop.f32.mrb[0].mxu0
  %v118 = vadd.f32 %v33, %v117
  %v119 = vpop.f32.mrb[0].mxu0
  %v120 = vpop.f32.mrb[0].mxu0
  %v121 = vadd.f32 %v33, %v120
  %v122 = vpop.f32.mrb[0].mxu0
  %123 = vmatprep.mubr.bf16.mxu0 0
  %124 = vmatmul.mubr.bf16.gmra.mrb[0].mxu0 %v77
  %v125 = vpop.f32.mrb[0].mxu0
  %v126 = vadd.f32 %v33, %v125
  %v127 = vpop.f32.mrb[0].mxu0
  %v128 = vpop.f32.mrb[0].mxu0
  %v129 = vadd.f32 %v33, %v128
  %v130 = vpop.f32.mrb[0].mxu0
  %131 = vdwg.mxu0
  %v132 = vmax.f32 %v118, 0.0
  %v133 = vmax.f32 %v121, 0.0
  %v134 = vmax.f32 %v126, 0.0
  %v135 = vmax.f32 %v129, 0.0
  %136 = vst [vmem:[%s3] sm:$0xff] %v132
  %137 = vst [vmem:[%s3 + $0x8] sm:$0xff] %v133
  %138 = vst [vmem:[%s3 + $0x10] sm:$0xff] %v134
  %139 = vst [vmem:[%s3 + $0x18] sm:$0xff] %v135
  // Predicated region
  $region14: #{_lambda_.26} parent=0 // pred_check
    _
  $region15: #{_lambda_.26} parent=0 // pred_check_branch
    %141 = sbr.rel (0) target = $region17
  $region16: #{_lambda_.26} parent=0 // pred_region
    _
  $region17: #{_lambda_.26} parent=0 // pred_fallthru
    _
  // Predicated region
  $region18: #{_lambda_.26} parent=0 // pred_check
    _
  $region19: #{_lambda_.26} parent=0 // pred_check_branch
    %143 = sbr.rel (0) target = $region21
  $region20: #{_lambda_.26} parent=0 // pred_region
    _
  $region21: #{_lambda_.26} parent=0 // pred_fallthru
    _

// kernel: _lambda_.27
$region0: #{_lambda_.27}
  #allocation0 [shape = 'u32[]', space=smem, size = 0x4, offset = 0x4, fixed_abs, tag = 'smem constant byte address 0x4 - core index']
  #allocation1 [shape = 'u32[144,128]{1,0:T(1,128)}', space=vmem, size = 0x12000, scoped, tag = 'internal scratch']
  %s0 = inlined_call_operand.vmem [shape: bf16[32,36], index: 0, kind: input, shape index: {}]
  %s1 = inlined_call_operand.vmem [shape: bf16[36,128], index: 1, kind: input, shape index: {}]
  %s2 = inlined_call_operand.vmem [shape: f32[1,128], index: 2, kind: input, shape index: {}]
  %s3 = inlined_call_operand.vmem [shape: f32[32,128], index: 3, kind: output, shape index: {}]
  %s4 = sld [smem:[#allocation0]]
  $region22: #{_lambda_.27} parent=0
    _
  %s6 = ssub.s32 1, %s4
  %s7 = scalar_select 0, %s6, %s4
  // Predicated region
  $region2: #{_lambda_.27} parent=0 // pred_check
    _
  $region3: #{_lambda_.27} parent=0 // pred_check_branch
    %9 = sbr.rel (0) target = $region5
  $region4: #{_lambda_.27} parent=0 // pred_region
    _
  $region5: #{_lambda_.27} parent=0 // pred_fallthru
    _
  // Predicated region
  $region6: #{_lambda_.27} parent=0 // pred_check
    _
  $region7: #{_lambda_.27} parent=0 // pred_check_branch
    %11 = sbr.rel (0) target = $region9
  $region8: #{_lambda_.27} parent=0 // pred_region
    _
  $region9: #{_lambda_.27} parent=0 // pred_fallthru
    _
  // Predicated region
  $region10: #{_lambda_.27} parent=0 // pred_check
    _
  $region11: #{_lambda_.27} parent=0 // pred_check_branch
    %13 = sbr.rel (0) target = $region13
  $region12: #{_lambda_.27} parent=0 // pred_region
    _
  $region13: #{_lambda_.27} parent=0 // pred_fallthru
    _
  %v15 = vld [vmem:[%s0] sm:$0xf]
  %v16 = vld [vmem:[%s0 + $0x4] sm:$0xf]
  %v17 = vld [vmem:[%s0 + $0x8] sm:$0xf]
  %v18 = vld [vmem:[%s0 + $0xc] sm:$0xf]
  %v19 = vld [vmem:[%s1] sm:$0xf]
  %v20 = vld [vmem:[%s1 + $0x4] sm:$0xf]
  %v21 = vld [vmem:[%s1 + $0x8] sm:$0xf]
  %v22 = vld [vmem:[%s1 + $0xc] sm:$0xf]
  %v23 = vld [vmem:[%s1 + $0x10] sm:$0x3]
  %v24 = vld [vmem:[%s2] sm:$0x1]
  %v26 = vlaneseq
  %v27 = vshrl.u32 %v26, 7
  %v28 = vsub.s32 0, %v27
  %v29 = vrot.slane %v24, %v28
  %v35 = vunpack.c.l.b16 %v15
  %v36 = vunpack.c.l.b16 %v16
  %v37 = vunpack.c.l.b16 %v17
  %v38 = vunpack.c.l.b16 %v18
  %v39 = vpack.c.b16 %v36, %v35
  %v40 = vpack.c.b16 %v38, %v37
  %v46 = vunpack.c.l.b16 %v19
  %v47 = vunpack.c.l.b16 %v20
  %v48 = vunpack.c.l.b16 %v21
  %v49 = vunpack.c.l.b16 %v22
  %v50 = vunpack.c.l.b16 %v23
  %v51 = vpack.c.b16 %v47, %v46
  %v52 = vpack.c.b16 %v49, %v48
  %v53 = vpack.c.b16 %v50, %v50
  %vm56 = vcmask 293888
  %v58 = vsel %vm56, %v39, 0
  %v61 = vsel %vm56, %v40, 0
  %vm63 = vcmask 1041408
  %v65 = vsel %vm63, %v53, 0
  %67 = vmatprep.subr.bf16.mxu0 0
  %68 = vmatpush1.bf16.msra.mxu0 %v51
  %69 = vmatprep.subr.bf16.mxu0 0
  %70 = vmatpush1.bf16.msra.mxu0 %v52
  %71 = vmatprep.subr.bf16.mxu0 0
  %72 = vmatpush1.bf16.msra.mxu0 %v65
  %73 = vmatprep.subr.bf16.mxu0 0
  %74 = vmatpush1.bf16.msra.mxu0 0
  %75 = vmatprep.subr.bf16.mxu0 0
  %76 = vmatpush1.bf16.msra.mxu0 0
  %77 = vmatprep.subr.bf16.mxu0 0
  %78 = vmatpush1.bf16.msra.mxu0 0
  %79 = vmatprep.subr.bf16.mxu0 0
  %80 = vmatpush1.bf16.msra.mxu0 0
  %81 = vmatprep.subr.bf16.mxu0 0
  %82 = vmatpush1.bf16.msra.mxu0 0
  %83 = vmatprep.subr.bf16.mxu0 0
  %84 = vmatpush1.bf16.msra.mxu0 0
  %85 = vmatprep.subr.bf16.mxu0 0
  %86 = vmatpush1.bf16.msra.mxu0 0
  %87 = vmatprep.subr.bf16.mxu0 0
  %88 = vmatpush1.bf16.msra.mxu0 0
  %89 = vmatprep.subr.bf16.mxu0 0
  %90 = vmatpush1.bf16.msra.mxu0 0
  %91 = vmatprep.subr.bf16.mxu0 0
  %92 = vmatpush1.bf16.msra.mxu0 0
  %93 = vmatprep.subr.bf16.mxu0 0
  %94 = vmatpush1.bf16.msra.mxu0 0
  %95 = vmatprep.subr.bf16.mxu0 0
  %96 = vmatpush1.bf16.msra.mxu0 0
  %97 = vmatprep.subr.bf16.mxu0 0
  %98 = vmatpush1.bf16.msra.mxu0 0
  %99 = vmatprep.mubr.bf16.mxu0 0
  %100 = vmatmul.mubr.bf16.gmra.mrb[0].mxu0 %v58
  %v101 = vpop.f32.mrb[0].mxu0
  %v102 = vadd.f32 %v29, %v101
  %v103 = vpop.f32.mrb[0].mxu0
  %v104 = vpop.f32.mrb[0].mxu0
  %v105 = vadd.f32 %v29, %v104
  %v106 = vpop.f32.mrb[0].mxu0
  %107 = vmatprep.mubr.bf16.mxu0 0
  %108 = vmatmul.mubr.bf16.gmra.mrb[0].mxu0 %v61
  %v109 = vpop.f32.mrb[0].mxu0
  %v110 = vadd.f32 %v29, %v109
  %v111 = vpop.f32.mrb[0].mxu0
  %v112 = vpop.f32.mrb[0].mxu0
  %v113 = vadd.f32 %v29, %v112
  %v114 = vpop.f32.mrb[0].mxu0
  %115 = vdwg.mxu0
  %v116 = vmax.f32 %v102, 0.0
  %v117 = vmax.f32 %v105, 0.0
  %v118 = vmax.f32 %v110, 0.0
  %v119 = vmax.f32 %v113, 0.0
  %120 = vst [vmem:[%s3] sm:$0xff] %v116
  %121 = vst [vmem:[%s3 + $0x8] sm:$0xff] %v117
  %122 = vst [vmem:[%s3 + $0x10] sm:$0xff] %v118
  %123 = vst [vmem:[%s3 + $0x18] sm:$0xff] %v119
  // Predicated region
  $region14: #{_lambda_.27} parent=0 // pred_check
    _
  $region15: #{_lambda_.27} parent=0 // pred_check_branch
    %125 = sbr.rel (0) target = $region17
  $region16: #{_lambda_.27} parent=0 // pred_region
    _
  $region17: #{_lambda_.27} parent=0 // pred_fallthru
    _
  // Predicated region
  $region18: #{_lambda_.27} parent=0 // pred_check
    _
  $region19: #{_lambda_.27} parent=0 // pred_check_branch
    %127 = sbr.rel (0) target = $region21
  $region20: #{_lambda_.27} parent=0 // pred_region
    _
  $region21: #{_lambda_.27} parent=0 // pred_fallthru
    _

// kernel: _lambda_.28
$region0: #{_lambda_.28}
  #allocation0 [shape = 'u32[]', space=smem, size = 0x4, offset = 0x4, fixed_abs, tag = 'smem constant byte address 0x4 - core index']
  #allocation1 [shape = 'u32[144,128]{1,0:T(1,128)}', space=vmem, size = 0x12000, scoped, tag = 'internal scratch']
  %s0 = inlined_call_operand.vmem [shape: bf16[32,32], index: 0, kind: input, shape index: {}]
  %s1 = inlined_call_operand.vmem [shape: bf16[32,128], index: 1, kind: input, shape index: {}]
  %s2 = inlined_call_operand.vmem [shape: f32[1,128], index: 2, kind: input, shape index: {}]
  %s3 = inlined_call_operand.vmem [shape: f32[32,128], index: 3, kind: output, shape index: {}]
  %s4 = sld [smem:[#allocation0]]
  $region22: #{_lambda_.28} parent=0
    _
  %s6 = ssub.s32 1, %s4
  %s7 = scalar_select 0, %s6, %s4
  // Predicated region
  $region2: #{_lambda_.28} parent=0 // pred_check
    _
  $region3: #{_lambda_.28} parent=0 // pred_check_branch
    %9 = sbr.rel (0) target = $region5
  $region4: #{_lambda_.28} parent=0 // pred_region
    _
  $region5: #{_lambda_.28} parent=0 // pred_fallthru
    _
  // Predicated region
  $region6: #{_lambda_.28} parent=0 // pred_check
    _
  $region7: #{_lambda_.28} parent=0 // pred_check_branch
    %11 = sbr.rel (0) target = $region9
  $region8: #{_lambda_.28} parent=0 // pred_region
    _
  $region9: #{_lambda_.28} parent=0 // pred_fallthru
    _
  // Predicated region
  $region10: #{_lambda_.28} parent=0 // pred_check
    _
  $region11: #{_lambda_.28} parent=0 // pred_check_branch
    %13 = sbr.rel (0) target = $region13
  $region12: #{_lambda_.28} parent=0 // pred_region
    _
  $region13: #{_lambda_.28} parent=0 // pred_fallthru
    _
  %v15 = vld [vmem:[%s0] sm:$0xf]
  %v16 = vld [vmem:[%s0 + $0x4] sm:$0xf]
  %v17 = vld [vmem:[%s0 + $0x8] sm:$0xf]
  %v18 = vld [vmem:[%s0 + $0xc] sm:$0xf]
  %v19 = vld [vmem:[%s1] sm:$0xf]
  %v20 = vld [vmem:[%s1 + $0x4] sm:$0xf]
  %v21 = vld [vmem:[%s1 + $0x8] sm:$0xf]
  %v22 = vld [vmem:[%s1 + $0xc] sm:$0xf]
  %v23 = vld [vmem:[%s2] sm:$0x1]
  %v25 = vlaneseq
  %v26 = vshrl.u32 %v25, 7
  %v27 = vsub.s32 0, %v26
  %v28 = vrot.slane %v23, %v27
  %v34 = vunpack.c.l.b16 %v15
  %v35 = vunpack.c.l.b16 %v16
  %v36 = vunpack.c.l.b16 %v17
  %v37 = vunpack.c.l.b16 %v18
  %v38 = vpack.c.b16 %v35, %v34
  %v39 = vpack.c.b16 %v37, %v36
  %v44 = vunpack.c.l.b16 %v19
  %v45 = vunpack.c.l.b16 %v20
  %v46 = vunpack.c.l.b16 %v21
  %v47 = vunpack.c.l.b16 %v22
  %v48 = vpack.c.b16 %v45, %v44
  %v49 = vpack.c.b16 %v47, %v46
  %vm52 = vcmask 261120
  %v54 = vsel %vm52, %v38, 0
  %v57 = vsel %vm52, %v39, 0
  %59 = vmatprep.subr.bf16.mxu0 0
  %60 = vmatpush1.bf16.msra.mxu0 %v48
  %61 = vmatprep.subr.bf16.mxu0 0
  %62 = vmatpush1.bf16.msra.mxu0 %v49
  %63 = vmatprep.subr.bf16.mxu0 0
  %64 = vmatpush1.bf16.msra.mxu0 0
  %65 = vmatprep.subr.bf16.mxu0 0
  %66 = vmatpush1.bf16.msra.mxu0 0
  %67 = vmatprep.subr.bf16.mxu0 0
  %68 = vmatpush1.bf16.msra.mxu0 0
  %69 = vmatprep.subr.bf16.mxu0 0
  %70 = vmatpush1.bf16.msra.mxu0 0
  %71 = vmatprep.subr.bf16.mxu0 0
  %72 = vmatpush1.bf16.msra.mxu0 0
  %73 = vmatprep.subr.bf16.mxu0 0
  %74 = vmatpush1.bf16.msra.mxu0 0
  %75 = vmatprep.subr.bf16.mxu0 0
  %76 = vmatpush1.bf16.msra.mxu0 0
  %77 = vmatprep.subr.bf16.mxu0 0
  %78 = vmatpush1.bf16.msra.mxu0 0
  %79 = vmatprep.subr.bf16.mxu0 0
  %80 = vmatpush1.bf16.msra.mxu0 0
  %81 = vmatprep.subr.bf16.mxu0 0
  %82 = vmatpush1.bf16.msra.mxu0 0
  %83 = vmatprep.subr.bf16.mxu0 0
  %84 = vmatpush1.bf16.msra.mxu0 0
  %85 = vmatprep.subr.bf16.mxu0 0
  %86 = vmatpush1.bf16.msra.mxu0 0
  %87 = vmatprep.subr.bf16.mxu0 0
  %88 = vmatpush1.bf16.msra.mxu0 0
  %89 = vmatprep.subr.bf16.mxu0 0
  %90 = vmatpush1.bf16.msra.mxu0 0
  %91 = vmatprep.mubr.bf16.mxu0 0
  %92 = vmatmul.mubr.bf16.gmra.mrb[0].mxu0 %v54
  %v93 = vpop.f32.mrb[0].mxu0
  %v94 = vadd.f32 %v28, %v93
  %v95 = vpop.f32.mrb[0].mxu0
  %v96 = vpop.f32.mrb[0].mxu0
  %v97 = vadd.f32 %v28, %v96
  %v98 = vpop.f32.mrb[0].mxu0
  %99 = vmatprep.mubr.bf16.mxu0 0
  %100 = vmatmul.mubr.bf16.gmra.mrb[0].mxu0 %v57
  %v101 = vpop.f32.mrb[0].mxu0
  %v102 = vadd.f32 %v28, %v101
  %v103 = vpop.f32.mrb[0].mxu0
  %v104 = vpop.f32.mrb[0].mxu0
  %v105 = vadd.f32 %v28, %v104
  %v106 = vpop.f32.mrb[0].mxu0
  %107 = vdwg.mxu0
  %v108 = vmax.f32 %v94, 0.0
  %v109 = vmax.f32 %v97, 0.0
  %v110 = vmax.f32 %v102, 0.0
  %v111 = vmax.f32 %v105, 0.0
  %112 = vst [vmem:[%s3] sm:$0xff] %v108
  %113 = vst [vmem:[%s3 + $0x8] sm:$0xff] %v109
  %114 = vst [vmem:[%s3 + $0x10] sm:$0xff] %v110
  %115 = vst [vmem:[%s3 + $0x18] sm:$0xff] %v111
  // Predicated region
  $region14: #{_lambda_.28} parent=0 // pred_check
    _
  $region15: #{_lambda_.28} parent=0 // pred_check_branch
    %117 = sbr.rel (0) target = $region17
  $region16: #{_lambda_.28} parent=0 // pred_region
    _
  $region17: #{_lambda_.28} parent=0 // pred_fallthru
    _
  // Predicated region
  $region18: #{_lambda_.28} parent=0 // pred_check
    _
  $region19: #{_lambda_.28} parent=0 // pred_check_branch
    %119 = sbr.rel (0) target = $region21
  $region20: #{_lambda_.28} parent=0 // pred_region
    _
  $region21: #{_lambda_.28} parent=0 // pred_fallthru
    _

// kernel: _lambda_.30
$region0: #{_lambda_.30}
  #allocation0 [shape = 'u32[]', space=smem, size = 0x4, offset = 0x4, fixed_abs, tag = 'smem constant byte address 0x4 - core index']
  #allocation1 [shape = 'u32[144,128]{1,0:T(1,128)}', space=vmem, size = 0x12000, scoped, tag = 'internal scratch']
  %s0 = inlined_call_operand.vmem [shape: f32[9,8,32], index: 0, kind: input, shape index: {}]
  %s1 = inlined_call_operand.vmem [shape: f32[9,32], index: 1, kind: input, shape index: {}]
  %s2 = inlined_call_operand.vmem [shape: f32[1,32], index: 2, kind: input, shape index: {}]
  %s3 = inlined_call_operand.vmem [shape: f32[8,32], index: 3, kind: output, shape index: {}]
  %s4 = sld [smem:[#allocation0]]
  $region22: #{_lambda_.30} parent=0
    _
  %s6 = ssub.s32 1, %s4
  %s7 = scalar_select 0, %s6, %s4
  // Predicated region
  $region2: #{_lambda_.30} parent=0 // pred_check
    _
  $region3: #{_lambda_.30} parent=0 // pred_check_branch
    %9 = sbr.rel (0) target = $region5
  $region4: #{_lambda_.30} parent=0 // pred_region
    _
  $region5: #{_lambda_.30} parent=0 // pred_fallthru
    _
  // Predicated region
  $region6: #{_lambda_.30} parent=0 // pred_check
    _
  $region7: #{_lambda_.30} parent=0 // pred_check_branch
    %11 = sbr.rel (0) target = $region9
  $region8: #{_lambda_.30} parent=0 // pred_region
    _
  $region9: #{_lambda_.30} parent=0 // pred_fallthru
    _
  // Predicated region
  $region10: #{_lambda_.30} parent=0 // pred_check
    _
  $region11: #{_lambda_.30} parent=0 // pred_check_branch
    %13 = sbr.rel (0) target = $region13
  $region12: #{_lambda_.30} parent=0 // pred_region
    _
  $region13: #{_lambda_.30} parent=0 // pred_fallthru
    _
  %v14 = vld [vmem:[%s0] sm:$0xff]
  %v15 = vld [vmem:[%s1] sm:$0x1]
  %v16 = vlaneseq
  %v17 = vshrl.u32 %v16, 7
  %v18 = vsub.s32 0, %v17
  %v19 = vrot.slane %v15, %v18
  %v20 = vmul.f32 %v14, %v19
  %s21 = scalar_lea.vmem %s0, 8
  %v22 = vld [vmem:[%s21] sm:$0xff]
  %v23 = vld [vmem:[%s1 + $0x1] sm:$0x1]
  %v24 = vlaneseq
  %v25 = vshrl.u32 %v24, 7
  %v26 = vsub.s32 0, %v25
  %v27 = vrot.slane %v23, %v26
  %v28 = vmul.f32 %v22, %v27
  %v29 = vadd.f32 %v20, %v28
  %s30 = scalar_lea.vmem %s0, 16
  %v31 = vld [vmem:[%s30] sm:$0xff]
  %v32 = vld [vmem:[%s1 + $0x2] sm:$0x1]
  %v33 = vlaneseq
  %v34 = vshrl.u32 %v33, 7
  %v35 = vsub.s32 0, %v34
  %v36 = vrot.slane %v32, %v35
  %v37 = vmul.f32 %v31, %v36
  %v38 = vadd.f32 %v29, %v37
  %s39 = scalar_lea.vmem %s0, 24
  %v40 = vld [vmem:[%s39] sm:$0xff]
  %v41 = vld [vmem:[%s1 + $0x3] sm:$0x1]
  %v42 = vlaneseq
  %v43 = vshrl.u32 %v42, 7
  %v44 = vsub.s32 0, %v43
  %v45 = vrot.slane %v41, %v44
  %v46 = vmul.f32 %v40, %v45
  %v47 = vadd.f32 %v38, %v46
  %s48 = scalar_lea.vmem %s0, 32
  %v49 = vld [vmem:[%s48] sm:$0xff]
  %v50 = vld [vmem:[%s1 + $0x4] sm:$0x1]
  %v51 = vlaneseq
  %v52 = vshrl.u32 %v51, 7
  %v53 = vsub.s32 0, %v52
  %v54 = vrot.slane %v50, %v53
  %v55 = vmul.f32 %v49, %v54
  %v56 = vadd.f32 %v47, %v55
  %s57 = scalar_lea.vmem %s0, 40
  %v58 = vld [vmem:[%s57] sm:$0xff]
  %v59 = vld [vmem:[%s1 + $0x5] sm:$0x1]
  %v60 = vlaneseq
  %v61 = vshrl.u32 %v60, 7
  %v62 = vsub.s32 0, %v61
  %v63 = vrot.slane %v59, %v62
  %v64 = vmul.f32 %v58, %v63
  %v65 = vadd.f32 %v56, %v64
  %s66 = scalar_lea.vmem %s0, 48
  %v67 = vld [vmem:[%s66] sm:$0xff]
  %v68 = vld [vmem:[%s1 + $0x6] sm:$0x1]
  %v69 = vlaneseq
  %v70 = vshrl.u32 %v69, 7
  %v71 = vsub.s32 0, %v70
  %v72 = vrot.slane %v68, %v71
  %v73 = vmul.f32 %v67, %v72
  %v74 = vadd.f32 %v65, %v73
  %s75 = scalar_lea.vmem %s0, 56
  %v76 = vld [vmem:[%s75] sm:$0xff]
  %v77 = vld [vmem:[%s1 + $0x7] sm:$0x1]
  %v78 = vlaneseq
  %v79 = vshrl.u32 %v78, 7
  %v80 = vsub.s32 0, %v79
  %v81 = vrot.slane %v77, %v80
  %v82 = vmul.f32 %v76, %v81
  %v83 = vadd.f32 %v74, %v82
  %s84 = scalar_lea.vmem %s0, 64
  %v85 = vld [vmem:[%s84] sm:$0xff]
  %v86 = vld [vmem:[%s1 + $0x8] sm:$0x1]
  %v87 = vlaneseq
  %v88 = vshrl.u32 %v87, 7
  %v89 = vsub.s32 0, %v88
  %v90 = vrot.slane %v86, %v89
  %v91 = vmul.f32 %v85, %v90
  %v92 = vadd.f32 %v83, %v91
  %v93 = vld [vmem:[%s2] sm:$0x1]
  %v95 = vlaneseq
  %v96 = vshrl.u32 %v95, 7
  %v97 = vsub.s32 0, %v96
  %v98 = vrot.slane %v93, %v97
  %v100 = vadd.f32 %v92, %v98
  %vm101 = vcmask 261120
  %102 = vst.msk [vmem:[%s3] sm:$0xff] %vm101, %v100
  // Predicated region
  $region14: #{_lambda_.30} parent=0 // pred_check
    _
  $region15: #{_lambda_.30} parent=0 // pred_check_branch
    %104 = sbr.rel (0) target = $region17
  $region16: #{_lambda_.30} parent=0 // pred_region
    _
  $region17: #{_lambda_.30} parent=0 // pred_fallthru
    _
  // Predicated region
  $region18: #{_lambda_.30} parent=0 // pred_check
    _
  $region19: #{_lambda_.30} parent=0 // pred_check_branch
    %106 = sbr.rel (0) target = $region21
  $region20: #{_lambda_.30} parent=0 // pred_region
    _
  $region21: #{_lambda_.30} parent=0 // pred_fallthru
    _

// kernel: _lambda_.31
$region0: #{_lambda_.31}
  #allocation0 [shape = 'u32[]', space=smem, size = 0x4, offset = 0x4, fixed_abs, tag = 'smem constant byte address 0x4 - core index']
  #allocation1 [shape = 'u32[144,128]{1,0:T(1,128)}', space=vmem, size = 0x12000, scoped, tag = 'internal scratch']
  %s0 = inlined_call_operand.vmem [shape: bf16[8,288], index: 0, kind: input, shape index: {}]
  %s1 = inlined_call_operand.vmem [shape: bf16[288,128], index: 1, kind: input, shape index: {}]
  %s2 = inlined_call_operand.vmem [shape: f32[1,128], index: 2, kind: input, shape index: {}]
  %s3 = inlined_call_operand.vmem [shape: f32[8,128], index: 3, kind: output, shape index: {}]
  %s4 = sld [smem:[#allocation0]]
  $region22: #{_lambda_.31} parent=0
    _
  %s6 = ssub.s32 1, %s4
  %s7 = scalar_select 0, %s6, %s4
  // Predicated region
  $region2: #{_lambda_.31} parent=0 // pred_check
    _
  $region3: #{_lambda_.31} parent=0 // pred_check_branch
    %9 = sbr.rel (0) target = $region5
  $region4: #{_lambda_.31} parent=0 // pred_region
    _
  $region5: #{_lambda_.31} parent=0 // pred_fallthru
    _
  // Predicated region
  $region6: #{_lambda_.31} parent=0 // pred_check
    _
  $region7: #{_lambda_.31} parent=0 // pred_check_branch
    %11 = sbr.rel (0) target = $region9
  $region8: #{_lambda_.31} parent=0 // pred_region
    _
  $region9: #{_lambda_.31} parent=0 // pred_fallthru
    _
  // Predicated region
  $region10: #{_lambda_.31} parent=0 // pred_check
    _
  $region11: #{_lambda_.31} parent=0 // pred_check_branch
    %13 = sbr.rel (0) target = $region13
  $region12: #{_lambda_.31} parent=0 // pred_region
    _
  $region13: #{_lambda_.31} parent=0 // pred_fallthru
    _
  %v15 = vld [vmem:[%s0] sm:$0xff]
  %v16 = vld [vmem:[%s0 + $0x8] sm:$0xf]
  %v17 = vld [vmem:[%s1] sm:$0xf]
  %v18 = vld [vmem:[%s1 + $0x4] sm:$0xf]
  %v19 = vld [vmem:[%s1 + $0x8] sm:$0xf]
  %v20 = vld [vmem:[%s1 + $0xc] sm:$0xf]
  %v21 = vld [vmem:[%s1 + $0x10] sm:$0xf]
  %v22 = vld [vmem:[%s1 + $0x14] sm:$0xf]
  %v23 = vld [vmem:[%s1 + $0x18] sm:$0xf]
  %v24 = vld [vmem:[%s1 + $0x1c] sm:$0xf]
  %v25 = vld [vmem:[%s1 + $0x20] sm:$0xf]
  %v26 = vld [vmem:[%s1 + $0x24] sm:$0xf]
  %v27 = vld [vmem:[%s1 + $0x28] sm:$0xf]
  %v28 = vld [vmem:[%s1 + $0x2c] sm:$0xf]
  %v29 = vld [vmem:[%s1 + $0x30] sm:$0xf]
  %v30 = vld [vmem:[%s1 + $0x34] sm:$0xf]
  %v31 = vld [vmem:[%s1 + $0x38] sm:$0xf]
  %v32 = vld [vmem:[%s1 + $0x3c] sm:$0xf]
  %v33 = vld [vmem:[%s1 + $0x40] sm:$0xf]
  %v34 = vld [vmem:[%s1 + $0x44] sm:$0xf]
  %v35 = vld [vmem:[%s1 + $0x48] sm:$0xf]
  %v36 = vld [vmem:[%s1 + $0x4c] sm:$0xf]
  %v37 = vld [vmem:[%s1 + $0x50] sm:$0xf]
  %v38 = vld [vmem:[%s1 + $0x54] sm:$0xf]
  %v39 = vld [vmem:[%s1 + $0x58] sm:$0xf]
  %v40 = vld [vmem:[%s1 + $0x5c] sm:$0xf]
  %v41 = vld [vmem:[%s1 + $0x60] sm:$0xf]
  %v42 = vld [vmem:[%s1 + $0x64] sm:$0xf]
  %v43 = vld [vmem:[%s1 + $0x68] sm:$0xf]
  %v44 = vld [vmem:[%s1 + $0x6c] sm:$0xf]
  %v45 = vld [vmem:[%s1 + $0x70] sm:$0xf]
  %v46 = vld [vmem:[%s1 + $0x74] sm:$0xf]
  %v47 = vld [vmem:[%s1 + $0x78] sm:$0xf]
  %v48 = vld [vmem:[%s1 + $0x7c] sm:$0xf]
  %v49 = vld [vmem:[%s1 + $0x80] sm:$0xf]
  %v50 = vld [vmem:[%s1 + $0x84] sm:$0xf]
  %v51 = vld [vmem:[%s1 + $0x88] sm:$0xf]
  %v52 = vld [vmem:[%s1 + $0x8c] sm:$0xf]
  %v53 = vld [vmem:[%s2] sm:$0x1]
  %v55 = vlaneseq
  %v56 = vshrl.u32 %v55, 7
  %v57 = vsub.s32 0, %v56
  %v58 = vrot.slane %v53, %v57
  %v62 = vunpack.c.l.b16 %v15
  %v63 = vunpack.c.h.b16 %v15
  %v64 = vunpack.c.l.b16 %v16
  %v65 = vpack.c.b16 %v62, %v62
  %v66 = vpack.c.b16 %v63, %v63
  %v67 = vpack.c.b16 %v64, %v64
  %v106 = vunpack.c.l.b16 %v17
  %v107 = vunpack.c.l.b16 %v18
  %v108 = vunpack.c.l.b16 %v19
  %v109 = vunpack.c.l.b16 %v20
  %v110 = vunpack.c.l.b16 %v21
  %v111 = vunpack.c.l.b16 %v22
  %v112 = vunpack.c.l.b16 %v23
  %v113 = vunpack.c.l.b16 %v24
  %v114 = vunpack.c.l.b16 %v25
  %v115 = vunpack.c.l.b16 %v26
  %v116 = vunpack.c.l.b16 %v27
  %v117 = vunpack.c.l.b16 %v28
  %v118 = vunpack.c.l.b16 %v29
  %v119 = vunpack.c.l.b16 %v30
  %v120 = vunpack.c.l.b16 %v31
  %v121 = vunpack.c.l.b16 %v32
  %v122 = vunpack.c.l.b16 %v33
  %v123 = vunpack.c.l.b16 %v34
  %v124 = vunpack.c.l.b16 %v35
  %v125 = vunpack.c.l.b16 %v36
  %v126 = vunpack.c.l.b16 %v37
  %v127 = vunpack.c.l.b16 %v38
  %v128 = vunpack.c.l.b16 %v39
  %v129 = vunpack.c.l.b16 %v40
  %v130 = vunpack.c.l.b16 %v41
  %v131 = vunpack.c.l.b16 %v42
  %v132 = vunpack.c.l.b16 %v43
  %v133 = vunpack.c.l.b16 %v44
  %v134 = vunpack.c.l.b16 %v45
  %v135 = vunpack.c.l.b16 %v46
  %v136 = vunpack.c.l.b16 %v47
  %v137 = vunpack.c.l.b16 %v48
  %v138 = vunpack.c.l.b16 %v49
  %v139 = vunpack.c.l.b16 %v50
  %v140 = vunpack.c.l.b16 %v51
  %v141 = vunpack.c.l.b16 %v52
  %v142 = vpack.c.b16 %v107, %v106
  %v143 = vpack.c.b16 %v109, %v108
  %v144 = vpack.c.b16 %v111, %v110
  %v145 = vpack.c.b16 %v113, %v112
  %v146 = vpack.c.b16 %v115, %v114
  %v147 = vpack.c.b16 %v117, %v116
  %v148 = vpack.c.b16 %v119, %v118
  %v149 = vpack.c.b16 %v121, %v120
  %v150 = vpack.c.b16 %v123, %v122
  %v151 = vpack.c.b16 %v125, %v124
  %v152 = vpack.c.b16 %v127, %v126
  %v153 = vpack.c.b16 %v129, %v128
  %v154 = vpack.c.b16 %v131, %v130
  %v155 = vpack.c.b16 %v133, %v132
  %v156 = vpack.c.b16 %v135, %v134
  %v157 = vpack.c.b16 %v137, %v136
  %v158 = vpack.c.b16 %v139, %v138
  %v159 = vpack.c.b16 %v141, %v140
  %vm178 = vcmask 261120
  %v180 = vsel %vm178, %v67, 0
  %182 = vmatprep.subr.bf16.mxu0 0
  %183 = vmatpush1.bf16.msra.mxu0 %v142
  %184 = vmatprep.subr.bf16.mxu0 0
  %185 = vmatpush1.bf16.msra.mxu0 %v143
  %186 = vmatprep.subr.bf16.mxu0 0
  %187 = vmatpush1.bf16.msra.mxu0 %v144
  %188 = vmatprep.subr.bf16.mxu0 0
  %189 = vmatpush1.bf16.msra.mxu0 %v145
  %190 = vmatprep.subr.bf16.mxu0 0
  %191 = vmatpush1.bf16.msra.mxu0 %v146
  %192 = vmatprep.subr.bf16.mxu0 0
  %193 = vmatpush1.bf16.msra.mxu0 %v147
  %194 = vmatprep.subr.bf16.mxu0 0
  %195 = vmatpush1.bf16.msra.mxu0 %v148
  %196 = vmatprep.subr.bf16.mxu0 0
  %197 = vmatpush1.bf16.msra.mxu0 %v149
  %198 = vmatprep.subr.bf16.mxu0 0
  %199 = vmatpush1.bf16.msra.mxu0 %v150
  %200 = vmatprep.subr.bf16.mxu0 0
  %201 = vmatpush1.bf16.msra.mxu0 %v151
  %202 = vmatprep.subr.bf16.mxu0 0
  %203 = vmatpush1.bf16.msra.mxu0 %v152
  %204 = vmatprep.subr.bf16.mxu0 0
  %205 = vmatpush1.bf16.msra.mxu0 %v153
  %206 = vmatprep.subr.bf16.mxu0 0
  %207 = vmatpush1.bf16.msra.mxu0 %v154
  %208 = vmatprep.subr.bf16.mxu0 0
  %209 = vmatpush1.bf16.msra.mxu0 %v155
  %210 = vmatprep.subr.bf16.mxu0 0
  %211 = vmatpush1.bf16.msra.mxu0 %v156
  %212 = vmatprep.subr.bf16.mxu0 0
  %213 = vmatpush1.bf16.msra.mxu0 %v157
  %214 = vmatprep.mubr.bf16.mxu0 %v66
  %215 = vmatmul.mubr.bf16.gmra.mrb[0].mxu0 %v65
  %v216 = vpop.f32.mrb[0].mxu0
  %v217 = vadd.f32 %v58, %v216
  %v218 = vpop.f32.mrb[0].mxu0
  %v219 = vpop.f32.mrb[0].mxu0
  %v220 = vpop.f32.mrb[0].mxu0
  %221 = vdwg.mxu0
  %222 = vmatprep.subr.bf16.mxu0 0
  %223 = vmatpush1.bf16.msra.mxu0 %v158
  %224 = vmatprep.subr.bf16.mxu0 0
  %225 = vmatpush1.bf16.msra.mxu0 %v159
  %226 = vmatprep.subr.bf16.mxu0 0
  %227 = vmatpush1.bf16.msra.mxu0 0
  %228 = vmatprep.subr.bf16.mxu0 0
  %229 = vmatpush1.bf16.msra.mxu0 0
  %230 = vmatprep.subr.bf16.mxu0 0
  %231 = vmatpush1.bf16.msra.mxu0 0
  %232 = vmatprep.subr.bf16.mxu0 0
  %233 = vmatpush1.bf16.msra.mxu0 0
  %234 = vmatprep.subr.bf16.mxu0 0
  %235 = vmatpush1.bf16.msra.mxu0 0
  %236 = vmatprep.subr.bf16.mxu0 0
  %237 = vmatpush1.bf16.msra.mxu0 0
  %238 = vmatprep.subr.bf16.mxu0 0
  %239 = vmatpush1.bf16.msra.mxu0 0
  %240 = vmatprep.subr.bf16.mxu0 0
  %241 = vmatpush1.bf16.msra.mxu0 0
  %242 = vmatprep.subr.bf16.mxu0 0
  %243 = vmatpush1.bf16.msra.mxu0 0
  %244 = vmatprep.subr.bf16.mxu0 0
  %245 = vmatpush1.bf16.msra.mxu0 0
  %246 = vmatprep.subr.bf16.mxu0 0
  %247 = vmatpush1.bf16.msra.mxu0 0
  %248 = vmatprep.subr.bf16.mxu0 0
  %249 = vmatpush1.bf16.msra.mxu0 0
  %250 = vmatprep.subr.bf16.mxu0 0
  %251 = vmatpush1.bf16.msra.mxu0 0
  %252 = vmatprep.subr.bf16.mxu0 0
  %253 = vmatpush1.bf16.msra.mxu0 0
  %254 = vmatprep.mubr.bf16.mxu0 0
  %255 = vmatmul.mubr.bf16.gmra.mrb[0].mxu0 %v180
  %v256 = vpop.f32.mrb[0].mxu0
  %v257 = vadd.f32 %v217, %v256
  %v258 = vpop.f32.mrb[0].mxu0
  %v259 = vpop.f32.mrb[0].mxu0
  %v260 = vpop.f32.mrb[0].mxu0
  %261 = vdwg.mxu0
  %v262 = vmax.f32 %v257, 0.0
  %263 = vst [vmem:[%s3] sm:$0xff] %v262
  // Predicated region
  $region14: #{_lambda_.31} parent=0 // pred_check
    _
  $region15: #{_lambda_.31} parent=0 // pred_check_branch
    %265 = sbr.rel (0) target = $region17
  $region16: #{_lambda_.31} parent=0 // pred_region
    _
  $region17: #{_lambda_.31} parent=0 // pred_fallthru
    _
  // Predicated region
  $region18: #{_lambda_.31} parent=0 // pred_check
    _
  $region19: #{_lambda_.31} parent=0 // pred_check_branch
    %267 = sbr.rel (0) target = $region21
  $region20: #{_lambda_.31} parent=0 // pred_region
    _
  $region21: #{_lambda_.31} parent=0 // pred_fallthru
    _

// kernel: _lambda_.32
$region0: #{_lambda_.32}
  #allocation0 [shape = 'u32[]', space=smem, size = 0x4, offset = 0x4, fixed_abs, tag = 'smem constant byte address 0x4 - core index']
  #allocation1 [shape = 'u32[144,128]{1,0:T(1,128)}', space=vmem, size = 0x12000, scoped, tag = 'internal scratch']
  %s0 = inlined_call_operand.vmem [shape: bf16[8,144], index: 0, kind: input, shape index: {}]
  %s1 = inlined_call_operand.vmem [shape: bf16[144,128], index: 1, kind: input, shape index: {}]
  %s2 = inlined_call_operand.vmem [shape: f32[1,128], index: 2, kind: input, shape index: {}]
  %s3 = inlined_call_operand.vmem [shape: f32[8,128], index: 3, kind: output, shape index: {}]
  %s4 = sld [smem:[#allocation0]]
  $region22: #{_lambda_.32} parent=0
    _
  %s6 = ssub.s32 1, %s4
  %s7 = scalar_select 0, %s6, %s4
  // Predicated region
  $region2: #{_lambda_.32} parent=0 // pred_check
    _
  $region3: #{_lambda_.32} parent=0 // pred_check_branch
    %9 = sbr.rel (0) target = $region5
  $region4: #{_lambda_.32} parent=0 // pred_region
    _
  $region5: #{_lambda_.32} parent=0 // pred_fallthru
    _
  // Predicated region
  $region6: #{_lambda_.32} parent=0 // pred_check
    _
  $region7: #{_lambda_.32} parent=0 // pred_check_branch
    %11 = sbr.rel (0) target = $region9
  $region8: #{_lambda_.32} parent=0 // pred_region
    _
  $region9: #{_lambda_.32} parent=0 // pred_fallthru
    _
  // Predicated region
  $region10: #{_lambda_.32} parent=0 // pred_check
    _
  $region11: #{_lambda_.32} parent=0 // pred_check_branch
    %13 = sbr.rel (0) target = $region13
  $region12: #{_lambda_.32} parent=0 // pred_region
    _
  $region13: #{_lambda_.32} parent=0 // pred_fallthru
    _
  %v15 = vld [vmem:[%s0] sm:$0xff]
  %v16 = vld [vmem:[%s1] sm:$0xf]
  %v17 = vld [vmem:[%s1 + $0x4] sm:$0xf]
  %v18 = vld [vmem:[%s1 + $0x8] sm:$0xf]
  %v19 = vld [vmem:[%s1 + $0xc] sm:$0xf]
  %v20 = vld [vmem:[%s1 + $0x10] sm:$0xf]
  %v21 = vld [vmem:[%s1 + $0x14] sm:$0xf]
  %v22 = vld [vmem:[%s1 + $0x18] sm:$0xf]
  %v23 = vld [vmem:[%s1 + $0x1c] sm:$0xf]
  %v24 = vld [vmem:[%s1 + $0x20] sm:$0xf]
  %v25 = vld [vmem:[%s1 + $0x24] sm:$0xf]
  %v26 = vld [vmem:[%s1 + $0x28] sm:$0xf]
  %v27 = vld [vmem:[%s1 + $0x2c] sm:$0xf]
  %v28 = vld [vmem:[%s1 + $0x30] sm:$0xf]
  %v29 = vld [vmem:[%s1 + $0x34] sm:$0xf]
  %v30 = vld [vmem:[%s1 + $0x38] sm:$0xf]
  %v31 = vld [vmem:[%s1 + $0x3c] sm:$0xf]
  %v32 = vld [vmem:[%s1 + $0x40] sm:$0xf]
  %v33 = vld [vmem:[%s1 + $0x44] sm:$0xf]
  %v34 = vld [vmem:[%s2] sm:$0x1]
  %v36 = vlaneseq
  %v37 = vshrl.u32 %v36, 7
  %v38 = vsub.s32 0, %v37
  %v39 = vrot.slane %v34, %v38
  %v42 = vunpack.c.l.b16 %v15
  %v43 = vunpack.c.h.b16 %v15
  %v44 = vpack.c.b16 %v42, %v42
  %v45 = vpack.c.b16 %v43, %v43
  %v65 = vunpack.c.l.b16 %v16
  %v66 = vunpack.c.l.b16 %v17
  %v67 = vunpack.c.l.b16 %v18
  %v68 = vunpack.c.l.b16 %v19
  %v69 = vunpack.c.l.b16 %v20
  %v70 = vunpack.c.l.b16 %v21
  %v71 = vunpack.c.l.b16 %v22
  %v72 = vunpack.c.l.b16 %v23
  %v73 = vunpack.c.l.b16 %v24
  %v74 = vunpack.c.l.b16 %v25
  %v75 = vunpack.c.l.b16 %v26
  %v76 = vunpack.c.l.b16 %v27
  %v77 = vunpack.c.l.b16 %v28
  %v78 = vunpack.c.l.b16 %v29
  %v79 = vunpack.c.l.b16 %v30
  %v80 = vunpack.c.l.b16 %v31
  %v81 = vunpack.c.l.b16 %v32
  %v82 = vunpack.c.l.b16 %v33
  %v83 = vpack.c.b16 %v66, %v65
  %v84 = vpack.c.b16 %v68, %v67
  %v85 = vpack.c.b16 %v70, %v69
  %v86 = vpack.c.b16 %v72, %v71
  %v87 = vpack.c.b16 %v74, %v73
  %v88 = vpack.c.b16 %v76, %v75
  %v89 = vpack.c.b16 %v78, %v77
  %v90 = vpack.c.b16 %v80, %v79
  %v91 = vpack.c.b16 %v82, %v81
  %vm101 = vcmask 130048
  %v103 = vsel %vm101, %v45, 0
  %105 = vmatprep.subr.bf16.mxu0 0
  %106 = vmatpush1.bf16.msra.mxu0 %v83
  %107 = vmatprep.subr.bf16.mxu0 0
  %108 = vmatpush1.bf16.msra.mxu0 %v84
  %109 = vmatprep.subr.bf16.mxu0 0
  %110 = vmatpush1.bf16.msra.mxu0 %v85
  %111 = vmatprep.subr.bf16.mxu0 0
  %112 = vmatpush1.bf16.msra.mxu0 %v86
  %113 = vmatprep.subr.bf16.mxu0 0
  %114 = vmatpush1.bf16.msra.mxu0 %v87
  %115 = vmatprep.subr.bf16.mxu0 0
  %116 = vmatpush1.bf16.msra.mxu0 %v88
  %117 = vmatprep.subr.bf16.mxu0 0
  %118 = vmatpush1.bf16.msra.mxu0 %v89
  %119 = vmatprep.subr.bf16.mxu0 0
  %120 = vmatpush1.bf16.msra.mxu0 %v90
  %121 = vmatprep.subr.bf16.mxu0 0
  %122 = vmatpush1.bf16.msra.mxu0 %v91
  %123 = vmatprep.subr.bf16.mxu0 0
  %124 = vmatpush1.bf16.msra.mxu0 0
  %125 = vmatprep.subr.bf16.mxu0 0
  %126 = vmatpush1.bf16.msra.mxu0 0
  %127 = vmatprep.subr.bf16.mxu0 0
  %128 = vmatpush1.bf16.msra.mxu0 0
  %129 = vmatprep.subr.bf16.mxu0 0
  %130 = vmatpush1.bf16.msra.mxu0 0
  %131 = vmatprep.subr.bf16.mxu0 0
  %132 = vmatpush1.bf16.msra.mxu0 0
  %133 = vmatprep.subr.bf16.mxu0 0
  %134 = vmatpush1.bf16.msra.mxu0 0
  %135 = vmatprep.subr.bf16.mxu0 0
  %136 = vmatpush1.bf16.msra.mxu0 0
  %137 = vmatprep.mubr.bf16.mxu0 %v103
  %138 = vmatmul.mubr.bf16.gmra.mrb[0].mxu0 %v44
  %v139 = vpop.f32.mrb[0].mxu0
  %v140 = vadd.f32 %v39, %v139
  %v141 = vpop.f32.mrb[0].mxu0
  %v142 = vpop.f32.mrb[0].mxu0
  %v143 = vpop.f32.mrb[0].mxu0
  %144 = vdwg.mxu0
  %v145 = vmax.f32 %v140, 0.0
  %146 = vst [vmem:[%s3] sm:$0xff] %v145
  // Predicated region
  $region14: #{_lambda_.32} parent=0 // pred_check
    _
  $region15: #{_lambda_.32} parent=0 // pred_check_branch
    %148 = sbr.rel (0) target = $region17
  $region16: #{_lambda_.32} parent=0 // pred_region
    _
  $region17: #{_lambda_.32} parent=0 // pred_fallthru
    _
  // Predicated region
  $region18: #{_lambda_.32} parent=0 // pred_check
    _
  $region19: #{_lambda_.32} parent=0 // pred_check_branch
    %150 = sbr.rel (0) target = $region21
  $region20: #{_lambda_.32} parent=0 // pred_region
    _
  $region21: #{_lambda_.32} parent=0 // pred_fallthru
    _

// kernel: _lambda_.33
$region0: #{_lambda_.33}
  #allocation0 [shape = 'u32[]', space=smem, size = 0x4, offset = 0x4, fixed_abs, tag = 'smem constant byte address 0x4 - core index']
  #allocation1 [shape = 'u32[144,128]{1,0:T(1,128)}', space=vmem, size = 0x12000, scoped, tag = 'internal scratch']
  %s0 = inlined_call_operand.vmem [shape: bf16[8,72], index: 0, kind: input, shape index: {}]
  %s1 = inlined_call_operand.vmem [shape: bf16[72,128], index: 1, kind: input, shape index: {}]
  %s2 = inlined_call_operand.vmem [shape: f32[1,128], index: 2, kind: input, shape index: {}]
  %s3 = inlined_call_operand.vmem [shape: f32[8,128], index: 3, kind: output, shape index: {}]
  %s4 = sld [smem:[#allocation0]]
  $region22: #{_lambda_.33} parent=0
    _
  %s6 = ssub.s32 1, %s4
  %s7 = scalar_select 0, %s6, %s4
  // Predicated region
  $region2: #{_lambda_.33} parent=0 // pred_check
    _
  $region3: #{_lambda_.33} parent=0 // pred_check_branch
    %9 = sbr.rel (0) target = $region5
  $region4: #{_lambda_.33} parent=0 // pred_region
    _
  $region5: #{_lambda_.33} parent=0 // pred_fallthru
    _
  // Predicated region
  $region6: #{_lambda_.33} parent=0 // pred_check
    _
  $region7: #{_lambda_.33} parent=0 // pred_check_branch
    %11 = sbr.rel (0) target = $region9
  $region8: #{_lambda_.33} parent=0 // pred_region
    _
  $region9: #{_lambda_.33} parent=0 // pred_fallthru
    _
  // Predicated region
  $region10: #{_lambda_.33} parent=0 // pred_check
    _
  $region11: #{_lambda_.33} parent=0 // pred_check_branch
    %13 = sbr.rel (0) target = $region13
  $region12: #{_lambda_.33} parent=0 // pred_region
    _
  $region13: #{_lambda_.33} parent=0 // pred_fallthru
    _
  %v15 = vld [vmem:[%s0] sm:$0xf]
  %v16 = vld [vmem:[%s1] sm:$0xf]
  %v17 = vld [vmem:[%s1 + $0x4] sm:$0xf]
  %v18 = vld [vmem:[%s1 + $0x8] sm:$0xf]
  %v19 = vld [vmem:[%s1 + $0xc] sm:$0xf]
  %v20 = vld [vmem:[%s1 + $0x10] sm:$0xf]
  %v21 = vld [vmem:[%s1 + $0x14] sm:$0xf]
  %v22 = vld [vmem:[%s1 + $0x18] sm:$0xf]
  %v23 = vld [vmem:[%s1 + $0x1c] sm:$0xf]
  %v24 = vld [vmem:[%s1 + $0x20] sm:$0xf]
  %v25 = vld [vmem:[%s2] sm:$0x1]
  %v27 = vlaneseq
  %v28 = vshrl.u32 %v27, 7
  %v29 = vsub.s32 0, %v28
  %v30 = vrot.slane %v25, %v29
  %v41 = vunpack.c.l.b16 %v16
  %v42 = vunpack.c.l.b16 %v17
  %v43 = vunpack.c.l.b16 %v18
  %v44 = vunpack.c.l.b16 %v19
  %v45 = vunpack.c.l.b16 %v20
  %v46 = vunpack.c.l.b16 %v21
  %v47 = vunpack.c.l.b16 %v22
  %v48 = vunpack.c.l.b16 %v23
  %v49 = vunpack.c.l.b16 %v24
  %v50 = vpack.c.b16 %v42, %v41
  %v51 = vpack.c.b16 %v44, %v43
  %v52 = vpack.c.b16 %v46, %v45
  %v53 = vpack.c.b16 %v48, %v47
  %v54 = vpack.c.b16 %v49, %v49
  %vm59 = vcmask 588800
  %v61 = vsel %vm59, %v15, 0
  %vm63 = vcmask 1043456
  %v65 = vsel %vm63, %v54, 0
  %67 = vmatprep.subr.bf16.mxu0 0
  %68 = vmatpush1.bf16.msra.mxu0 %v50
  %69 = vmatprep.subr.bf16.mxu0 0
  %70 = vmatpush1.bf16.msra.mxu0 %v51
  %71 = vmatprep.subr.bf16.mxu0 0
  %72 = vmatpush1.bf16.msra.mxu0 %v52
  %73 = vmatprep.subr.bf16.mxu0 0
  %74 = vmatpush1.bf16.msra.mxu0 %v53
  %75 = vmatprep.subr.bf16.mxu0 0
  %76 = vmatpush1.bf16.msra.mxu0 %v65
  %77 = vmatprep.subr.bf16.mxu0 0
  %78 = vmatpush1.bf16.msra.mxu0 0
  %79 = vmatprep.subr.bf16.mxu0 0
  %80 = vmatpush1.bf16.msra.mxu0 0
  %81 = vmatprep.subr.bf16.mxu0 0
  %82 = vmatpush1.bf16.msra.mxu0 0
  %83 = vmatprep.subr.bf16.mxu0 0
  %84 = vmatpush1.bf16.msra.mxu0 0
  %85 = vmatprep.subr.bf16.mxu0 0
  %86 = vmatpush1.bf16.msra.mxu0 0
  %87 = vmatprep.subr.bf16.mxu0 0
  %88 = vmatpush1.bf16.msra.mxu0 0
  %89 = vmatprep.subr.bf16.mxu0 0
  %90 = vmatpush1.bf16.msra.mxu0 0
  %91 = vmatprep.subr.bf16.mxu0 0
  %92 = vmatpush1.bf16.msra.mxu0 0
  %93 = vmatprep.subr.bf16.mxu0 0
  %94 = vmatpush1.bf16.msra.mxu0 0
  %95 = vmatprep.subr.bf16.mxu0 0
  %96 = vmatpush1.bf16.msra.mxu0 0
  %97 = vmatprep.subr.bf16.mxu0 0
  %98 = vmatpush1.bf16.msra.mxu0 0
  %99 = vmatprep.mubr.bf16.mxu0 0
  %100 = vmatmul.mubr.bf16.gmra.mrb[0].mxu0 %v61
  %v101 = vpop.f32.mrb[0].mxu0
  %v102 = vadd.f32 %v30, %v101
  %v103 = vpop.f32.mrb[0].mxu0
  %v104 = vpop.f32.mrb[0].mxu0
  %v105 = vpop.f32.mrb[0].mxu0
  %106 = vdwg.mxu0
  %v107 = vmax.f32 %v102, 0.0
  %108 = vst [vmem:[%s3] sm:$0xff] %v107
  // Predicated region
  $region14: #{_lambda_.33} parent=0 // pred_check
    _
  $region15: #{_lambda_.33} parent=0 // pred_check_branch
    %110 = sbr.rel (0) target = $region17
  $region16: #{_lambda_.33} parent=0 // pred_region
    _
  $region17: #{_lambda_.33} parent=0 // pred_fallthru
    _
  // Predicated region
  $region18: #{_lambda_.33} parent=0 // pred_check
    _
  $region19: #{_lambda_.33} parent=0 // pred_check_branch
    %112 = sbr.rel (0) target = $region21
  $region20: #{_lambda_.33} parent=0 // pred_region
    _
  $region21: #{_lambda_.33} parent=0 // pred_fallthru
    _

// kernel: _lambda_.34
$region0: #{_lambda_.34}
  #allocation0 [shape = 'u32[]', space=smem, size = 0x4, offset = 0x4, fixed_abs, tag = 'smem constant byte address 0x4 - core index']
  #allocation1 [shape = 'u32[144,128]{1,0:T(1,128)}', space=vmem, size = 0x12000, scoped, tag = 'internal scratch']
  %s0 = inlined_call_operand.vmem [shape: bf16[8,64], index: 0, kind: input, shape index: {}]
  %s1 = inlined_call_operand.vmem [shape: bf16[64,128], index: 1, kind: input, shape index: {}]
  %s2 = inlined_call_operand.vmem [shape: f32[1,128], index: 2, kind: input, shape index: {}]
  %s3 = inlined_call_operand.vmem [shape: f32[8,128], index: 3, kind: output, shape index: {}]
  %s4 = sld [smem:[#allocation0]]
  $region22: #{_lambda_.34} parent=0
    _
  %s6 = ssub.s32 1, %s4
  %s7 = scalar_select 0, %s6, %s4
  // Predicated region
  $region2: #{_lambda_.34} parent=0 // pred_check
    _
  $region3: #{_lambda_.34} parent=0 // pred_check_branch
    %9 = sbr.rel (0) target = $region5
  $region4: #{_lambda_.34} parent=0 // pred_region
    _
  $region5: #{_lambda_.34} parent=0 // pred_fallthru
    _
  // Predicated region
  $region6: #{_lambda_.34} parent=0 // pred_check
    _
  $region7: #{_lambda_.34} parent=0 // pred_check_branch
    %11 = sbr.rel (0) target = $region9
  $region8: #{_lambda_.34} parent=0 // pred_region
    _
  $region9: #{_lambda_.34} parent=0 // pred_fallthru
    _
  // Predicated region
  $region10: #{_lambda_.34} parent=0 // pred_check
    _
  $region11: #{_lambda_.34} parent=0 // pred_check_branch
    %13 = sbr.rel (0) target = $region13
  $region12: #{_lambda_.34} parent=0 // pred_region
    _
  $region13: #{_lambda_.34} parent=0 // pred_fallthru
    _
  %v15 = vld [vmem:[%s0] sm:$0xf]
  %v16 = vld [vmem:[%s1] sm:$0xf]
  %v17 = vld [vmem:[%s1 + $0x4] sm:$0xf]
  %v18 = vld [vmem:[%s1 + $0x8] sm:$0xf]
  %v19 = vld [vmem:[%s1 + $0xc] sm:$0xf]
  %v20 = vld [vmem:[%s1 + $0x10] sm:$0xf]
  %v21 = vld [vmem:[%s1 + $0x14] sm:$0xf]
  %v22 = vld [vmem:[%s1 + $0x18] sm:$0xf]
  %v23 = vld [vmem:[%s1 + $0x1c] sm:$0xf]
  %v24 = vld [vmem:[%s2] sm:$0x1]
  %v26 = vlaneseq
  %v27 = vshrl.u32 %v26, 7
  %v28 = vsub.s32 0, %v27
  %v29 = vrot.slane %v24, %v28
  %v39 = vunpack.c.l.b16 %v16
  %v40 = vunpack.c.l.b16 %v17
  %v41 = vunpack.c.l.b16 %v18
  %v42 = vunpack.c.l.b16 %v19
  %v43 = vunpack.c.l.b16 %v20
  %v44 = vunpack.c.l.b16 %v21
  %v45 = vunpack.c.l.b16 %v22
  %v46 = vunpack.c.l.b16 %v23
  %v47 = vpack.c.b16 %v40, %v39
  %v48 = vpack.c.b16 %v42, %v41
  %v49 = vpack.c.b16 %v44, %v43
  %v50 = vpack.c.b16 %v46, %v45
  %vm55 = vcmask 523264
  %v57 = vsel %vm55, %v15, 0
  %59 = vmatprep.subr.bf16.mxu0 0
  %60 = vmatpush1.bf16.msra.mxu0 %v47
  %61 = vmatprep.subr.bf16.mxu0 0
  %62 = vmatpush1.bf16.msra.mxu0 %v48
  %63 = vmatprep.subr.bf16.mxu0 0
  %64 = vmatpush1.bf16.msra.mxu0 %v49
  %65 = vmatprep.subr.bf16.mxu0 0
  %66 = vmatpush1.bf16.msra.mxu0 %v50
  %67 = vmatprep.subr.bf16.mxu0 0
  %68 = vmatpush1.bf16.msra.mxu0 0
  %69 = vmatprep.subr.bf16.mxu0 0
  %70 = vmatpush1.bf16.msra.mxu0 0
  %71 = vmatprep.subr.bf16.mxu0 0
  %72 = vmatpush1.bf16.msra.mxu0 0
  %73 = vmatprep.subr.bf16.mxu0 0
  %74 = vmatpush1.bf16.msra.mxu0 0
  %75 = vmatprep.subr.bf16.mxu0 0
  %76 = vmatpush1.bf16.msra.mxu0 0
  %77 = vmatprep.subr.bf16.mxu0 0
  %78 = vmatpush1.bf16.msra.mxu0 0
  %79 = vmatprep.subr.bf16.mxu0 0
  %80 = vmatpush1.bf16.msra.mxu0 0
  %81 = vmatprep.subr.bf16.mxu0 0
  %82 = vmatpush1.bf16.msra.mxu0 0
  %83 = vmatprep.subr.bf16.mxu0 0
  %84 = vmatpush1.bf16.msra.mxu0 0
  %85 = vmatprep.subr.bf16.mxu0 0
  %86 = vmatpush1.bf16.msra.mxu0 0
  %87 = vmatprep.subr.bf16.mxu0 0
  %88 = vmatpush1.bf16.msra.mxu0 0
  %89 = vmatprep.subr.bf16.mxu0 0
  %90 = vmatpush1.bf16.msra.mxu0 0
  %91 = vmatprep.mubr.bf16.mxu0 0
  %92 = vmatmul.mubr.bf16.gmra.mrb[0].mxu0 %v57
  %v93 = vpop.f32.mrb[0].mxu0
  %v94 = vadd.f32 %v29, %v93
  %v95 = vpop.f32.mrb[0].mxu0
  %v96 = vpop.f32.mrb[0].mxu0
  %v97 = vpop.f32.mrb[0].mxu0
  %98 = vdwg.mxu0
  %v99 = vmax.f32 %v94, 0.0
  %100 = vst [vmem:[%s3] sm:$0xff] %v99
  // Predicated region
  $region14: #{_lambda_.34} parent=0 // pred_check
    _
  $region15: #{_lambda_.34} parent=0 // pred_check_branch
    %102 = sbr.rel (0) target = $region17
  $region16: #{_lambda_.34} parent=0 // pred_region
    _
  $region17: #{_lambda_.34} parent=0 // pred_fallthru
    _
  // Predicated region
  $region18: #{_lambda_.34} parent=0 // pred_check
    _
  $region19: #{_lambda_.34} parent=0 // pred_check_branch
    %104 = sbr.rel (0) target = $region21
  $region20: #{_lambda_.34} parent=0 // pred_region
    _
  $region21: #{_lambda_.34} parent=0 // pred_fallthru
    _

// kernel: _lambda_.36
$region0: #{_lambda_.36}
  #allocation0 [shape = 'u32[]', space=smem, size = 0x4, offset = 0x4, fixed_abs, tag = 'smem constant byte address 0x4 - core index']
  #allocation1 [shape = 'u32[144,128]{1,0:T(1,128)}', space=vmem, size = 0x12000, scoped, tag = 'internal scratch']
  %s0 = inlined_call_operand.vmem [shape: f32[9,8,64], index: 0, kind: input, shape index: {}]
  %s1 = inlined_call_operand.vmem [shape: f32[9,64], index: 1, kind: input, shape index: {}]
  %s2 = inlined_call_operand.vmem [shape: f32[1,64], index: 2, kind: input, shape index: {}]
  %s3 = inlined_call_operand.vmem [shape: f32[8,64], index: 3, kind: output, shape index: {}]
  %s4 = sld [smem:[#allocation0]]
  $region22: #{_lambda_.36} parent=0
    _
  %s6 = ssub.s32 1, %s4
  %s7 = scalar_select 0, %s6, %s4
  // Predicated region
  $region2: #{_lambda_.36} parent=0 // pred_check
    _
  $region3: #{_lambda_.36} parent=0 // pred_check_branch
    %9 = sbr.rel (0) target = $region5
  $region4: #{_lambda_.36} parent=0 // pred_region
    _
  $region5: #{_lambda_.36} parent=0 // pred_fallthru
    _
  // Predicated region
  $region6: #{_lambda_.36} parent=0 // pred_check
    _
  $region7: #{_lambda_.36} parent=0 // pred_check_branch
    %11 = sbr.rel (0) target = $region9
  $region8: #{_lambda_.36} parent=0 // pred_region
    _
  $region9: #{_lambda_.36} parent=0 // pred_fallthru
    _
  // Predicated region
  $region10: #{_lambda_.36} parent=0 // pred_check
    _
  $region11: #{_lambda_.36} parent=0 // pred_check_branch
    %13 = sbr.rel (0) target = $region13
  $region12: #{_lambda_.36} parent=0 // pred_region
    _
  $region13: #{_lambda_.36} parent=0 // pred_fallthru
    _
  %v14 = vld [vmem:[%s0] sm:$0xff]
  %v15 = vld [vmem:[%s1] sm:$0x1]
  %v16 = vlaneseq
  %v17 = vshrl.u32 %v16, 7
  %v18 = vsub.s32 0, %v17
  %v19 = vrot.slane %v15, %v18
  %v20 = vmul.f32 %v14, %v19
  %s21 = scalar_lea.vmem %s0, 8
  %v22 = vld [vmem:[%s21] sm:$0xff]
  %v23 = vld [vmem:[%s1 + $0x1] sm:$0x1]
  %v24 = vlaneseq
  %v25 = vshrl.u32 %v24, 7
  %v26 = vsub.s32 0, %v25
  %v27 = vrot.slane %v23, %v26
  %v28 = vmul.f32 %v22, %v27
  %v29 = vadd.f32 %v20, %v28
  %s30 = scalar_lea.vmem %s0, 16
  %v31 = vld [vmem:[%s30] sm:$0xff]
  %v32 = vld [vmem:[%s1 + $0x2] sm:$0x1]
  %v33 = vlaneseq
  %v34 = vshrl.u32 %v33, 7
  %v35 = vsub.s32 0, %v34
  %v36 = vrot.slane %v32, %v35
  %v37 = vmul.f32 %v31, %v36
  %v38 = vadd.f32 %v29, %v37
  %s39 = scalar_lea.vmem %s0, 24
  %v40 = vld [vmem:[%s39] sm:$0xff]
  %v41 = vld [vmem:[%s1 + $0x3] sm:$0x1]
  %v42 = vlaneseq
  %v43 = vshrl.u32 %v42, 7
  %v44 = vsub.s32 0, %v43
  %v45 = vrot.slane %v41, %v44
  %v46 = vmul.f32 %v40, %v45
  %v47 = vadd.f32 %v38, %v46
  %s48 = scalar_lea.vmem %s0, 32
  %v49 = vld [vmem:[%s48] sm:$0xff]
  %v50 = vld [vmem:[%s1 + $0x4] sm:$0x1]
  %v51 = vlaneseq
  %v52 = vshrl.u32 %v51, 7
  %v53 = vsub.s32 0, %v52
  %v54 = vrot.slane %v50, %v53
  %v55 = vmul.f32 %v49, %v54
  %v56 = vadd.f32 %v47, %v55
  %s57 = scalar_lea.vmem %s0, 40
  %v58 = vld [vmem:[%s57] sm:$0xff]
  %v59 = vld [vmem:[%s1 + $0x5] sm:$0x1]
  %v60 = vlaneseq
  %v61 = vshrl.u32 %v60, 7
  %v62 = vsub.s32 0, %v61
  %v63 = vrot.slane %v59, %v62
  %v64 = vmul.f32 %v58, %v63
  %v65 = vadd.f32 %v56, %v64
  %s66 = scalar_lea.vmem %s0, 48
  %v67 = vld [vmem:[%s66] sm:$0xff]
  %v68 = vld [vmem:[%s1 + $0x6] sm:$0x1]
  %v69 = vlaneseq
  %v70 = vshrl.u32 %v69, 7
  %v71 = vsub.s32 0, %v70
  %v72 = vrot.slane %v68, %v71
  %v73 = vmul.f32 %v67, %v72
  %v74 = vadd.f32 %v65, %v73
  %s75 = scalar_lea.vmem %s0, 56
  %v76 = vld [vmem:[%s75] sm:$0xff]
  %v77 = vld [vmem:[%s1 + $0x7] sm:$0x1]
  %v78 = vlaneseq
  %v79 = vshrl.u32 %v78, 7
  %v80 = vsub.s32 0, %v79
  %v81 = vrot.slane %v77, %v80
  %v82 = vmul.f32 %v76, %v81
  %v83 = vadd.f32 %v74, %v82
  %s84 = scalar_lea.vmem %s0, 64
  %v85 = vld [vmem:[%s84] sm:$0xff]
  %v86 = vld [vmem:[%s1 + $0x8] sm:$0x1]
  %v87 = vlaneseq
  %v88 = vshrl.u32 %v87, 7
  %v89 = vsub.s32 0, %v88
  %v90 = vrot.slane %v86, %v89
  %v91 = vmul.f32 %v85, %v90
  %v92 = vadd.f32 %v83, %v91
  %v93 = vld [vmem:[%s2] sm:$0x1]
  %v95 = vlaneseq
  %v96 = vshrl.u32 %v95, 7
  %v97 = vsub.s32 0, %v96
  %v98 = vrot.slane %v93, %v97
  %v100 = vadd.f32 %v92, %v98
  %vm101 = vcmask 523264
  %102 = vst.msk [vmem:[%s3] sm:$0xff] %vm101, %v100
  // Predicated region
  $region14: #{_lambda_.36} parent=0 // pred_check
    _
  $region15: #{_lambda_.36} parent=0 // pred_check_branch
    %104 = sbr.rel (0) target = $region17
  $region16: #{_lambda_.36} parent=0 // pred_region
    _
  $region17: #{_lambda_.36} parent=0 // pred_fallthru
    _
  // Predicated region
  $region18: #{_lambda_.36} parent=0 // pred_check
    _
  $region19: #{_lambda_.36} parent=0 // pred_check_branch
    %106 = sbr.rel (0) target = $region21
  $region20: #{_lambda_.36} parent=0 // pred_region
    _
  $region21: #{_lambda_.36} parent=0 // pred_fallthru
    _

// kernel: _lambda_.37
$region0: #{_lambda_.37}
  #allocation0 [shape = 'u32[]', space=smem, size = 0x4, offset = 0x4, fixed_abs, tag = 'smem constant byte address 0x4 - core index']
  #allocation1 [shape = 'u32[144,128]{1,0:T(1,128)}', space=vmem, size = 0x12000, scoped, tag = 'internal scratch']
  %s0 = inlined_call_operand.vmem [shape: bf16[8,576], index: 0, kind: input, shape index: {}]
  %s1 = inlined_call_operand.vmem [shape: bf16[576,128], index: 1, kind: input, shape index: {}]
  %s2 = inlined_call_operand.vmem [shape: f32[1,128], index: 2, kind: input, shape index: {}]
  %s3 = inlined_call_operand.vmem [shape: f32[8,128], index: 3, kind: output, shape index: {}]
  %s4 = sld [smem:[#allocation0]]
  $region22: #{_lambda_.37} parent=0
    _
  %s6 = ssub.s32 1, %s4
  %s7 = scalar_select 0, %s6, %s4
  // Predicated region
  $region2: #{_lambda_.37} parent=0 // pred_check
    _
  $region3: #{_lambda_.37} parent=0 // pred_check_branch
    %9 = sbr.rel (0) target = $region5
  $region4: #{_lambda_.37} parent=0 // pred_region
    _
  $region5: #{_lambda_.37} parent=0 // pred_fallthru
    _
  // Predicated region
  $region6: #{_lambda_.37} parent=0 // pred_check
    _
  $region7: #{_lambda_.37} parent=0 // pred_check_branch
    %11 = sbr.rel (0) target = $region9
  $region8: #{_lambda_.37} parent=0 // pred_region
    _
  $region9: #{_lambda_.37} parent=0 // pred_fallthru
    _
  // Predicated region
  $region10: #{_lambda_.37} parent=0 // pred_check
    _
  $region11: #{_lambda_.37} parent=0 // pred_check_branch
    %13 = sbr.rel (0) target = $region13
  $region12: #{_lambda_.37} parent=0 // pred_region
    _
  $region13: #{_lambda_.37} parent=0 // pred_fallthru
    _
  %v15 = vld [vmem:[%s0] sm:$0xff]
  %v16 = vld [vmem:[%s0 + $0x8] sm:$0xff]
  %v17 = vld [vmem:[%s0 + $0x10] sm:$0xf]
  %v18 = vld [vmem:[%s1] sm:$0xf]
  %v19 = vld [vmem:[%s1 + $0x4] sm:$0xf]
  %v20 = vld [vmem:[%s1 + $0x8] sm:$0xf]
  %v21 = vld [vmem:[%s1 + $0xc] sm:$0xf]
  %v22 = vld [vmem:[%s1 + $0x10] sm:$0xf]
  %v23 = vld [vmem:[%s1 + $0x14] sm:$0xf]
  %v24 = vld [vmem:[%s1 + $0x18] sm:$0xf]
  %v25 = vld [vmem:[%s1 + $0x1c] sm:$0xf]
  %v26 = vld [vmem:[%s1 + $0x20] sm:$0xf]
  %v27 = vld [vmem:[%s1 + $0x24] sm:$0xf]
  %v28 = vld [vmem:[%s1 + $0x28] sm:$0xf]
  %v29 = vld [vmem:[%s1 + $0x2c] sm:$0xf]
  %v30 = vld [vmem:[%s1 + $0x30] sm:$0xf]
  %v31 = vld [vmem:[%s1 + $0x34] sm:$0xf]
  %v32 = vld [vmem:[%s1 + $0x38] sm:$0xf]
  %v33 = vld [vmem:[%s1 + $0x3c] sm:$0xf]
  %v34 = vld [vmem:[%s1 + $0x40] sm:$0xf]
  %v35 = vld [vmem:[%s1 + $0x44] sm:$0xf]
  %v36 = vld [vmem:[%s1 + $0x48] sm:$0xf]
  %v37 = vld [vmem:[%s1 + $0x4c] sm:$0xf]
  %v38 = vld [vmem:[%s1 + $0x50] sm:$0xf]
  %v39 = vld [vmem:[%s1 + $0x54] sm:$0xf]
  %v40 = vld [vmem:[%s1 + $0x58] sm:$0xf]
  %v41 = vld [vmem:[%s1 + $0x5c] sm:$0xf]
  %v42 = vld [vmem:[%s1 + $0x60] sm:$0xf]
  %v43 = vld [vmem:[%s1 + $0x64] sm:$0xf]
  %v44 = vld [vmem:[%s1 + $0x68] sm:$0xf]
  %v45 = vld [vmem:[%s1 + $0x6c] sm:$0xf]
  %v46 = vld [vmem:[%s1 + $0x70] sm:$0xf]
  %v47 = vld [vmem:[%s1 + $0x74] sm:$0xf]
  %v48 = vld [vmem:[%s1 + $0x78] sm:$0xf]
  %v49 = vld [vmem:[%s1 + $0x7c] sm:$0xf]
  %v50 = vld [vmem:[%s1 + $0x80] sm:$0xf]
  %v51 = vld [vmem:[%s1 + $0x84] sm:$0xf]
  %v52 = vld [vmem:[%s1 + $0x88] sm:$0xf]
  %v53 = vld [vmem:[%s1 + $0x8c] sm:$0xf]
  %v54 = vld [vmem:[%s1 + $0x90] sm:$0xf]
  %v55 = vld [vmem:[%s1 + $0x94] sm:$0xf]
  %v56 = vld [vmem:[%s1 + $0x98] sm:$0xf]
  %v57 = vld [vmem:[%s1 + $0x9c] sm:$0xf]
  %v58 = vld [vmem:[%s1 + $0xa0] sm:$0xf]
  %v59 = vld [vmem:[%s1 + $0xa4] sm:$0xf]
  %v60 = vld [vmem:[%s1 + $0xa8] sm:$0xf]
  %v61 = vld [vmem:[%s1 + $0xac] sm:$0xf]
  %v62 = vld [vmem:[%s1 + $0xb0] sm:$0xf]
  %v63 = vld [vmem:[%s1 + $0xb4] sm:$0xf]
  %v64 = vld [vmem:[%s1 + $0xb8] sm:$0xf]
  %v65 = vld [vmem:[%s1 + $0xbc] sm:$0xf]
  %v66 = vld [vmem:[%s1 + $0xc0] sm:$0xf]
  %v67 = vld [vmem:[%s1 + $0xc4] sm:$0xf]
  %v68 = vld [vmem:[%s1 + $0xc8] sm:$0xf]
  %v69 = vld [vmem:[%s1 + $0xcc] sm:$0xf]
  %v70 = vld [vmem:[%s1 + $0xd0] sm:$0xf]
  %v71 = vld [vmem:[%s1 + $0xd4] sm:$0xf]
  %v72 = vld [vmem:[%s1 + $0xd8] sm:$0xf]
  %v73 = vld [vmem:[%s1 + $0xdc] sm:$0xf]
  %v74 = vld [vmem:[%s1 + $0xe0] sm:$0xf]
  %v75 = vld [vmem:[%s1 + $0xe4] sm:$0xf]
  %v76 = vld [vmem:[%s1 + $0xe8] sm:$0xf]
  %v77 = vld [vmem:[%s1 + $0xec] sm:$0xf]
  %v78 = vld [vmem:[%s1 + $0xf0] sm:$0xf]
  %v79 = vld [vmem:[%s1 + $0xf4] sm:$0xf]
  %v80 = vld [vmem:[%s1 + $0xf8] sm:$0xf]
  %v81 = vld [vmem:[%s1 + $0xfc] sm:$0xf]
  %v82 = vld [vmem:[%s1 + $0x100] sm:$0xf]
  %v83 = vld [vmem:[%s1 + $0x104] sm:$0xf]
  %v84 = vld [vmem:[%s1 + $0x108] sm:$0xf]
  %v85 = vld [vmem:[%s1 + $0x10c] sm:$0xf]
  %v86 = vld [vmem:[%s1 + $0x110] sm:$0xf]
  %v87 = vld [vmem:[%s1 + $0x114] sm:$0xf]
  %v88 = vld [vmem:[%s1 + $0x118] sm:$0xf]
  %v89 = vld [vmem:[%s1 + $0x11c] sm:$0xf]
  %v90 = vld [vmem:[%s2] sm:$0x1]
  %v92 = vlaneseq
  %v93 = vshrl.u32 %v92, 7
  %v94 = vsub.s32 0, %v93
  %v95 = vrot.slane %v90, %v94
  %v100 = vunpack.c.l.b16 %v15
  %v101 = vunpack.c.h.b16 %v15
  %v102 = vunpack.c.l.b16 %v16
  %v103 = vunpack.c.h.b16 %v16
  %v104 = vunpack.c.l.b16 %v17
  %v105 = vpack.c.b16 %v100, %v100
  %v106 = vpack.c.b16 %v101, %v101
  %v107 = vpack.c.b16 %v102, %v102
  %v108 = vpack.c.b16 %v103, %v103
  %v109 = vpack.c.b16 %v104, %v104
  %v186 = vunpack.c.l.b16 %v18
  %v187 = vunpack.c.l.b16 %v19
  %v188 = vunpack.c.l.b16 %v20
  %v189 = vunpack.c.l.b16 %v21
  %v190 = vunpack.c.l.b16 %v22
  %v191 = vunpack.c.l.b16 %v23
  %v192 = vunpack.c.l.b16 %v24
  %v193 = vunpack.c.l.b16 %v25
  %v194 = vunpack.c.l.b16 %v26
  %v195 = vunpack.c.l.b16 %v27
  %v196 = vunpack.c.l.b16 %v28
  %v197 = vunpack.c.l.b16 %v29
  %v198 = vunpack.c.l.b16 %v30
  %v199 = vunpack.c.l.b16 %v31
  %v200 = vunpack.c.l.b16 %v32
  %v201 = vunpack.c.l.b16 %v33
  %v202 = vunpack.c.l.b16 %v34
  %v203 = vunpack.c.l.b16 %v35
  %v204 = vunpack.c.l.b16 %v36
  %v205 = vunpack.c.l.b16 %v37
  %v206 = vunpack.c.l.b16 %v38
  %v207 = vunpack.c.l.b16 %v39
  %v208 = vunpack.c.l.b16 %v40
  %v209 = vunpack.c.l.b16 %v41
  %v210 = vunpack.c.l.b16 %v42
  %v211 = vunpack.c.l.b16 %v43
  %v212 = vunpack.c.l.b16 %v44
  %v213 = vunpack.c.l.b16 %v45
  %v214 = vunpack.c.l.b16 %v46
  %v215 = vunpack.c.l.b16 %v47
  %v216 = vunpack.c.l.b16 %v48
  %v217 = vunpack.c.l.b16 %v49
  %v218 = vunpack.c.l.b16 %v50
  %v219 = vunpack.c.l.b16 %v51
  %v220 = vunpack.c.l.b16 %v52
  %v221 = vunpack.c.l.b16 %v53
  %v222 = vunpack.c.l.b16 %v54
  %v223 = vunpack.c.l.b16 %v55
  %v224 = vunpack.c.l.b16 %v56
  %v225 = vunpack.c.l.b16 %v57
  %v226 = vunpack.c.l.b16 %v58
  %v227 = vunpack.c.l.b16 %v59
  %v228 = vunpack.c.l.b16 %v60
  %v229 = vunpack.c.l.b16 %v61
  %v230 = vunpack.c.l.b16 %v62
  %v231 = vunpack.c.l.b16 %v63
  %v232 = vunpack.c.l.b16 %v64
  %v233 = vunpack.c.l.b16 %v65
  %v234 = vunpack.c.l.b16 %v66
  %v235 = vunpack.c.l.b16 %v67
  %v236 = vunpack.c.l.b16 %v68
  %v237 = vunpack.c.l.b16 %v69
  %v238 = vunpack.c.l.b16 %v70
  %v239 = vunpack.c.l.b16 %v71
  %v240 = vunpack.c.l.b16 %v72
  %v241 = vunpack.c.l.b16 %v73
  %v242 = vunpack.c.l.b16 %v74
  %v243 = vunpack.c.l.b16 %v75
  %v244 = vunpack.c.l.b16 %v76
  %v245 = vunpack.c.l.b16 %v77
  %v246 = vunpack.c.l.b16 %v78
  %v247 = vunpack.c.l.b16 %v79
  %v248 = vunpack.c.l.b16 %v80
  %v249 = vunpack.c.l.b16 %v81
  %v250 = vunpack.c.l.b16 %v82
  %v251 = vunpack.c.l.b16 %v83
  %v252 = vunpack.c.l.b16 %v84
  %v253 = vunpack.c.l.b16 %v85
  %v254 = vunpack.c.l.b16 %v86
  %v255 = vunpack.c.l.b16 %v87
  %v256 = vunpack.c.l.b16 %v88
  %v257 = vunpack.c.l.b16 %v89
  %v258 = vpack.c.b16 %v187, %v186
  %v259 = vpack.c.b16 %v189, %v188
  %v260 = vpack.c.b16 %v191, %v190
  %v261 = vpack.c.b16 %v193, %v192
  %v262 = vpack.c.b16 %v195, %v194
  %v263 = vpack.c.b16 %v197, %v196
  %v264 = vpack.c.b16 %v199, %v198
  %v265 = vpack.c.b16 %v201, %v200
  %v266 = vpack.c.b16 %v203, %v202
  %v267 = vpack.c.b16 %v205, %v204
  %v268 = vpack.c.b16 %v207, %v206
  %v269 = vpack.c.b16 %v209, %v208
  %v270 = vpack.c.b16 %v211, %v210
  %v271 = vpack.c.b16 %v213, %v212
  %v272 = vpack.c.b16 %v215, %v214
  %v273 = vpack.c.b16 %v217, %v216
  %v274 = vpack.c.b16 %v219, %v218
  %v275 = vpack.c.b16 %v221, %v220
  %v276 = vpack.c.b16 %v223, %v222
  %v277 = vpack.c.b16 %v225, %v224
  %v278 = vpack.c.b16 %v227, %v226
  %v279 = vpack.c.b16 %v229, %v228
  %v280 = vpack.c.b16 %v231, %v230
  %v281 = vpack.c.b16 %v233, %v232
  %v282 = vpack.c.b16 %v235, %v234
  %v283 = vpack.c.b16 %v237, %v236
  %v284 = vpack.c.b16 %v239, %v238
  %v285 = vpack.c.b16 %v241, %v240
  %v286 = vpack.c.b16 %v243, %v242
  %v287 = vpack.c.b16 %v245, %v244
  %v288 = vpack.c.b16 %v247, %v246
  %v289 = vpack.c.b16 %v249, %v248
  %v290 = vpack.c.b16 %v251, %v250
  %v291 = vpack.c.b16 %v253, %v252
  %v292 = vpack.c.b16 %v255, %v254
  %v293 = vpack.c.b16 %v257, %v256
  %vm330 = vcmask 523264
  %v332 = vsel %vm330, %v109, 0
  %334 = vmatprep.subr.bf16.mxu0 0
  %335 = vmatpush1.bf16.msra.mxu0 %v258
  %336 = vmatprep.subr.bf16.mxu0 0
  %337 = vmatpush1.bf16.msra.mxu0 %v259
  %338 = vmatprep.subr.bf16.mxu0 0
  %339 = vmatpush1.bf16.msra.mxu0 %v260
  %340 = vmatprep.subr.bf16.mxu0 0
  %341 = vmatpush1.bf16.msra.mxu0 %v261
  %342 = vmatprep.subr.bf16.mxu0 0
  %343 = vmatpush1.bf16.msra.mxu0 %v262
  %344 = vmatprep.subr.bf16.mxu0 0
  %345 = vmatpush1.bf16.msra.mxu0 %v263
  %346 = vmatprep.subr.bf16.mxu0 0
  %347 = vmatpush1.bf16.msra.mxu0 %v264
  %348 = vmatprep.subr.bf16.mxu0 0
  %349 = vmatpush1.bf16.msra.mxu0 %v265
  %350 = vmatprep.subr.bf16.mxu0 0
  %351 = vmatpush1.bf16.msra.mxu0 %v266
  %352 = vmatprep.subr.bf16.mxu0 0
  %353 = vmatpush1.bf16.msra.mxu0 %v267
  %354 = vmatprep.subr.bf16.mxu0 0
  %355 = vmatpush1.bf16.msra.mxu0 %v268
  %356 = vmatprep.subr.bf16.mxu0 0
  %357 = vmatpush1.bf16.msra.mxu0 %v269
  %358 = vmatprep.subr.bf16.mxu0 0
  %359 = vmatpush1.bf16.msra.mxu0 %v270
  %360 = vmatprep.subr.bf16.mxu0 0
  %361 = vmatpush1.bf16.msra.mxu0 %v271
  %362 = vmatprep.subr.bf16.mxu0 0
  %363 = vmatpush1.bf16.msra.mxu0 %v272
  %364 = vmatprep.subr.bf16.mxu0 0
  %365 = vmatpush1.bf16.msra.mxu0 %v273
  %366 = vmatprep.mubr.bf16.mxu0 %v106
  %367 = vmatmul.mubr.bf16.gmra.mrb[0].mxu0 %v105
  %v368 = vpop.f32.mrb[0].mxu0
  %v369 = vadd.f32 %v95, %v368
  %v370 = vpop.f32.mrb[0].mxu0
  %v371 = vpop.f32.mrb[0].mxu0
  %v372 = vpop.f32.mrb[0].mxu0
  %373 = vdwg.mxu0
  %374 = vmatprep.subr.bf16.mxu0 0
  %375 = vmatpush1.bf16.msra.mxu0 %v274
  %376 = vmatprep.subr.bf16.mxu0 0
  %377 = vmatpush1.bf16.msra.mxu0 %v275
  %378 = vmatprep.subr.bf16.mxu0 0
  %379 = vmatpush1.bf16.msra.mxu0 %v276
  %380 = vmatprep.subr.bf16.mxu0 0
  %381 = vmatpush1.bf16.msra.mxu0 %v277
  %382 = vmatprep.subr.bf16.mxu0 0
  %383 = vmatpush1.bf16.msra.mxu0 %v278
  %384 = vmatprep.subr.bf16.mxu0 0
  %385 = vmatpush1.bf16.msra.mxu0 %v279
  %386 = vmatprep.subr.bf16.mxu0 0
  %387 = vmatpush1.bf16.msra.mxu0 %v280
  %388 = vmatprep.subr.bf16.mxu0 0
  %389 = vmatpush1.bf16.msra.mxu0 %v281
  %390 = vmatprep.subr.bf16.mxu0 0
  %391 = vmatpush1.bf16.msra.mxu0 %v282
  %392 = vmatprep.subr.bf16.mxu0 0
  %393 = vmatpush1.bf16.msra.mxu0 %v283
  %394 = vmatprep.subr.bf16.mxu0 0
  %395 = vmatpush1.bf16.msra.mxu0 %v284
  %396 = vmatprep.subr.bf16.mxu0 0
  %397 = vmatpush1.bf16.msra.mxu0 %v285
  %398 = vmatprep.subr.bf16.mxu0 0
  %399 = vmatpush1.bf16.msra.mxu0 %v286
  %400 = vmatprep.subr.bf16.mxu0 0
  %401 = vmatpush1.bf16.msra.mxu0 %v287
  %402 = vmatprep.subr.bf16.mxu0 0
  %403 = vmatpush1.bf16.msra.mxu0 %v288
  %404 = vmatprep.subr.bf16.mxu0 0
  %405 = vmatpush1.bf16.msra.mxu0 %v289
  %406 = vmatprep.mubr.bf16.mxu0 %v108
  %407 = vmatmul.mubr.bf16.gmra.mrb[0].mxu0 %v107
  %v408 = vpop.f32.mrb[0].mxu0
  %v409 = vadd.f32 %v369, %v408
  %v410 = vpop.f32.mrb[0].mxu0
  %v411 = vpop.f32.mrb[0].mxu0
  %v412 = vpop.f32.mrb[0].mxu0
  %413 = vdwg.mxu0
  %414 = vmatprep.subr.bf16.mxu0 0
  %415 = vmatpush1.bf16.msra.mxu0 %v290
  %416 = vmatprep.subr.bf16.mxu0 0
  %417 = vmatpush1.bf16.msra.mxu0 %v291
  %418 = vmatprep.subr.bf16.mxu0 0
  %419 = vmatpush1.bf16.msra.mxu0 %v292
  %420 = vmatprep.subr.bf16.mxu0 0
  %421 = vmatpush1.bf16.msra.mxu0 %v293
  %422 = vmatprep.subr.bf16.mxu0 0
  %423 = vmatpush1.bf16.msra.mxu0 0
  %424 = vmatprep.subr.bf16.mxu0 0
  %425 = vmatpush1.bf16.msra.mxu0 0
  %426 = vmatprep.subr.bf16.mxu0 0
  %427 = vmatpush1.bf16.msra.mxu0 0
  %428 = vmatprep.subr.bf16.mxu0 0
  %429 = vmatpush1.bf16.msra.mxu0 0
  %430 = vmatprep.subr.bf16.mxu0 0
  %431 = vmatpush1.bf16.msra.mxu0 0
  %432 = vmatprep.subr.bf16.mxu0 0
  %433 = vmatpush1.bf16.msra.mxu0 0
  %434 = vmatprep.subr.bf16.mxu0 0
  %435 = vmatpush1.bf16.msra.mxu0 0
  %436 = vmatprep.subr.bf16.mxu0 0
  %437 = vmatpush1.bf16.msra.mxu0 0
  %438 = vmatprep.subr.bf16.mxu0 0
  %439 = vmatpush1.bf16.msra.mxu0 0
  %440 = vmatprep.subr.bf16.mxu0 0
  %441 = vmatpush1.bf16.msra.mxu0 0
  %442 = vmatprep.subr.bf16.mxu0 0
  %443 = vmatpush1.bf16.msra.mxu0 0
  %444 = vmatprep.subr.bf16.mxu0 0
  %445 = vmatpush1.bf16.msra.mxu0 0
  %446 = vmatprep.mubr.bf16.mxu0 0
  %447 = vmatmul.mubr.bf16.gmra.mrb[0].mxu0 %v332
  %v448 = vpop.f32.mrb[0].mxu0
  %v449 = vadd.f32 %v409, %v448
  %v450 = vpop.f32.mrb[0].mxu0
  %v451 = vpop.f32.mrb[0].mxu0
  %v452 = vpop.f32.mrb[0].mxu0
  %453 = vdwg.mxu0
  %v454 = vmax.f32 %v449, 0.0
  %455 = vst [vmem:[%s3] sm:$0xff] %v454
  // Predicated region
  $region14: #{_lambda_.37} parent=0 // pred_check
    _
  $region15: #{_lambda_.37} parent=0 // pred_check_branch
    %457 = sbr.rel (0) target = $region17
  $region16: #{_lambda_.37} parent=0 // pred_region
    _
  $region17: #{_lambda_.37} parent=0 // pred_fallthru
    _
  // Predicated region
  $region18: #{_lambda_.37} parent=0 // pred_check
    _
  $region19: #{_lambda_.37} parent=0 // pred_check_branch
    %459 = sbr.rel (0) target = $region21
  $region20: #{_lambda_.37} parent=0 // pred_region
    _
  $region21: #{_lambda_.37} parent=0 // pred_fallthru
    _

</llo_original>
